<compile_context>
chip_gen: v7x
topology: tpu7x:2x2x1
jax: 0.10.0
libtpu: 0.0.40
codegen_flags: <defaults>
</compile_context>

<pallas_src>
import jax
import jax.numpy as jnp
import numpy as np
from jax.experimental import pallas as pl
from jax.experimental.pallas import tpu as pltpu

EPS = 1e-5
_CONV_DTYPE = jnp.bfloat16        # MXU operand / HBM-intermediate dtype


# ----------------------------------------------------------------------------
# VMEM budgeting helpers
# ----------------------------------------------------------------------------
_VMEM_CAP = None


def _vmem_cap_bytes():
    # 3/4 of physical VMEM: ~96 MiB on v5e/v6e (128 MiB), ~48 MiB on v7x (64 MiB).
    try:
        return int(pltpu.get_tpu_info().vmem_capacity_bytes * 3 // 4)
    except Exception:
        return 48 * 1024 * 1024


def _vmem_limit(step_bytes):
    global _VMEM_CAP
    if _VMEM_CAP is None:
        _VMEM_CAP = _vmem_cap_bytes()
    return int(min(_VMEM_CAP, max(32 * 1024 * 1024, 4 * int(step_bytes))))


def _pick_row_tile(rows, max_tile=1024):
    """Largest tile <= max_tile that evenly divides `rows` (prefer x8).

    Big tiles keep the elementwise epilogue near the HBM roofline (review:
    ~512+ rows hits ~85% of roofline, tiny tiles ~30%)."""
    if rows <= max_tile:
        return rows
    for t in range(max_tile - max_tile % 8, 7, -8):
        if rows % t == 0:
            return t
    for t in range(max_tile, 0, -1):
        if rows % t == 0:
            return t
    return rows


def _plan_row_bands(h, w, cin, cout, col_budget_bytes=4 * 1024 * 1024):
    """Split output rows into bands so the per-band im2col working set (col +
    materialized tap slices ~ 2x col + f32 accumulator) stays within a small
    VMEM budget (v7x's 64 MiB physical VMEM)."""
    bpe = jnp.dtype(_CONV_DTYPE).itemsize
    per_row = w * (2 * 9 * cin * bpe + 4 * cout)
    band_h = max(1, min(h, col_budget_bytes // max(1, per_row)))
    return [(r0, min(band_h, h - r0)) for r0 in range(0, h, band_h)]


# ----------------------------------------------------------------------------
# Conv (+ fused pre-activation + fused padding + BN partial stats) kernel
# ----------------------------------------------------------------------------
def _make_conv_kernel(bands, use_concat, with_preact, compute_dtype):
    def body(x_ref, w_ref, conv_ref, stats_ref, scale_ref=None, shift_ref=None):
        h, w, cin = x_ref.shape
        cout = conv_ref.shape[-1]

        # Fused bn1+relu pre-activation (conv2 only): h1 never touches HBM.
        xin = x_ref[...].astype(jnp.float32)
        if with_preact:
            xin = jnp.maximum(xin * scale_ref[...] + shift_ref[...], 0.0)
        xin = xin.astype(compute_dtype)

        # Fused zero padding (no HBM-materialized jnp.pad): build the padded
        # (h+2, w+2, cin) image as an in-VMEM value.
        zcol = jnp.zeros((h, 1, cin), compute_dtype)
        zrow = jnp.zeros((1, w + 2, cin), compute_dtype)
        xp = jnp.concatenate([zcol, xin, zcol], axis=1)
        xp = jnp.concatenate([zrow, xp, zrow], axis=0)

        mu_run = None
        m2_run = None
        n_run = 0
        for r0, bh in bands:               # static row bands (caps VMEM on v7x)
            rows = bh * w
            if use_concat:
                # Big-K path (Cin < 128): 9 shifted taps concatenated on the
                # lane axis -> ONE MXU matmul with K = 9*Cin.
                # TODO(synk): for Cin=64 stages, zero-pad each tap (and the
                # slab rows) to 128 lanes so the concat is a layout no-op.
                taps = []
                for ky in range(3):
                    band = xp[r0 + ky:r0 + ky + bh, :, :]
                    for kx in range(3):
                        taps.append(band[:, kx:kx + w, :])
                col = jnp.concatenate(taps, axis=-1).reshape(rows, 9 * cin)
                acc = jnp.dot(col, w_ref[...], preferred_element_type=jnp.float32)
            else:
                # Aligned path (Cin % 128 == 0): 9 accumulating matmuls
                # (K = Cin each) -> no lane concat, no im2col intermediate.
                acc = jnp.zeros((rows, cout), jnp.float32)
                t = 0
                for ky in range(3):
                    band = xp[r0 + ky:r0 + ky + bh, :, :]
                    for kx in range(3):
                        tap = band[:, kx:kx + w, :].reshape(rows, cin)
                        acc = acc + jnp.dot(tap, w_ref[t * cin:(t + 1) * cin, :],
                                            preferred_element_type=jnp.float32)
                        t += 1
            conv_ref[r0 * w:r0 * w + rows, :] = acc.astype(conv_ref.dtype)

            # BN partials on the MXU (ones @ acc): centered per band and
            # Chan-combined across bands (avoids E[x^2]-E[x]^2 cancellation).
            ones_row = jnp.ones((1, rows), jnp.float32)
            mu_b = jnp.dot(ones_row, acc,
                           preferred_element_type=jnp.float32) / float(rows)
            d = acc - mu_b
            m2_b = jnp.dot(ones_row, d * d, preferred_element_type=jnp.float32)
            if mu_run is None:
                n_run, mu_run, m2_run = rows, mu_b, m2_b
            else:
                n_new = n_run + rows
                delta = mu_b - mu_run
                mu_run = mu_run + delta * (float(rows) / float(n_new))
                m2_run = (m2_run + m2_b
                          + delta * delta * (float(n_run) * float(rows) / float(n_new)))
                n_run = n_new

        stats_ref[...] = jnp.concatenate([mu_run, m2_run], axis=0)   # (2, Cout)

    if with_preact:
        def kernel(x_ref, w_ref, scale_ref, shift_ref, conv_ref, stats_ref):
            body(x_ref, w_ref, conv_ref, stats_ref, scale_ref, shift_ref)
    else:
        def kernel(x_ref, w_ref, conv_ref, stats_ref):
            body(x_ref, w_ref, conv_ref, stats_ref)
    return kernel


def _weight_slab(w_oihw, dtype):
    """OIHW -> (9*Cin, Cout) tap-major / Cin-minor weight slab in MXU dtype."""
    cout, cin, kh, kw = w_oihw.shape
    return jnp.transpose(w_oihw, (2, 3, 1, 0)).reshape(kh * kw * cin, cout).astype(dtype)


def _conv3x3_bn_stats(x_nhwc, w_slab, preact=None):
    """3x3 conv (stride=1, pad=1 fused in-kernel) + per-image BN partials.

    x_nhwc : (N,H,W,Cin) activation (f32 input, or bf16 conv1-out for conv2).
    w_slab : (9*Cin, Cout) weight slab (compute dtype), kept resident in VMEM.
    preact : None or (scale, shift) each (1, Cin) f32; when given the kernel
             applies relu(x*scale + shift) to its input tile before the conv.
    Returns conv (N, H*W, Cout) compute-dtype and stats (N, 2, Cout) f32
    holding per-image [mean; centered sum of squares] of the f32 accumulator.
    """
    n, h, w, cin = x_nhwc.shape
    kc, cout = w_slab.shape
    cdt = w_slab.dtype
    cbpe = jnp.dtype(cdt).itemsize

    bands = _plan_row_bands(h, w, cin, cout)
    use_concat = (cin % 128) != 0
    kernel = _make_conv_kernel(bands, use_concat, preact is not None, cdt)

    in_specs = [
        pl.BlockSpec((None, h, w, cin), lambda i: (i, 0, 0, 0)),
        pl.BlockSpec((kc, cout), lambda i: (0, 0)),          # resident weights
    ]
    args = [x_nhwc, w_slab]
    if preact is not None:
        in_specs += [pl.BlockSpec((1, cin), lambda i: (0, 0)),
                     pl.BlockSpec((1, cin), lambda i: (0, 0))]
        args += [preact[0], preact[1]]

    in_bpe = jnp.dtype(x_nhwc.dtype).itemsize
    max_band = max(bh for _, bh in bands)
    step_bytes = (
        2 * h * w * cin * in_bpe                       # double-buffered input
        + kc * cout * cbpe                             # resident weight slab
        + 2 * (h * w * cout * cbpe + 2 * cout * 4)     # double-buffered outputs
        + (h + 2) * (w + 2) * cin * (4 + cbpe)         # padded image (f32 + cast)
        + max_band * w * (2 * 9 * cin * cbpe + 4 * cout)  # col + tap copies + f32 acc
    )

    # NOTE(v7x): grid is batch-only ("parallel"); with very small N the second
    # TensorCore may idle -- promote a row-band grid axis if that matters.
    return pl.pallas_call(
        kernel,
        out_shape=(jax.ShapeDtypeStruct((n, h * w, cout), cdt),
                   jax.ShapeDtypeStruct((n, 2, cout), jnp.float32)),
        grid=(n,),
        in_specs=in_specs,
        out_specs=(pl.BlockSpec((None, h * w, cout), lambda i: (i, 0, 0)),
                   pl.BlockSpec((None, 2, cout), lambda i: (i, 0, 0))),
        compiler_params=pltpu.CompilerParams(
            dimension_semantics=("parallel",),
            vmem_limit_bytes=_vmem_limit(step_bytes),
        ),
    )(*args)


# ----------------------------------------------------------------------------
# BN affine from partials (tiny, plain JAX between the two conv passes)
# ----------------------------------------------------------------------------
def _bn_scale_shift(stats, gamma, beta, count):
    """Chan-combine per-image [mean; M2] partials into BN (scale, shift)."""
    n_img = count // stats.shape[0]
    mu_i = stats[:, 0, :]                                   # (N, C)
    m2_i = stats[:, 1, :]                                   # (N, C)
    mean = jnp.mean(mu_i, axis=0)
    m2 = jnp.sum(m2_i, axis=0) + n_img * jnp.sum((mu_i - mean) ** 2, axis=0)
    var = jnp.maximum(m2 / count, 0.0)                      # biased (training BN)
    inv = jax.lax.rsqrt(var + EPS)
    scale = (gamma * inv).astype(jnp.float32)
    shift = (beta - mean * scale).astype(jnp.float32)
    return scale, shift                                     # each (C,)


# ----------------------------------------------------------------------------
# Lane-dense BN2 + residual + ReLU epilogue
# ----------------------------------------------------------------------------
def _bn2_add_relu_kernel(y_ref, scale_ref, shift_ref, res_ref, out_ref):
    """out = relu(y*scale + shift + residual) on one lane-dense tile (f32 math)."""
    y = y_ref[...].astype(jnp.float32) * scale_ref[...] + shift_ref[...]
    y = y + res_ref[...].astype(jnp.float32)
    out_ref[...] = jnp.maximum(y, 0.0).astype(out_ref.dtype)


def _bn_act(conv_flat, scale_c, shift_c, residual_nhwc, out_dtype):
    """relu(conv*scale + shift + residual), gridded over (batch, row tiles).

    For C < 128 the operands are flattened to a lane-dense (N, HW*C/128, 128)
    slab (pure reshape) and scale/shift are pre-tiled to a 128-lane repeating
    pattern so every store is an unmasked full-lane vst."""
    n, hw, c = conv_flat.shape

    if c % 128 != 0 and 128 % c == 0 and (hw * c) % 128 == 0:
        lanes = 128
        rows = hw * c // 128
        reps = 128 // c
        y = conv_flat.reshape(n, rows, lanes)
        res = residual_nhwc.reshape(n, rows, lanes)
        scale_l = jnp.tile(scale_c, reps).reshape(1, lanes)
        shift_l = jnp.tile(shift_c, reps).reshape(1, lanes)
    else:
        lanes, rows = c, hw
        y = conv_flat
        res = residual_nhwc.reshape(n, rows, lanes)
        scale_l = scale_c.reshape(1, lanes)
        shift_l = shift_c.reshape(1, lanes)

    tr = _pick_row_tile(rows)
    grid = (n, rows // tr)
    row_spec = pl.BlockSpec((None, tr, lanes), lambda i, r: (i, r, 0))
    vec_spec = pl.BlockSpec((1, lanes), lambda i, r: (0, 0))

    step_bytes = (2 * tr * lanes * (jnp.dtype(conv_flat.dtype).itemsize
                                    + jnp.dtype(residual_nhwc.dtype).itemsize
                                    + jnp.dtype(out_dtype).itemsize)
                  + 4 * lanes * 4)

    return pl.pallas_call(
        _bn2_add_relu_kernel,
        out_shape=jax.ShapeDtypeStruct((n, rows, lanes), out_dtype),
        grid=grid,
        in_specs=[row_spec, vec_spec, vec_spec, row_spec],
        out_specs=row_spec,
        compiler_params=pltpu.CompilerParams(
            dimension_semantics=("parallel", "parallel"),
            vmem_limit_bytes=_vmem_limit(step_bytes),
        ),
    )(y, scale_l, shift_l, res)


# ----------------------------------------------------------------------------
# BasicBlock forward
# ----------------------------------------------------------------------------
def basic_block_forward(x, params, *, data_format="NCHW"):
    """ResNet BasicBlock forward (stride=1, identity shortcut), training-mode BN.

    x is NCHW (PyTorch convention) by default; pass data_format="NHWC" to skip
    the two layout transposes when the surrounding graph is channels-last."""
    # TODO(synk): optional `downsample` submodule / stride != 1 not provided by
    # the reference instance -> identity shortcut only (assumes Cin == Cout).
    xh = jnp.transpose(x, (0, 2, 3, 1)) if data_format == "NCHW" else x
    n, h, w, cin = xh.shape
    count = n * h * w

    w1 = _weight_slab(params["w1"], _CONV_DTYPE)
    w2 = _weight_slab(params["w2"], _CONV_DTYPE)
    cout = w1.shape[-1]

    # Pass A: conv1 + BN1 partial stats (x cast to bf16 inside the kernel).
    conv1, st1 = _conv3x3_bn_stats(xh, w1, preact=None)
    sc1, sh1 = _bn_scale_shift(st1, params["g1"], params["b1"], count)

    # Pass B: conv2 over relu(bn1(conv1)) with bn1+relu fused into the conv
    # kernel's input path (h1 never written to / re-read from HBM).
    conv2, st2 = _conv3x3_bn_stats(
        conv1.reshape(n, h, w, cout), w2,
        preact=(sc1.reshape(1, cout), sh1.reshape(1, cout)))
    sc2, sh2 = _bn_scale_shift(st2, params["g2"], params["b2"], count)

    # Epilogue: relu(bn2(conv2) + identity), lane-dense tiles.
    out = _bn_act(conv2, sc2, sh2, xh, out_dtype=x.dtype)
    out = out.reshape(n, h, w, cout)
    return jnp.transpose(out, (0, 3, 1, 2)) if data_format == "NCHW" else out


# ----------------------------------------------------------------------------
# Pure-JAX reference (correctness checking)
# ----------------------------------------------------------------------------
def _reference_block(x, p, conv_dtype=jnp.float32):
    """conv_dtype=f32 reproduces the PyTorch f32 module; conv_dtype=bf16 mirrors
    the kernel's numeric policy (bf16 MXU operands + bf16 HBM intermediates,
    f32 accumulation / stats / epilogue)."""
    def conv(v, w):
        return jax.lax.conv_general_dilated(
            v.astype(conv_dtype), w.astype(conv_dtype), (1, 1), ((1, 1), (1, 1)),
            dimension_numbers=("NCHW", "OIHW", "NCHW"),
            preferred_element_type=jnp.float32)

    def bn_affine(y, g, b):
        m = jnp.mean(y, axis=(0, 2, 3))
        v = jnp.mean((y - m.reshape(1, -1, 1, 1)) ** 2, axis=(0, 2, 3))
        inv = jax.lax.rsqrt(v + EPS)
        s = (g * inv).reshape(1, -1, 1, 1)
        t = (b - m * g * inv).reshape(1, -1, 1, 1)
        return s, t

    y1 = conv(x, p["w1"])
    s1, t1 = bn_affine(y1, p["g1"], p["b1"])
    y1q = y1.astype(conv_dtype).astype(jnp.float32)     # HBM-intermediate rounding
    h1 = jax.nn.relu(y1q * s1 + t1)

    y2 = conv(h1, p["w2"])
    s2, t2 = bn_affine(y2, p["g2"], p["b2"])
    y2q = y2.astype(conv_dtype).astype(jnp.float32)
    return jax.nn.relu(y2q * s2 + t2 + x)


if __name__ == "__main__":
    # Small shapes consistent with BasicBlock(in_planes=4, out_planes=4, stride=1).
    N, C, H, W = 2, 4, 16, 16
    key = jax.random.PRNGKey(0)
    kx, kw1, kw2 = jax.random.split(key, 3)

    x = jax.random.normal(kx, (N, C, H, W), jnp.float32)
    params = {
        "w1": 0.1 * jax.random.normal(kw1, (C, C, 3, 3), jnp.float32),   # OIHW
        "g1": jnp.ones((C,), jnp.float32),
        "b1": jnp.zeros((C,), jnp.float32),
        "w2": 0.1 * jax.random.normal(kw2, (C, C, 3, 3), jnp.float32),   # OIHW
        "g2": jnp.ones((C,), jnp.float32),
        "b2": jnp.zeros((C,), jnp.float32),
    }

    fwd = jax.jit(basic_block_forward)
    out = jax.block_until_ready(fwd(x, params))
    assert out.shape == (N, C, H, W), out.shape

    # (a) numerics-matched reference (same bf16 operand / intermediate policy).
    ref_bf16 = jax.block_until_ready(_reference_block(x, params, jnp.bfloat16))
    np.testing.assert_allclose(np.asarray(out), np.asarray(ref_bf16),
                               atol=3e-2, rtol=3e-2)
    # (b) f32 PyTorch-semantics reference; tolerance reflects bf16 MXU operands.
    ref_f32 = jax.block_until_ready(_reference_block(x, params, jnp.float32))
    np.testing.assert_allclose(np.asarray(out), np.asarray(ref_f32),
                               atol=1e-1, rtol=1e-1)
    print("KERNEL_OK")
</pallas_src>

<mosaic_0001>
module attributes {stable_mosaic.version = 11 : i64} {
  func.func @kernel(%arg0: i32, %arg1: memref<1x16x16x4xf32, #tpu.memory_space<vmem>>, %arg2: memref<36x4xbf16, #tpu.memory_space<vmem>>, %arg3: memref<1x256x4xbf16, #tpu.memory_space<vmem>>, %arg4: memref<1x2x4xf32, #tpu.memory_space<vmem>>) attributes {dimension_semantics = [#tpu.dimension_semantics<parallel>], iteration_bounds = array<i64: 2>, scalar_prefetch = 0 : i64, scratch_operands = 0 : i64, tpu.core_type = #tpu.core_type<tc>, window_params = [{transform_indices = @transform_0, window_bounds = array<i64: 1, 16, 16, 4>}, {pipeline_mode = #tpu.pipeline_mode<synchronous>, transform_indices = @transform_1, window_bounds = array<i64: 36, 4>}, {transform_indices = @transform_2, window_bounds = array<i64: 1, 256, 4>}, {transform_indices = @transform_3, window_bounds = array<i64: 1, 2, 4>}]} {
    %c0 = arith.constant 0 : index
    %c0_0 = arith.constant 0 : index
    %c0_1 = arith.constant 0 : index
    %c0_2 = arith.constant 0 : index
    %0 = vector.load %arg1[%c0, %c0_0, %c0_1, %c0_2] : memref<1x16x16x4xf32, #tpu.memory_space<vmem>>, vector<1x16x16x4xf32>
    %1 = vector.shape_cast %0 : vector<1x16x16x4xf32> to vector<16x16x4xf32>
    %2 = arith.truncf %1 : vector<16x16x4xf32> to vector<16x16x4xbf16>
    %cst = arith.constant 0.000000e+00 : bf16
    %3 = vector.broadcast %cst : bf16 to vector<16x1x4xbf16>
    %cst_3 = arith.constant 0.000000e+00 : bf16
    %4 = vector.broadcast %cst_3 : bf16 to vector<1x18x4xbf16>
    %5 = tpu.concatenate %3, %2, %3 in 1 : vector<16x1x4xbf16>, vector<16x16x4xbf16>, vector<16x1x4xbf16> -> vector<16x18x4xbf16>
    %6 = tpu.concatenate %4, %5, %4 in 0 : vector<1x18x4xbf16>, vector<16x18x4xbf16>, vector<1x18x4xbf16> -> vector<18x18x4xbf16>
    %7 = vector.extract_strided_slice %6 {offsets = [0, 0, 0], sizes = [16, 18, 4], strides = [1, 1, 1]} : vector<18x18x4xbf16> to vector<16x18x4xbf16>
    %8 = vector.extract_strided_slice %7 {offsets = [0, 0, 0], sizes = [16, 16, 4], strides = [1, 1, 1]} : vector<16x18x4xbf16> to vector<16x16x4xbf16>
    %9 = vector.extract_strided_slice %7 {offsets = [0, 1, 0], sizes = [16, 16, 4], strides = [1, 1, 1]} : vector<16x18x4xbf16> to vector<16x16x4xbf16>
    %10 = vector.extract_strided_slice %7 {offsets = [0, 2, 0], sizes = [16, 16, 4], strides = [1, 1, 1]} : vector<16x18x4xbf16> to vector<16x16x4xbf16>
    %11 = vector.extract_strided_slice %6 {offsets = [1, 0, 0], sizes = [16, 18, 4], strides = [1, 1, 1]} : vector<18x18x4xbf16> to vector<16x18x4xbf16>
    %12 = vector.extract_strided_slice %11 {offsets = [0, 0, 0], sizes = [16, 16, 4], strides = [1, 1, 1]} : vector<16x18x4xbf16> to vector<16x16x4xbf16>
    %13 = vector.extract_strided_slice %11 {offsets = [0, 1, 0], sizes = [16, 16, 4], strides = [1, 1, 1]} : vector<16x18x4xbf16> to vector<16x16x4xbf16>
    %14 = vector.extract_strided_slice %11 {offsets = [0, 2, 0], sizes = [16, 16, 4], strides = [1, 1, 1]} : vector<16x18x4xbf16> to vector<16x16x4xbf16>
    %15 = vector.extract_strided_slice %6 {offsets = [2, 0, 0], sizes = [16, 18, 4], strides = [1, 1, 1]} : vector<18x18x4xbf16> to vector<16x18x4xbf16>
    %16 = vector.extract_strided_slice %15 {offsets = [0, 0, 0], sizes = [16, 16, 4], strides = [1, 1, 1]} : vector<16x18x4xbf16> to vector<16x16x4xbf16>
    %17 = vector.extract_strided_slice %15 {offsets = [0, 1, 0], sizes = [16, 16, 4], strides = [1, 1, 1]} : vector<16x18x4xbf16> to vector<16x16x4xbf16>
    %18 = vector.extract_strided_slice %15 {offsets = [0, 2, 0], sizes = [16, 16, 4], strides = [1, 1, 1]} : vector<16x18x4xbf16> to vector<16x16x4xbf16>
    %19 = tpu.concatenate %8, %9, %10, %12, %13, %14, %16, %17, %18 in 2 : vector<16x16x4xbf16>, vector<16x16x4xbf16>, vector<16x16x4xbf16>, vector<16x16x4xbf16>, vector<16x16x4xbf16>, vector<16x16x4xbf16>, vector<16x16x4xbf16>, vector<16x16x4xbf16>, vector<16x16x4xbf16> -> vector<16x16x36xbf16>
    %20 = vector.shape_cast %19 : vector<16x16x36xbf16> to vector<256x36xbf16>
    %c0_4 = arith.constant 0 : index
    %c0_5 = arith.constant 0 : index
    %21 = vector.load %arg2[%c0_4, %c0_5] : memref<36x4xbf16, #tpu.memory_space<vmem>>, vector<36x4xbf16>
    %cst_6 = arith.constant dense<0.000000e+00> : vector<256x4xf32>
    %22 = tpu.matmul %20, %21, %cst_6 {dimension_numbers = #tpu.dot_dimension_numbers<[1], [0], [0], [1], [0, 0, 1, 1], [], []>} : vector<256x36xbf16>, vector<36x4xbf16>, vector<256x4xf32> -> vector<256x4xf32>
    %23 = arith.truncf %22 : vector<256x4xf32> to vector<256x4xbf16>
    %c0_7 = arith.constant 0 : index
    %c0_8 = arith.constant 0 : index
    %c0_9 = arith.constant 0 : index
    %24 = vector.load %arg3[%c0_7, %c0_8, %c0_9] : memref<1x256x4xbf16, #tpu.memory_space<vmem>>, vector<1x256x4xbf16>
    %25 = vector.shape_cast %24 : vector<1x256x4xbf16> to vector<256x4xbf16>
    %26 = vector.shape_cast %23 : vector<256x4xbf16> to vector<1x256x4xbf16>
    tpu.vector_store %arg3[%c0_7, %c0_8, %c0_9], %26 {strides = array<i32>} : memref<1x256x4xbf16, #tpu.memory_space<vmem>>, vector<1x256x4xbf16>,
    %cst_10 = arith.constant 1.000000e+00 : f32
    %27 = vector.broadcast %cst_10 : f32 to vector<1x256xf32>
    %cst_11 = arith.constant dense<0.000000e+00> : vector<1x4xf32>
    %28 = tpu.matmul %27, %22, %cst_11 {dimension_numbers = #tpu.dot_dimension_numbers<[1], [0], [0], [1], [0, 0, 1, 1], [], []>} : vector<1x256xf32>, vector<256x4xf32>, vector<1x4xf32> -> vector<1x4xf32>
    %cst_12 = arith.constant 2.560000e+02 : f32
    %29 = vector.broadcast %cst_12 : f32 to vector<1x4xf32>
    %30 = arith.divf %28, %29 : vector<1x4xf32>
    %31 = vector.broadcast %30 : vector<1x4xf32> to vector<256x4xf32>
    %32 = arith.subf %22, %31 : vector<256x4xf32>
    %33 = arith.mulf %32, %32 : vector<256x4xf32>
    %cst_13 = arith.constant dense<0.000000e+00> : vector<1x4xf32>
    %34 = tpu.matmul %27, %33, %cst_13 {dimension_numbers = #tpu.dot_dimension_numbers<[1], [0], [0], [1], [0, 0, 1, 1], [], []>} : vector<1x256xf32>, vector<256x4xf32>, vector<1x4xf32> -> vector<1x4xf32>
    %35 = tpu.concatenate %30, %34 in 0 : vector<1x4xf32>, vector<1x4xf32> -> vector<2x4xf32>
    %c0_14 = arith.constant 0 : index
    %c0_15 = arith.constant 0 : index
    %c0_16 = arith.constant 0 : index
    %36 = vector.load %arg4[%c0_14, %c0_15, %c0_16] : memref<1x2x4xf32, #tpu.memory_space<vmem>>, vector<1x2x4xf32>
    %37 = vector.shape_cast %36 : vector<1x2x4xf32> to vector<2x4xf32>
    %38 = vector.shape_cast %35 : vector<2x4xf32> to vector<1x2x4xf32>
    tpu.vector_store %arg4[%c0_14, %c0_15, %c0_16], %38 {strides = array<i32>} : memref<1x2x4xf32, #tpu.memory_space<vmem>>, vector<1x2x4xf32>,
    return
  }
  func.func @transform_0(%arg0: i32) -> (i32, i32, i32, i32) {
    %c0_i32 = arith.constant 0 : i32
    %c0_i32_0 = arith.constant 0 : i32
    %c0_i32_1 = arith.constant 0 : i32
    %c0_i32_2 = arith.constant 0 : i32
    return %arg0, %c0_i32, %c0_i32_0, %c0_i32_1 : i32, i32, i32, i32
  }
  func.func @transform_1(%arg0: i32) -> (i32, i32) {
    %c0_i32 = arith.constant 0 : i32
    %c0_i32_0 = arith.constant 0 : i32
    %c0_i32_1 = arith.constant 0 : i32
    return %c0_i32, %c0_i32_0 : i32, i32
  }
  func.func @transform_2(%arg0: i32) -> (i32, i32, i32) {
    %c0_i32 = arith.constant 0 : i32
    %c0_i32_0 = arith.constant 0 : i32
    %c0_i32_1 = arith.constant 0 : i32
    return %arg0, %c0_i32, %c0_i32_0 : i32, i32, i32
  }
  func.func @transform_3(%arg0: i32) -> (i32, i32, i32) {
    %c0_i32 = arith.constant 0 : i32
    %c0_i32_0 = arith.constant 0 : i32
    %c0_i32_1 = arith.constant 0 : i32
    return %arg0, %c0_i32, %c0_i32_0 : i32, i32, i32
  }
}

module attributes {stable_mosaic.version = 11 : i64} {
  func.func @kernel(%arg0: i32, %arg1: memref<1x16x16x4xbf16, #tpu.memory_space<vmem>>, %arg2: memref<36x4xbf16, #tpu.memory_space<vmem>>, %arg3: memref<1x4xf32, #tpu.memory_space<vmem>>, %arg4: memref<1x4xf32, #tpu.memory_space<vmem>>, %arg5: memref<1x256x4xbf16, #tpu.memory_space<vmem>>, %arg6: memref<1x2x4xf32, #tpu.memory_space<vmem>>) attributes {dimension_semantics = [#tpu.dimension_semantics<parallel>], iteration_bounds = array<i64: 2>, scalar_prefetch = 0 : i64, scratch_operands = 0 : i64, tpu.core_type = #tpu.core_type<tc>, window_params = [{transform_indices = @transform_0, window_bounds = array<i64: 1, 16, 16, 4>}, {pipeline_mode = #tpu.pipeline_mode<synchronous>, transform_indices = @transform_1, window_bounds = array<i64: 36, 4>}, {pipeline_mode = #tpu.pipeline_mode<synchronous>, transform_indices = @transform_2, window_bounds = array<i64: 1, 4>}, {pipeline_mode = #tpu.pipeline_mode<synchronous>, transform_indices = @transform_3, window_bounds = array<i64: 1, 4>}, {transform_indices = @transform_4, window_bounds = array<i64: 1, 256, 4>}, {transform_indices = @transform_5, window_bounds = array<i64: 1, 2, 4>}]} {
    %c0 = arith.constant 0 : index
    %c0_0 = arith.constant 0 : index
    %c0_1 = arith.constant 0 : index
    %c0_2 = arith.constant 0 : index
    %0 = vector.load %arg1[%c0, %c0_0, %c0_1, %c0_2] : memref<1x16x16x4xbf16, #tpu.memory_space<vmem>>, vector<1x16x16x4xbf16>
    %1 = vector.shape_cast %0 : vector<1x16x16x4xbf16> to vector<16x16x4xbf16>
    %2 = arith.extf %1 : vector<16x16x4xbf16> to vector<16x16x4xf32>
    %c0_3 = arith.constant 0 : index
    %c0_4 = arith.constant 0 : index
    %3 = vector.load %arg3[%c0_3, %c0_4] : memref<1x4xf32, #tpu.memory_space<vmem>>, vector<1x4xf32>
    %4 = vector.shape_cast %3 : vector<1x4xf32> to vector<1x1x4xf32>
    %5 = vector.broadcast %4 : vector<1x1x4xf32> to vector<16x16x4xf32>
    %6 = arith.mulf %2, %5 : vector<16x16x4xf32>
    %c0_5 = arith.constant 0 : index
    %c0_6 = arith.constant 0 : index
    %7 = vector.load %arg4[%c0_5, %c0_6] : memref<1x4xf32, #tpu.memory_space<vmem>>, vector<1x4xf32>
    %8 = vector.shape_cast %7 : vector<1x4xf32> to vector<1x1x4xf32>
    %9 = vector.broadcast %8 : vector<1x1x4xf32> to vector<16x16x4xf32>
    %10 = arith.addf %6, %9 : vector<16x16x4xf32>
    %cst = arith.constant 0.000000e+00 : f32
    %11 = vector.broadcast %cst : f32 to vector<16x16x4xf32>
    %12 = arith.maximumf %10, %11 : vector<16x16x4xf32>
    %13 = arith.truncf %12 : vector<16x16x4xf32> to vector<16x16x4xbf16>
    %cst_7 = arith.constant 0.000000e+00 : bf16
    %14 = vector.broadcast %cst_7 : bf16 to vector<16x1x4xbf16>
    %cst_8 = arith.constant 0.000000e+00 : bf16
    %15 = vector.broadcast %cst_8 : bf16 to vector<1x18x4xbf16>
    %16 = tpu.concatenate %14, %13, %14 in 1 : vector<16x1x4xbf16>, vector<16x16x4xbf16>, vector<16x1x4xbf16> -> vector<16x18x4xbf16>
    %17 = tpu.concatenate %15, %16, %15 in 0 : vector<1x18x4xbf16>, vector<16x18x4xbf16>, vector<1x18x4xbf16> -> vector<18x18x4xbf16>
    %18 = vector.extract_strided_slice %17 {offsets = [0, 0, 0], sizes = [16, 18, 4], strides = [1, 1, 1]} : vector<18x18x4xbf16> to vector<16x18x4xbf16>
    %19 = vector.extract_strided_slice %18 {offsets = [0, 0, 0], sizes = [16, 16, 4], strides = [1, 1, 1]} : vector<16x18x4xbf16> to vector<16x16x4xbf16>
    %20 = vector.extract_strided_slice %18 {offsets = [0, 1, 0], sizes = [16, 16, 4], strides = [1, 1, 1]} : vector<16x18x4xbf16> to vector<16x16x4xbf16>
    %21 = vector.extract_strided_slice %18 {offsets = [0, 2, 0], sizes = [16, 16, 4], strides = [1, 1, 1]} : vector<16x18x4xbf16> to vector<16x16x4xbf16>
    %22 = vector.extract_strided_slice %17 {offsets = [1, 0, 0], sizes = [16, 18, 4], strides = [1, 1, 1]} : vector<18x18x4xbf16> to vector<16x18x4xbf16>
    %23 = vector.extract_strided_slice %22 {offsets = [0, 0, 0], sizes = [16, 16, 4], strides = [1, 1, 1]} : vector<16x18x4xbf16> to vector<16x16x4xbf16>
    %24 = vector.extract_strided_slice %22 {offsets = [0, 1, 0], sizes = [16, 16, 4], strides = [1, 1, 1]} : vector<16x18x4xbf16> to vector<16x16x4xbf16>
    %25 = vector.extract_strided_slice %22 {offsets = [0, 2, 0], sizes = [16, 16, 4], strides = [1, 1, 1]} : vector<16x18x4xbf16> to vector<16x16x4xbf16>
    %26 = vector.extract_strided_slice %17 {offsets = [2, 0, 0], sizes = [16, 18, 4], strides = [1, 1, 1]} : vector<18x18x4xbf16> to vector<16x18x4xbf16>
    %27 = vector.extract_strided_slice %26 {offsets = [0, 0, 0], sizes = [16, 16, 4], strides = [1, 1, 1]} : vector<16x18x4xbf16> to vector<16x16x4xbf16>
    %28 = vector.extract_strided_slice %26 {offsets = [0, 1, 0], sizes = [16, 16, 4], strides = [1, 1, 1]} : vector<16x18x4xbf16> to vector<16x16x4xbf16>
    %29 = vector.extract_strided_slice %26 {offsets = [0, 2, 0], sizes = [16, 16, 4], strides = [1, 1, 1]} : vector<16x18x4xbf16> to vector<16x16x4xbf16>
    %30 = tpu.concatenate %19, %20, %21, %23, %24, %25, %27, %28, %29 in 2 : vector<16x16x4xbf16>, vector<16x16x4xbf16>, vector<16x16x4xbf16>, vector<16x16x4xbf16>, vector<16x16x4xbf16>, vector<16x16x4xbf16>, vector<16x16x4xbf16>, vector<16x16x4xbf16>, vector<16x16x4xbf16> -> vector<16x16x36xbf16>
    %31 = vector.shape_cast %30 : vector<16x16x36xbf16> to vector<256x36xbf16>
    %c0_9 = arith.constant 0 : index
    %c0_10 = arith.constant 0 : index
    %32 = vector.load %arg2[%c0_9, %c0_10] : memref<36x4xbf16, #tpu.memory_space<vmem>>, vector<36x4xbf16>
    %cst_11 = arith.constant dense<0.000000e+00> : vector<256x4xf32>
    %33 = tpu.matmul %31, %32, %cst_11 {dimension_numbers = #tpu.dot_dimension_numbers<[1], [0], [0], [1], [0, 0, 1, 1], [], []>} : vector<256x36xbf16>, vector<36x4xbf16>, vector<256x4xf32> -> vector<256x4xf32>
    %34 = arith.truncf %33 : vector<256x4xf32> to vector<256x4xbf16>
    %c0_12 = arith.constant 0 : index
    %c0_13 = arith.constant 0 : index
    %c0_14 = arith.constant 0 : index
    %35 = vector.load %arg5[%c0_12, %c0_13, %c0_14] : memref<1x256x4xbf16, #tpu.memory_space<vmem>>, vector<1x256x4xbf16>
    %36 = vector.shape_cast %35 : vector<1x256x4xbf16> to vector<256x4xbf16>
    %37 = vector.shape_cast %34 : vector<256x4xbf16> to vector<1x256x4xbf16>
    tpu.vector_store %arg5[%c0_12, %c0_13, %c0_14], %37 {strides = array<i32>} : memref<1x256x4xbf16, #tpu.memory_space<vmem>>, vector<1x256x4xbf16>,
    %cst_15 = arith.constant 1.000000e+00 : f32
    %38 = vector.broadcast %cst_15 : f32 to vector<1x256xf32>
    %cst_16 = arith.constant dense<0.000000e+00> : vector<1x4xf32>
    %39 = tpu.matmul %38, %33, %cst_16 {dimension_numbers = #tpu.dot_dimension_numbers<[1], [0], [0], [1], [0, 0, 1, 1], [], []>} : vector<1x256xf32>, vector<256x4xf32>, vector<1x4xf32> -> vector<1x4xf32>
    %cst_17 = arith.constant 2.560000e+02 : f32
    %40 = vector.broadcast %cst_17 : f32 to vector<1x4xf32>
    %41 = arith.divf %39, %40 : vector<1x4xf32>
    %42 = vector.broadcast %41 : vector<1x4xf32> to vector<256x4xf32>
    %43 = arith.subf %33, %42 : vector<256x4xf32>
    %44 = arith.mulf %43, %43 : vector<256x4xf32>
    %cst_18 = arith.constant dense<0.000000e+00> : vector<1x4xf32>
    %45 = tpu.matmul %38, %44, %cst_18 {dimension_numbers = #tpu.dot_dimension_numbers<[1], [0], [0], [1], [0, 0, 1, 1], [], []>} : vector<1x256xf32>, vector<256x4xf32>, vector<1x4xf32> -> vector<1x4xf32>
    %46 = tpu.concatenate %41, %45 in 0 : vector<1x4xf32>, vector<1x4xf32> -> vector<2x4xf32>
    %c0_19 = arith.constant 0 : index
    %c0_20 = arith.constant 0 : index
    %c0_21 = arith.constant 0 : index
    %47 = vector.load %arg6[%c0_19, %c0_20, %c0_21] : memref<1x2x4xf32, #tpu.memory_space<vmem>>, vector<1x2x4xf32>
    %48 = vector.shape_cast %47 : vector<1x2x4xf32> to vector<2x4xf32>
    %49 = vector.shape_cast %46 : vector<2x4xf32> to vector<1x2x4xf32>
    tpu.vector_store %arg6[%c0_19, %c0_20, %c0_21], %49 {strides = array<i32>} : memref<1x2x4xf32, #tpu.memory_space<vmem>>, vector<1x2x4xf32>,
    return
  }
  func.func @transform_0(%arg0: i32) -> (i32, i32, i32, i32) {
    %c0_i32 = arith.constant 0 : i32
    %c0_i32_0 = arith.constant 0 : i32
    %c0_i32_1 = arith.constant 0 : i32
    %c0_i32_2 = arith.constant 0 : i32
    return %arg0, %c0_i32, %c0_i32_0, %c0_i32_1 : i32, i32, i32, i32
  }
  func.func @transform_1(%arg0: i32) -> (i32, i32) {
    %c0_i32 = arith.constant 0 : i32
    %c0_i32_0 = arith.constant 0 : i32
    %c0_i32_1 = arith.constant 0 : i32
    return %c0_i32, %c0_i32_0 : i32, i32
  }
  func.func @transform_2(%arg0: i32) -> (i32, i32) {
    %c0_i32 = arith.constant 0 : i32
    %c0_i32_0 = arith.constant 0 : i32
    %c0_i32_1 = arith.constant 0 : i32
    return %c0_i32, %c0_i32_0 : i32, i32
  }
  func.func @transform_3(%arg0: i32) -> (i32, i32) {
    %c0_i32 = arith.constant 0 : i32
    %c0_i32_0 = arith.constant 0 : i32
    %c0_i32_1 = arith.constant 0 : i32
    return %c0_i32, %c0_i32_0 : i32, i32
  }
  func.func @transform_4(%arg0: i32) -> (i32, i32, i32) {
    %c0_i32 = arith.constant 0 : i32
    %c0_i32_0 = arith.constant 0 : i32
    %c0_i32_1 = arith.constant 0 : i32
    return %arg0, %c0_i32, %c0_i32_0 : i32, i32, i32
  }
  func.func @transform_5(%arg0: i32) -> (i32, i32, i32) {
    %c0_i32 = arith.constant 0 : i32
    %c0_i32_0 = arith.constant 0 : i32
    %c0_i32_1 = arith.constant 0 : i32
    return %arg0, %c0_i32, %c0_i32_0 : i32, i32, i32
  }
}

module attributes {stable_mosaic.version = 11 : i64} {
  func.func @_bn2_add_relu_kernel(%arg0: i32, %arg1: i32, %arg2: memref<1x8x128xbf16, #tpu.memory_space<vmem>>, %arg3: memref<1x128xf32, #tpu.memory_space<vmem>>, %arg4: memref<1x128xf32, #tpu.memory_space<vmem>>, %arg5: memref<1x8x128xf32, #tpu.memory_space<vmem>>, %arg6: memref<1x8x128xf32, #tpu.memory_space<vmem>>) attributes {dimension_semantics = [#tpu.dimension_semantics<parallel>, #tpu.dimension_semantics<parallel>], iteration_bounds = array<i64: 2, 1>, scalar_prefetch = 0 : i64, scratch_operands = 0 : i64, tpu.core_type = #tpu.core_type<tc>, window_params = [{transform_indices = @transform_0, window_bounds = array<i64: 1, 8, 128>}, {pipeline_mode = #tpu.pipeline_mode<synchronous>, transform_indices = @transform_1, window_bounds = array<i64: 1, 128>}, {pipeline_mode = #tpu.pipeline_mode<synchronous>, transform_indices = @transform_2, window_bounds = array<i64: 1, 128>}, {transform_indices = @transform_3, window_bounds = array<i64: 1, 8, 128>}, {transform_indices = @transform_4, window_bounds = array<i64: 1, 8, 128>}]} {
    %c0 = arith.constant 0 : index
    %c0_0 = arith.constant 0 : index
    %c0_1 = arith.constant 0 : index
    %0 = vector.load %arg2[%c0, %c0_0, %c0_1] : memref<1x8x128xbf16, #tpu.memory_space<vmem>>, vector<1x8x128xbf16>
    %1 = vector.shape_cast %0 : vector<1x8x128xbf16> to vector<8x128xbf16>
    %2 = arith.extf %1 : vector<8x128xbf16> to vector<8x128xf32>
    %c0_2 = arith.constant 0 : index
    %c0_3 = arith.constant 0 : index
    %3 = vector.load %arg3[%c0_2, %c0_3] : memref<1x128xf32, #tpu.memory_space<vmem>>, vector<1x128xf32>
    %4 = vector.broadcast %3 : vector<1x128xf32> to vector<8x128xf32>
    %5 = arith.mulf %2, %4 : vector<8x128xf32>
    %c0_4 = arith.constant 0 : index
    %c0_5 = arith.constant 0 : index
    %6 = vector.load %arg4[%c0_4, %c0_5] : memref<1x128xf32, #tpu.memory_space<vmem>>, vector<1x128xf32>
    %7 = vector.broadcast %6 : vector<1x128xf32> to vector<8x128xf32>
    %8 = arith.addf %5, %7 : vector<8x128xf32>
    %c0_6 = arith.constant 0 : index
    %c0_7 = arith.constant 0 : index
    %c0_8 = arith.constant 0 : index
    %9 = vector.load %arg5[%c0_6, %c0_7, %c0_8] : memref<1x8x128xf32, #tpu.memory_space<vmem>>, vector<1x8x128xf32>
    %10 = vector.shape_cast %9 : vector<1x8x128xf32> to vector<8x128xf32>
    %11 = arith.addf %8, %10 : vector<8x128xf32>
    %cst = arith.constant 0.000000e+00 : f32
    %12 = vector.broadcast %cst : f32 to vector<8x128xf32>
    %13 = arith.maximumf %11, %12 : vector<8x128xf32>
    %c0_9 = arith.constant 0 : index
    %c0_10 = arith.constant 0 : index
    %c0_11 = arith.constant 0 : index
    %14 = vector.load %arg6[%c0_9, %c0_10, %c0_11] : memref<1x8x128xf32, #tpu.memory_space<vmem>>, vector<1x8x128xf32>
    %15 = vector.shape_cast %14 : vector<1x8x128xf32> to vector<8x128xf32>
    %16 = vector.shape_cast %13 : vector<8x128xf32> to vector<1x8x128xf32>
    tpu.vector_store %arg6[%c0_9, %c0_10, %c0_11], %16 {strides = array<i32>} : memref<1x8x128xf32, #tpu.memory_space<vmem>>, vector<1x8x128xf32>,
    return
  }
  func.func @transform_0(%arg0: i32, %arg1: i32) -> (i32, i32, i32) {
    %c0_i32 = arith.constant 0 : i32
    %c0_i32_0 = arith.constant 0 : i32
    return %arg0, %arg1, %c0_i32 : i32, i32, i32
  }
  func.func @transform_1(%arg0: i32, %arg1: i32) -> (i32, i32) {
    %c0_i32 = arith.constant 0 : i32
    %c0_i32_0 = arith.constant 0 : i32
    %c0_i32_1 = arith.constant 0 : i32
    return %c0_i32, %c0_i32_0 : i32, i32
  }
  func.func @transform_2(%arg0: i32, %arg1: i32) -> (i32, i32) {
    %c0_i32 = arith.constant 0 : i32
    %c0_i32_0 = arith.constant 0 : i32
    %c0_i32_1 = arith.constant 0 : i32
    return %c0_i32, %c0_i32_0 : i32, i32
  }
  func.func @transform_3(%arg0: i32, %arg1: i32) -> (i32, i32, i32) {
    %c0_i32 = arith.constant 0 : i32
    %c0_i32_0 = arith.constant 0 : i32
    return %arg0, %arg1, %c0_i32 : i32, i32, i32
  }
  func.func @transform_4(%arg0: i32, %arg1: i32) -> (i32, i32, i32) {
    %c0_i32 = arith.constant 0 : i32
    %c0_i32_0 = arith.constant 0 : i32
    return %arg0, %arg1, %c0_i32 : i32, i32, i32
  }
}

</mosaic_0001>

<llo_original>
// kernel: tile.18
$region0: #{tile.18}
  #allocation0 [shape = 's32[1]{0}', space=sflag, size = 0x4, scoped, tag = 'scoped memory for tile.18']
  %s0 = inlined_call_operand.vmem [shape: f32[4], index: 0, kind: input, shape index: {}]
  %s1 = inlined_call_operand.vmem [shape: f32[32,4], index: 1, kind: output, shape index: {}]
  // Predicated region
  $region2: #{tile.18} parent=0 // pred_check
    _
  $region3: #{tile.18} parent=0 // pred_check_branch
    %3 = sbr.rel (0) target = $region5
  $region4: #{tile.18} parent=0 // pred_region
    _
  $region5: #{tile.18} parent=0 // pred_fallthru
    _
  %v4 = vld [vmem:[%s0] ss:$0 sm:$0xff]
  %5 = vst [vmem:[%s1] sm:$0xff] %v4
  %s6 = scalar_lea.vmem %s1, 8
  %7 = vst [vmem:[%s6] sm:$0xff] %v4
  %s8 = scalar_lea.vmem %s1, 16
  %9 = vst [vmem:[%s8] sm:$0xff] %v4
  %s10 = scalar_lea.vmem %s1, 24
  %11 = vst [vmem:[%s10] sm:$0xff] %v4

// kernel: tile.19
$region0: #{tile.19}
  %s0 = inlined_call_operand.vmem [shape: f32[32,4], index: 0, kind: input, shape index: {}]
  %s1 = inlined_call_operand.vmem [shape: f32[1,128], index: 1, kind: output, shape index: {}]
  $region1: #{tile.19} parent=0
    #allocation0 [shape = 'u8[4096]{0}', space=vmem, size = 0x1000, scoped, tag = 'scoped mem for output reshape']
    %v2 = vld [vmem:[%s0] sm:$0x1]
    %vm3 = vcmask 31744
    %4 = vst.msk [vmem:[#allocation0] sm:$0x1] %vm3, %v2
    %s5 = scalar_lea.vmem %s0, 31
    %v6 = vld [vmem:[%s5] sm:$0x1]
    %7 = vrot.lane.b32.xlu0 %v6, 124
    %v8 = vpop.permute.xlu0 %7
    %vm9 = vcmask 1048544
    %10 = vst.msk [vmem:[#allocation0] sm:$0x1] %vm9, %v8
    %s11 = scalar_lea.vmem %s0, 30
    %v12 = vld [vmem:[%s11] sm:$0x1]
    %13 = vrot.lane.b32.xlu0 %v12, 120
    %v14 = vpop.permute.xlu0 %13
    %vm15 = vcmask 1015744
    %16 = vst.msk [vmem:[#allocation0] sm:$0x1] %vm15, %v14
    %s17 = scalar_lea.vmem %s0, 29
    %v18 = vld [vmem:[%s17] sm:$0x1]
    %19 = vrot.lane.b32.xlu0 %v18, 116
    %v20 = vpop.permute.xlu0 %19
    %vm21 = vcmask 982944
    %22 = vst.msk [vmem:[#allocation0] sm:$0x1] %vm21, %v20
    %s23 = scalar_lea.vmem %s0, 28
    %v24 = vld [vmem:[%s23] sm:$0x1]
    %25 = vrot.lane.b32.xlu0 %v24, 112
    %v26 = vpop.permute.xlu0 %25
    %vm27 = vcmask 950144
    %28 = vst.msk [vmem:[#allocation0] sm:$0x1] %vm27, %v26
    %s29 = scalar_lea.vmem %s0, 27
    %v30 = vld [vmem:[%s29] sm:$0x1]
    %31 = vrot.lane.b32.xlu0 %v30, 108
    %v32 = vpop.permute.xlu0 %31
    %vm33 = vcmask 917344
    %34 = vst.msk [vmem:[#allocation0] sm:$0x1] %vm33, %v32
    %s35 = scalar_lea.vmem %s0, 26
    %v36 = vld [vmem:[%s35] sm:$0x1]
    %37 = vrot.lane.b32.xlu0 %v36, 104
    %v38 = vpop.permute.xlu0 %37
    %vm39 = vcmask 884544
    %40 = vst.msk [vmem:[#allocation0] sm:$0x1] %vm39, %v38
    %s41 = scalar_lea.vmem %s0, 25
    %v42 = vld [vmem:[%s41] sm:$0x1]
    %43 = vrot.lane.b32.xlu0 %v42, 100
    %v44 = vpop.permute.xlu0 %43
    %vm45 = vcmask 851744
    %46 = vst.msk [vmem:[#allocation0] sm:$0x1] %vm45, %v44
    %s47 = scalar_lea.vmem %s0, 24
    %v48 = vld [vmem:[%s47] sm:$0x1]
    %49 = vrot.lane.b32.xlu0 %v48, 96
    %v50 = vpop.permute.xlu0 %49
    %vm51 = vcmask 818944
    %52 = vst.msk [vmem:[#allocation0] sm:$0x1] %vm51, %v50
    %s53 = scalar_lea.vmem %s0, 23
    %v54 = vld [vmem:[%s53] sm:$0x1]
    %55 = vrot.lane.b32.xlu0 %v54, 92
    %v56 = vpop.permute.xlu0 %55
    %vm57 = vcmask 786144
    %58 = vst.msk [vmem:[#allocation0] sm:$0x1] %vm57, %v56
    %s59 = scalar_lea.vmem %s0, 22
    %v60 = vld [vmem:[%s59] sm:$0x1]
    %61 = vrot.lane.b32.xlu0 %v60, 88
    %v62 = vpop.permute.xlu0 %61
    %vm63 = vcmask 753344
    %64 = vst.msk [vmem:[#allocation0] sm:$0x1] %vm63, %v62
    %s65 = scalar_lea.vmem %s0, 21
    %v66 = vld [vmem:[%s65] sm:$0x1]
    %67 = vrot.lane.b32.xlu0 %v66, 84
    %v68 = vpop.permute.xlu0 %67
    %vm69 = vcmask 720544
    %70 = vst.msk [vmem:[#allocation0] sm:$0x1] %vm69, %v68
    %s71 = scalar_lea.vmem %s0, 20
    %v72 = vld [vmem:[%s71] sm:$0x1]
    %73 = vrot.lane.b32.xlu0 %v72, 80
    %v74 = vpop.permute.xlu0 %73
    %vm75 = vcmask 687744
    %76 = vst.msk [vmem:[#allocation0] sm:$0x1] %vm75, %v74
    %s77 = scalar_lea.vmem %s0, 19
    %v78 = vld [vmem:[%s77] sm:$0x1]
    %79 = vrot.lane.b32.xlu0 %v78, 76
    %v80 = vpop.permute.xlu0 %79
    %vm81 = vcmask 654944
    %82 = vst.msk [vmem:[#allocation0] sm:$0x1] %vm81, %v80
    %s83 = scalar_lea.vmem %s0, 18
    %v84 = vld [vmem:[%s83] sm:$0x1]
    %85 = vrot.lane.b32.xlu0 %v84, 72
    %v86 = vpop.permute.xlu0 %85
    %vm87 = vcmask 622144
    %88 = vst.msk [vmem:[#allocation0] sm:$0x1] %vm87, %v86
    %s89 = scalar_lea.vmem %s0, 17
    %v90 = vld [vmem:[%s89] sm:$0x1]
    %91 = vrot.lane.b32.xlu0 %v90, 68
    %v92 = vpop.permute.xlu0 %91
    %vm93 = vcmask 589344
    %94 = vst.msk [vmem:[#allocation0] sm:$0x1] %vm93, %v92
    %s95 = scalar_lea.vmem %s0, 16
    %v96 = vld [vmem:[%s95] sm:$0x1]
    %97 = vrot.lane.b32.xlu0 %v96, 64
    %v98 = vpop.permute.xlu0 %97
    %vm99 = vcmask 556544
    %100 = vst.msk [vmem:[#allocation0] sm:$0x1] %vm99, %v98
    %s101 = scalar_lea.vmem %s0, 15
    %v102 = vld [vmem:[%s101] sm:$0x1]
    %103 = vrot.lane.b32.xlu0 %v102, 60
    %v104 = vpop.permute.xlu0 %103
    %vm105 = vcmask 523744
    %106 = vst.msk [vmem:[#allocation0] sm:$0x1] %vm105, %v104
    %s107 = scalar_lea.vmem %s0, 14
    %v108 = vld [vmem:[%s107] sm:$0x1]
    %109 = vrot.lane.b32.xlu0 %v108, 56
    %v110 = vpop.permute.xlu0 %109
    %vm111 = vcmask 490944
    %112 = vst.msk [vmem:[#allocation0] sm:$0x1] %vm111, %v110
    %s113 = scalar_lea.vmem %s0, 13
    %v114 = vld [vmem:[%s113] sm:$0x1]
    %115 = vrot.lane.b32.xlu0 %v114, 52
    %v116 = vpop.permute.xlu0 %115
    %vm117 = vcmask 458144
    %118 = vst.msk [vmem:[#allocation0] sm:$0x1] %vm117, %v116
    %s119 = scalar_lea.vmem %s0, 12
    %v120 = vld [vmem:[%s119] sm:$0x1]
    %121 = vrot.lane.b32.xlu0 %v120, 48
    %v122 = vpop.permute.xlu0 %121
    %vm123 = vcmask 425344
    %124 = vst.msk [vmem:[#allocation0] sm:$0x1] %vm123, %v122
    %s125 = scalar_lea.vmem %s0, 11
    %v126 = vld [vmem:[%s125] sm:$0x1]
    %127 = vrot.lane.b32.xlu0 %v126, 44
    %v128 = vpop.permute.xlu0 %127
    %vm129 = vcmask 392544
    %130 = vst.msk [vmem:[#allocation0] sm:$0x1] %vm129, %v128
    %s131 = scalar_lea.vmem %s0, 10
    %v132 = vld [vmem:[%s131] sm:$0x1]
    %133 = vrot.lane.b32.xlu0 %v132, 40
    %v134 = vpop.permute.xlu0 %133
    %vm135 = vcmask 359744
    %136 = vst.msk [vmem:[#allocation0] sm:$0x1] %vm135, %v134
    %s137 = scalar_lea.vmem %s0, 9
    %v138 = vld [vmem:[%s137] sm:$0x1]
    %139 = vrot.lane.b32.xlu0 %v138, 36
    %v140 = vpop.permute.xlu0 %139
    %vm141 = vcmask 326944
    %142 = vst.msk [vmem:[#allocation0] sm:$0x1] %vm141, %v140
    %s143 = scalar_lea.vmem %s0, 8
    %v144 = vld [vmem:[%s143] sm:$0x1]
    %145 = vrot.lane.b32.xlu0 %v144, 32
    %v146 = vpop.permute.xlu0 %145
    %vm147 = vcmask 294144
    %148 = vst.msk [vmem:[#allocation0] sm:$0x1] %vm147, %v146
    %s149 = scalar_lea.vmem %s0, 7
    %v150 = vld [vmem:[%s149] sm:$0x1]
    %151 = vrot.lane.b32.xlu0 %v150, 28
    %v152 = vpop.permute.xlu0 %151
    %vm153 = vcmask 261344
    %154 = vst.msk [vmem:[#allocation0] sm:$0x1] %vm153, %v152
    %s155 = scalar_lea.vmem %s0, 6
    %v156 = vld [vmem:[%s155] sm:$0x1]
    %157 = vrot.lane.b32.xlu0 %v156, 24
    %v158 = vpop.permute.xlu0 %157
    %vm159 = vcmask 228544
    %160 = vst.msk [vmem:[#allocation0] sm:$0x1] %vm159, %v158
    %s161 = scalar_lea.vmem %s0, 5
    %v162 = vld [vmem:[%s161] sm:$0x1]
    %163 = vrot.lane.b32.xlu0 %v162, 20
    %v164 = vpop.permute.xlu0 %163
    %vm165 = vcmask 195744
    %166 = vst.msk [vmem:[#allocation0] sm:$0x1] %vm165, %v164
    %s167 = scalar_lea.vmem %s0, 4
    %v168 = vld [vmem:[%s167] sm:$0x1]
    %169 = vrot.lane.b32.xlu0 %v168, 16
    %v170 = vpop.permute.xlu0 %169
    %vm171 = vcmask 162944
    %172 = vst.msk [vmem:[#allocation0] sm:$0x1] %vm171, %v170
    %s173 = scalar_lea.vmem %s0, 3
    %v174 = vld [vmem:[%s173] sm:$0x1]
    %175 = vrot.lane.b32.xlu0 %v174, 12
    %v176 = vpop.permute.xlu0 %175
    %vm177 = vcmask 130144
    %178 = vst.msk [vmem:[#allocation0] sm:$0x1] %vm177, %v176
    %s179 = scalar_lea.vmem %s0, 2
    %v180 = vld [vmem:[%s179] sm:$0x1]
    %181 = vrot.lane.b32.xlu0 %v180, 8
    %v182 = vpop.permute.xlu0 %181
    %vm183 = vcmask 97344
    %184 = vst.msk [vmem:[#allocation0] sm:$0x1] %vm183, %v182
    %s185 = scalar_lea.vmem %s0, 1
    %v186 = vld [vmem:[%s185] sm:$0x1]
    %187 = vrot.lane.b32.xlu0 %v186, 4
    %v188 = vpop.permute.xlu0 %187
    %vm189 = vcmask 64544
    %190 = vst.msk [vmem:[#allocation0] sm:$0x1] %vm189, %v188
    %s192 = sshllo.u32 0, 1
    %v194 = vld [vmem:[#allocation0] sm:%s192]
    %s195 = sshllo.u32 0, 1
    %196 = vst [vmem:[%s1] sm:%s195] %v194

// kernel: basic_block_forward.3
$region0: #{basic_block_forward.3}
  #allocation0 [shape = 'u32[]', space=smem, size = 0x4, offset = 0x4, fixed_abs, tag = 'smem constant byte address 0x4 - core index']
  #allocation1 [shape = 'u32[144,128]{1,0:T(1,128)}', space=vmem, size = 0x12000, scoped, tag = 'internal scratch']
  %s0 = inlined_call_operand.vmem [shape: f32[2,16,16,4], index: 0, kind: input, shape index: {}]
  %s1 = inlined_call_operand.vmem [shape: bf16[36,4], index: 1, kind: input, shape index: {}]
  %s2 = inlined_call_operand.vmem [shape: bf16[2,256,4], index: 2, kind: output, shape index: {0}]
  %s3 = inlined_call_operand.vmem [shape: f32[2,2,4], index: 3, kind: output, shape index: {1}]
  %4 = xla_tuple %s2, %s3
  %s5 = sld [smem:[#allocation0]]
  $region49: #{basic_block_forward.3} parent=0
    _
  %s7 = ssub.s32 1, %s5
  %s8 = scalar_select 0, %s7, %s5
  loop: start=0, step=1, limit=4
  $region2: #{basic_block_forward.3} parent=0 // loop_pre_header
    _
  $region3: #{basic_block_forward.3} parent=0 // loop_header
    %s10 = sphi 0, %s14
    %p11 = scmp.ge.s32.totalorder %s10, 4
    %s20 = sphi 0, %s22
    %s23 = sphi 0, %s20
    %s24 = sphi 0, %s23
    %s40 = sphi 0, %s24
    %s44 = sphi 0, %s44
    %s46 = sphi 0, %s44
    %s47 = sphi 0, %s46
    %s61 = sphi 0, %s47
    %s67 = sphi 0, %s69
    %s70 = sphi 0, %s67
    %s71 = sphi 0, %s70
    %s87 = sphi 0, %s71
    %s93 = sphi 0, %s95
    %s96 = sphi 0, %s93
    %s97 = sphi 0, %s96
    %s113 = sphi 0, %s97
  $region4: #{basic_block_forward.3} parent=0 // loop_header_branch
    %13 = sbr.rel (%p11) target = $region8
  $region5: #{basic_block_forward.3} parent=0 // loop_body
    %s15 = ssub.s32 %s10, 1
    %s16 = ssub.s32 %s10, 2
    %s17 = sadd.s32 %s10, 1
    %s18 = ssub.s32 %s10, %s17
    %p19 = scmp.eq.s32.totalorder %s18, 0
    %s21 = sadd.s32 %s20, 1
    %s22 = scalar_select %p19, %s20, %s21
    %p25 = pneg %p19
    %p26 = scmp.eq.s32.totalorder %s10, 1
    %p27 = por %p25, %p26
    %p28 = scmp.ne.s32.totalorder %s20, %s23
    %p29 = scmp.eq.s32.totalorder %s10, 0
    %p30 = por %p28, %p29
    %p31 = scmp.ne.s32.totalorder %s20, %s23
    %p32 = scmp.eq.s32.totalorder %s15, 1
    %p33 = por %p31, %p32
    %p34 = scmp.ne.s32.totalorder %s23, %s24
    %p35 = scmp.eq.s32.totalorder %s15, 0
    %p36 = por %p34, %p35
    %p37 = scmp.ne.s32.totalorder %s23, %s24
    %p38 = scmp.eq.s32.totalorder %s16, 1
    %p39 = por %p37, %p38
    %p41 = scmp.ne.s32.totalorder %s24, %s40
    %p42 = scmp.eq.s32.totalorder %s16, 0
    %p43 = por %p41, %p42
    %s45 = sadd.s32 %s44, 1
    %p48 = scmp.eq.s32.totalorder %s10, 1
    %p49 = scmp.ne.s32.totalorder %s44, %s46
    %p50 = scmp.eq.s32.totalorder %s10, 0
    %p51 = por %p49, %p50
    %p52 = scmp.ne.s32.totalorder %s44, %s46
    %p53 = scmp.eq.s32.totalorder %s15, 1
    %p54 = por %p52, %p53
    %p55 = scmp.ne.s32.totalorder %s46, %s47
    %p56 = scmp.eq.s32.totalorder %s15, 0
    %p57 = por %p55, %p56
    %p58 = scmp.ne.s32.totalorder %s46, %s47
    %p59 = scmp.eq.s32.totalorder %s16, 1
    %p60 = por %p58, %p59
    %p62 = scmp.ne.s32.totalorder %s47, %s61
    %p63 = scmp.eq.s32.totalorder %s16, 0
    %p64 = por %p62, %p63
    %s65 = ssub.s32 %s10, %s17
    %p66 = scmp.eq.s32.totalorder %s65, 0
    %s68 = sadd.s32 %s67, 1
    %s69 = scalar_select %p66, %s67, %s68
    %p72 = pneg %p66
    %p73 = scmp.eq.s32.totalorder %s10, 1
    %p74 = por %p72, %p73
    %p75 = scmp.ne.s32.totalorder %s67, %s70
    %p76 = scmp.eq.s32.totalorder %s10, 0
    %p77 = por %p75, %p76
    %p78 = scmp.ne.s32.totalorder %s67, %s70
    %p79 = scmp.eq.s32.totalorder %s15, 1
    %p80 = por %p78, %p79
    %p81 = scmp.ne.s32.totalorder %s70, %s71
    %p82 = scmp.eq.s32.totalorder %s15, 0
    %p83 = por %p81, %p82
    %p84 = scmp.ne.s32.totalorder %s70, %s71
    %p85 = scmp.eq.s32.totalorder %s16, 1
    %p86 = por %p84, %p85
    %p88 = scmp.ne.s32.totalorder %s71, %s87
    %p89 = scmp.eq.s32.totalorder %s16, 0
    %p90 = por %p88, %p89
    %s91 = ssub.s32 %s10, %s17
    %p92 = scmp.eq.s32.totalorder %s91, 0
    %s94 = sadd.s32 %s93, 1
    %s95 = scalar_select %p92, %s93, %s94
    %p98 = pneg %p92
    %p99 = scmp.eq.s32.totalorder %s10, 1
    %p100 = por %p98, %p99
    %p101 = scmp.ne.s32.totalorder %s93, %s96
    %p102 = scmp.eq.s32.totalorder %s10, 0
    %p103 = por %p101, %p102
    %p104 = scmp.ne.s32.totalorder %s93, %s96
    %p105 = scmp.eq.s32.totalorder %s15, 1
    %p106 = por %p104, %p105
    %p107 = scmp.ne.s32.totalorder %s96, %s97
    %p108 = scmp.eq.s32.totalorder %s15, 0
    %p109 = por %p107, %p108
    %p110 = scmp.ne.s32.totalorder %s96, %s97
    %p111 = scmp.eq.s32.totalorder %s16, 1
    %p112 = por %p110, %p111
    %p114 = scmp.ne.s32.totalorder %s97, %s113
    %p115 = scmp.eq.s32.totalorder %s16, 0
    %p116 = por %p114, %p115
    %p117 = scmp.le.s32.totalorder 1, %s10
    %p118 = scmp.lt.s32.totalorder %s10, 3
    %p119 = pnand %p117, %p118
    %p120 = pneg %p119
    // Predicated region
    $region9: #{basic_block_forward.3} parent=5 // pred_check
      _
    $region10: #{basic_block_forward.3} parent=5 // pred_check_branch
      %122 = sbr.rel (%p119) target = $region12
    $region11: #{basic_block_forward.3} parent=5 // pred_region
      %s123 = ssub.s32 %s10, 1
      // Predicated region
      $region13: #{basic_block_forward.3} parent=11 // pred_check
        %p124 = pneg %p57
      $region14: #{basic_block_forward.3} parent=11 // pred_check_branch
        %126 = sbr.rel (%p124) target = $region16
      $region15: #{basic_block_forward.3} parent=11 // pred_region
        _
      $region16: #{basic_block_forward.3} parent=11 // pred_fallthru
        _
    $region12: #{basic_block_forward.3} parent=5 // pred_fallthru
      _
    %p127 = scmp.lt.s32.totalorder %s10, 2
    // Predicated region
    $region17: #{basic_block_forward.3} parent=5 // pred_check
      %p128 = pneg %p127
    $region18: #{basic_block_forward.3} parent=5 // pred_check_branch
      %130 = sbr.rel (%p128) target = $region20
    $region19: #{basic_block_forward.3} parent=5 // pred_region
      // Predicated region
      $region21: #{basic_block_forward.3} parent=19 // pred_check
        %p131 = pneg %p30
      $region22: #{basic_block_forward.3} parent=19 // pred_check_branch
        %133 = sbr.rel (%p131) target = $region24
      $region23: #{basic_block_forward.3} parent=19 // pred_region
        %p134 = scmp.lt.s32.totalorder %s10, 1
        %s135 = scalar_select %p134, %s10, 1
        %s136 = smul.addr %s135, 32
        %s137 = smul.addr %s136, 8
        %s138 = scalar_lea.vmem %s0, %s137
      $region24: #{basic_block_forward.3} parent=19 // pred_fallthru
        _
    $region20: #{basic_block_forward.3} parent=5 // pred_fallthru
      _
    %p139 = scmp.le.s32.totalorder 1, %s10
    %p140 = scmp.lt.s32.totalorder %s10, 3
    %p141 = pnand %p139, %p140
    %p142 = pneg %p141
    // Predicated region
    $region25: #{basic_block_forward.3} parent=5 // pred_check
      _
    $region26: #{basic_block_forward.3} parent=5 // pred_check_branch
      %144 = sbr.rel (%p141) target = $region28
    $region27: #{basic_block_forward.3} parent=5 // pred_region
      %s145 = ssub.s32 %s10, 1
      %p146 = scmp.lt.s32.totalorder %s15, 1
      %s147 = scalar_select %p146, %s15, 1
      %s148 = smul.addr %s147, 32
      %s149 = smul.addr %s148, 8
      %s150 = scalar_lea.vmem %s0, %s149
      %p151 = pneg %p36
      %p152 = pneg %p33
      %p153 = pneg %p57
      %p154 = pneg %p54
      %p155 = pneg %p83
      %p156 = pneg %p80
      %p157 = scmp.lt.s32.totalorder %s15, 1
      %s158 = scalar_select %p157, %s15, 1
      %s159 = smul.addr %s158, 32
      %s160 = smul.addr %s159, 4
      %s161 = scalar_lea.vmem %s2, %s160
      %p162 = pneg %p109
      %p163 = pneg %p106
      %p164 = scmp.lt.s32.totalorder %s15, 1
      %s165 = scalar_select %p164, %s15, 1
      %s166 = smul.addr %s165, 2
      %s167 = scalar_lea.vmem %s3, %s166
      %p168 = scmp.lt.s32.totalorder %s15, 1
      %s169 = scalar_select %p168, %s15, 1
      %s170 = smul.addr %s169, 32
      %s171 = smul.addr %s170, 8
      %s172 = scalar_lea.vmem %s0, %s171
      %p173 = scmp.lt.s32.totalorder %s15, 1
      %s174 = scalar_select %p173, %s15, 1
      %s175 = smul.addr %s174, 32
      %s176 = smul.addr %s175, 4
      %s177 = scalar_lea.vmem %s2, %s176
      %p178 = scmp.lt.s32.totalorder %s15, 1
      %s179 = scalar_select %p178, %s15, 1
      %s180 = smul.addr %s179, 2
      %s181 = scalar_lea.vmem %s3, %s180
      %v183 = vld [vmem:[%s172] sm:$0xff]
      %v184 = vld [vmem:[%s172 + $0x8] sm:$0xff]
      %v185 = vld [vmem:[%s172 + $0x10] sm:$0xff]
      %v186 = vld [vmem:[%s172 + $0x18] sm:$0xff]
      %v187 = vld [vmem:[%s172 + $0x20] sm:$0xff]
      %v188 = vld [vmem:[%s172 + $0x28] sm:$0xff]
      %v189 = vld [vmem:[%s172 + $0x30] sm:$0xff]
      %v190 = vld [vmem:[%s172 + $0x38] sm:$0xff]
      %v191 = vld [vmem:[%s172 + $0x40] sm:$0xff]
      %v192 = vld [vmem:[%s172 + $0x48] sm:$0xff]
      %v193 = vld [vmem:[%s172 + $0x50] sm:$0xff]
      %v194 = vld [vmem:[%s172 + $0x58] sm:$0xff]
      %v195 = vld [vmem:[%s172 + $0x60] sm:$0xff]
      %v196 = vld [vmem:[%s172 + $0x68] sm:$0xff]
      %v197 = vld [vmem:[%s172 + $0x70] sm:$0xff]
      %v198 = vld [vmem:[%s172 + $0x78] sm:$0xff]
      %v199 = vld [vmem:[%s172 + $0x80] sm:$0xff]
      %v200 = vld [vmem:[%s172 + $0x88] sm:$0xff]
      %v201 = vld [vmem:[%s172 + $0x90] sm:$0xff]
      %v202 = vld [vmem:[%s172 + $0x98] sm:$0xff]
      %v203 = vld [vmem:[%s172 + $0xa0] sm:$0xff]
      %v204 = vld [vmem:[%s172 + $0xa8] sm:$0xff]
      %v205 = vld [vmem:[%s172 + $0xb0] sm:$0xff]
      %v206 = vld [vmem:[%s172 + $0xb8] sm:$0xff]
      %v207 = vld [vmem:[%s172 + $0xc0] sm:$0xff]
      %v208 = vld [vmem:[%s172 + $0xc8] sm:$0xff]
      %v209 = vld [vmem:[%s172 + $0xd0] sm:$0xff]
      %v210 = vld [vmem:[%s172 + $0xd8] sm:$0xff]
      %v211 = vld [vmem:[%s172 + $0xe0] sm:$0xff]
      %v212 = vld [vmem:[%s172 + $0xe8] sm:$0xff]
      %v213 = vld [vmem:[%s172 + $0xf0] sm:$0xff]
      %v214 = vld [vmem:[%s172 + $0xf8] sm:$0xff]
      %v215 = vpack.c.bf16 %v184, %v183
      %v216 = vpack.c.bf16 %v186, %v185
      %v217 = vpack.c.bf16 %v188, %v187
      %v218 = vpack.c.bf16 %v190, %v189
      %v219 = vpack.c.bf16 %v192, %v191
      %v220 = vpack.c.bf16 %v194, %v193
      %v221 = vpack.c.bf16 %v196, %v195
      %v222 = vpack.c.bf16 %v198, %v197
      %v223 = vpack.c.bf16 %v200, %v199
      %v224 = vpack.c.bf16 %v202, %v201
      %v225 = vpack.c.bf16 %v204, %v203
      %v226 = vpack.c.bf16 %v206, %v205
      %v227 = vpack.c.bf16 %v208, %v207
      %v228 = vpack.c.bf16 %v210, %v209
      %v229 = vpack.c.bf16 %v212, %v211
      %v230 = vpack.c.bf16 %v214, %v213
      %v232 = vshrl.u32 %v215, 16
      %v234 = vrot.slane %v232, 7
      %v235 = vshll.u32 %v215, 16
      %v237 = vor.u32 %v234, %v235
      %v239 = vshrl.u32 %v216, 16
      %v241 = vrot.slane %v239, 7
      %v242 = vshll.u32 %v216, 16
      %v244 = vor.u32 %v241, %v242
      %v246 = vshrl.u32 %v217, 16
      %v248 = vrot.slane %v246, 7
      %v249 = vshll.u32 %v217, 16
      %v251 = vor.u32 %v248, %v249
      %v253 = vshrl.u32 %v218, 16
      %v255 = vrot.slane %v253, 7
      %v256 = vshll.u32 %v218, 16
      %v258 = vor.u32 %v255, %v256
      %v260 = vshrl.u32 %v219, 16
      %v262 = vrot.slane %v260, 7
      %v263 = vshll.u32 %v219, 16
      %v265 = vor.u32 %v262, %v263
      %v267 = vshrl.u32 %v220, 16
      %v269 = vrot.slane %v267, 7
      %v270 = vshll.u32 %v220, 16
      %v272 = vor.u32 %v269, %v270
      %v274 = vshrl.u32 %v221, 16
      %v276 = vrot.slane %v274, 7
      %v277 = vshll.u32 %v221, 16
      %v279 = vor.u32 %v276, %v277
      %v281 = vshrl.u32 %v222, 16
      %v283 = vrot.slane %v281, 7
      %v284 = vshll.u32 %v222, 16
      %v286 = vor.u32 %v283, %v284
      %v288 = vshrl.u32 %v223, 16
      %v290 = vrot.slane %v288, 7
      %v291 = vshll.u32 %v223, 16
      %v293 = vor.u32 %v290, %v291
      %v295 = vshrl.u32 %v224, 16
      %v297 = vrot.slane %v295, 7
      %v298 = vshll.u32 %v224, 16
      %v300 = vor.u32 %v297, %v298
      %v302 = vshrl.u32 %v225, 16
      %v304 = vrot.slane %v302, 7
      %v305 = vshll.u32 %v225, 16
      %v307 = vor.u32 %v304, %v305
      %v309 = vshrl.u32 %v226, 16
      %v311 = vrot.slane %v309, 7
      %v312 = vshll.u32 %v226, 16
      %v314 = vor.u32 %v311, %v312
      %v316 = vshrl.u32 %v227, 16
      %v318 = vrot.slane %v316, 7
      %v319 = vshll.u32 %v227, 16
      %v321 = vor.u32 %v318, %v319
      %v323 = vshrl.u32 %v228, 16
      %v325 = vrot.slane %v323, 7
      %v326 = vshll.u32 %v228, 16
      %v328 = vor.u32 %v325, %v326
      %v330 = vshrl.u32 %v229, 16
      %v332 = vrot.slane %v330, 7
      %v333 = vshll.u32 %v229, 16
      %v335 = vor.u32 %v332, %v333
      %v337 = vshrl.u32 %v230, 16
      %v339 = vrot.slane %v337, 7
      %v340 = vshll.u32 %v230, 16
      %v342 = vor.u32 %v339, %v340
      %vm375 = vcmask 1040384
      %vm376 = vsmask.f32 256
      %vm377 = vmand %vm375, %vm376
      %v378 = vsel %vm377, 0, %v237
      %v379 = vsel %vm377, 0, %v244
      %v380 = vsel %vm377, 0, %v251
      %v381 = vsel %vm377, 0, %v258
      %v382 = vsel %vm377, 0, %v265
      %v383 = vsel %vm377, 0, %v272
      %v384 = vsel %vm377, 0, %v279
      %v385 = vsel %vm377, 0, %v286
      %v386 = vsel %vm377, 0, %v293
      %v387 = vsel %vm377, 0, %v300
      %v388 = vsel %vm377, 0, %v307
      %v389 = vsel %vm377, 0, %v314
      %v390 = vsel %vm377, 0, %v321
      %v391 = vsel %vm377, 0, %v328
      %v392 = vsel %vm377, 0, %v335
      %v393 = vsel %vm377, 0, %v342
      %v394 = vsel %vm377, %v234, 0
      %v395 = vsel %vm377, %v241, 0
      %v396 = vsel %vm377, %v248, 0
      %v397 = vsel %vm377, %v255, 0
      %v398 = vsel %vm377, %v262, 0
      %v399 = vsel %vm377, %v269, 0
      %v400 = vsel %vm377, %v276, 0
      %v401 = vsel %vm377, %v283, 0
      %v402 = vsel %vm377, %v290, 0
      %v403 = vsel %vm377, %v297, 0
      %v404 = vsel %vm377, %v304, 0
      %v405 = vsel %vm377, %v311, 0
      %v406 = vsel %vm377, %v318, 0
      %v407 = vsel %vm377, %v325, 0
      %v408 = vsel %vm377, %v332, 0
      %v409 = vsel %vm377, %v339, 0
      %vm410 = vsmask.f32 7424
      %v412 = vshrl.u32 0, 16
      %v414 = vshll.u32 0, 16
      %v416 = vrot.slane %v414, 1
      %v417 = vor.u32 %v412, %v416
      %v418 = vsel %vm410, %v417, %v416
      %v420 = vshrl.u32 %v378, 16
      %v422 = vshll.u32 %v378, 16
      %v424 = vrot.slane %v422, 1
      %v425 = vor.u32 %v420, %v424
      %v427 = vshll.u32 %v394, 16
      %v429 = vrot.slane %v427, 1
      %v430 = vsel %vm410, %v425, %v429
      %v432 = vshrl.u32 %v379, 16
      %v434 = vshll.u32 %v379, 16
      %v436 = vrot.slane %v434, 1
      %v437 = vor.u32 %v432, %v436
      %v439 = vshll.u32 %v395, 16
      %v441 = vrot.slane %v439, 1
      %v442 = vsel %vm410, %v437, %v441
      %v444 = vshrl.u32 %v380, 16
      %v446 = vshll.u32 %v380, 16
      %v448 = vrot.slane %v446, 1
      %v449 = vor.u32 %v444, %v448
      %v451 = vshll.u32 %v396, 16
      %v453 = vrot.slane %v451, 1
      %v454 = vsel %vm410, %v449, %v453
      %v456 = vshrl.u32 %v381, 16
      %v458 = vshll.u32 %v381, 16
      %v460 = vrot.slane %v458, 1
      %v461 = vor.u32 %v456, %v460
      %v463 = vshll.u32 %v397, 16
      %v465 = vrot.slane %v463, 1
      %v466 = vsel %vm410, %v461, %v465
      %v468 = vshrl.u32 %v382, 16
      %v470 = vshll.u32 %v382, 16
      %v472 = vrot.slane %v470, 1
      %v473 = vor.u32 %v468, %v472
      %v475 = vshll.u32 %v398, 16
      %v477 = vrot.slane %v475, 1
      %v478 = vsel %vm410, %v473, %v477
      %v480 = vshrl.u32 %v383, 16
      %v482 = vshll.u32 %v383, 16
      %v484 = vrot.slane %v482, 1
      %v485 = vor.u32 %v480, %v484
      %v487 = vshll.u32 %v399, 16
      %v489 = vrot.slane %v487, 1
      %v490 = vsel %vm410, %v485, %v489
      %v492 = vshrl.u32 %v384, 16
      %v494 = vshll.u32 %v384, 16
      %v496 = vrot.slane %v494, 1
      %v497 = vor.u32 %v492, %v496
      %v499 = vshll.u32 %v400, 16
      %v501 = vrot.slane %v499, 1
      %v502 = vsel %vm410, %v497, %v501
      %v504 = vshrl.u32 %v385, 16
      %v506 = vshll.u32 %v385, 16
      %v508 = vrot.slane %v506, 1
      %v509 = vor.u32 %v504, %v508
      %v511 = vshll.u32 %v401, 16
      %v513 = vrot.slane %v511, 1
      %v514 = vsel %vm410, %v509, %v513
      %v516 = vshrl.u32 %v386, 16
      %v518 = vshll.u32 %v386, 16
      %v520 = vrot.slane %v518, 1
      %v521 = vor.u32 %v516, %v520
      %v523 = vshll.u32 %v402, 16
      %v525 = vrot.slane %v523, 1
      %v526 = vsel %vm410, %v521, %v525
      %v528 = vshrl.u32 %v387, 16
      %v530 = vshll.u32 %v387, 16
      %v532 = vrot.slane %v530, 1
      %v533 = vor.u32 %v528, %v532
      %v535 = vshll.u32 %v403, 16
      %v537 = vrot.slane %v535, 1
      %v538 = vsel %vm410, %v533, %v537
      %v540 = vshrl.u32 %v388, 16
      %v542 = vshll.u32 %v388, 16
      %v544 = vrot.slane %v542, 1
      %v545 = vor.u32 %v540, %v544
      %v547 = vshll.u32 %v404, 16
      %v549 = vrot.slane %v547, 1
      %v550 = vsel %vm410, %v545, %v549
      %v552 = vshrl.u32 %v389, 16
      %v554 = vshll.u32 %v389, 16
      %v556 = vrot.slane %v554, 1
      %v557 = vor.u32 %v552, %v556
      %v559 = vshll.u32 %v405, 16
      %v561 = vrot.slane %v559, 1
      %v562 = vsel %vm410, %v557, %v561
      %v564 = vshrl.u32 %v390, 16
      %v566 = vshll.u32 %v390, 16
      %v568 = vrot.slane %v566, 1
      %v569 = vor.u32 %v564, %v568
      %v571 = vshll.u32 %v406, 16
      %v573 = vrot.slane %v571, 1
      %v574 = vsel %vm410, %v569, %v573
      %v576 = vshrl.u32 %v391, 16
      %v578 = vshll.u32 %v391, 16
      %v580 = vrot.slane %v578, 1
      %v581 = vor.u32 %v576, %v580
      %v583 = vshll.u32 %v407, 16
      %v585 = vrot.slane %v583, 1
      %v586 = vsel %vm410, %v581, %v585
      %v588 = vshrl.u32 %v392, 16
      %v590 = vshll.u32 %v392, 16
      %v592 = vrot.slane %v590, 1
      %v593 = vor.u32 %v588, %v592
      %v595 = vshll.u32 %v408, 16
      %v597 = vrot.slane %v595, 1
      %v598 = vsel %vm410, %v593, %v597
      %599 = vrot.lane.b32.xlu0 %v418, 4
      %v600 = vpop.permute.xlu0 %599
      %601 = vrot.lane.b32.xlu0 %v430, 4
      %v602 = vpop.permute.xlu0 %601
      %603 = vrot.lane.b32.xlu0 %v442, 4
      %v604 = vpop.permute.xlu0 %603
      %605 = vrot.lane.b32.xlu0 %v454, 4
      %v606 = vpop.permute.xlu0 %605
      %607 = vrot.lane.b32.xlu0 %v466, 4
      %v608 = vpop.permute.xlu0 %607
      %609 = vrot.lane.b32.xlu0 %v478, 4
      %v610 = vpop.permute.xlu0 %609
      %611 = vrot.lane.b32.xlu0 %v490, 4
      %v612 = vpop.permute.xlu0 %611
      %613 = vrot.lane.b32.xlu0 %v502, 4
      %v614 = vpop.permute.xlu0 %613
      %615 = vrot.lane.b32.xlu0 %v514, 4
      %v616 = vpop.permute.xlu0 %615
      %617 = vrot.lane.b32.xlu0 %v526, 4
      %v618 = vpop.permute.xlu0 %617
      %619 = vrot.lane.b32.xlu0 %v538, 4
      %v620 = vpop.permute.xlu0 %619
      %621 = vrot.lane.b32.xlu0 %v550, 4
      %v622 = vpop.permute.xlu0 %621
      %623 = vrot.lane.b32.xlu0 %v562, 4
      %v624 = vpop.permute.xlu0 %623
      %625 = vrot.lane.b32.xlu0 %v574, 4
      %v626 = vpop.permute.xlu0 %625
      %627 = vrot.lane.b32.xlu0 %v586, 4
      %v628 = vpop.permute.xlu0 %627
      %629 = vrot.lane.b32.xlu0 %v598, 4
      %v630 = vpop.permute.xlu0 %629
      %vm662 = vcmask 1046528
      %v663 = vrot.slane 0, 1
      %v664 = vsel %vm662, %v663, %v663
      %v665 = vrot.slane %v378, 1
      %v666 = vrot.slane %v394, 1
      %v667 = vsel %vm662, %v665, %v666
      %v668 = vrot.slane %v379, 1
      %v669 = vrot.slane %v395, 1
      %v670 = vsel %vm662, %v668, %v669
      %v671 = vrot.slane %v380, 1
      %v672 = vrot.slane %v396, 1
      %v673 = vsel %vm662, %v671, %v672
      %v674 = vrot.slane %v381, 1
      %v675 = vrot.slane %v397, 1
      %v676 = vsel %vm662, %v674, %v675
      %v677 = vrot.slane %v382, 1
      %v678 = vrot.slane %v398, 1
      %v679 = vsel %vm662, %v677, %v678
      %v680 = vrot.slane %v383, 1
      %v681 = vrot.slane %v399, 1
      %v682 = vsel %vm662, %v680, %v681
      %v683 = vrot.slane %v384, 1
      %v684 = vrot.slane %v400, 1
      %v685 = vsel %vm662, %v683, %v684
      %v686 = vrot.slane %v385, 1
      %v687 = vrot.slane %v401, 1
      %v688 = vsel %vm662, %v686, %v687
      %v689 = vrot.slane %v386, 1
      %v690 = vrot.slane %v402, 1
      %v691 = vsel %vm662, %v689, %v690
      %v692 = vrot.slane %v387, 1
      %v693 = vrot.slane %v403, 1
      %v694 = vsel %vm662, %v692, %v693
      %v695 = vrot.slane %v388, 1
      %v696 = vrot.slane %v404, 1
      %v697 = vsel %vm662, %v695, %v696
      %v698 = vrot.slane %v389, 1
      %v699 = vrot.slane %v405, 1
      %v700 = vsel %vm662, %v698, %v699
      %v701 = vrot.slane %v390, 1
      %v702 = vrot.slane %v406, 1
      %v703 = vsel %vm662, %v701, %v702
      %v704 = vrot.slane %v391, 1
      %v705 = vrot.slane %v407, 1
      %v706 = vsel %vm662, %v704, %v705
      %v707 = vrot.slane %v392, 1
      %v708 = vrot.slane %v408, 1
      %v709 = vsel %vm662, %v707, %v708
      %710 = vrot.lane.b32.xlu0 %v664, 8
      %v711 = vpop.permute.xlu0 %710
      %712 = vrot.lane.b32.xlu0 %v667, 8
      %v713 = vpop.permute.xlu0 %712
      %714 = vrot.lane.b32.xlu0 %v670, 8
      %v715 = vpop.permute.xlu0 %714
      %716 = vrot.lane.b32.xlu0 %v673, 8
      %v717 = vpop.permute.xlu0 %716
      %718 = vrot.lane.b32.xlu0 %v676, 8
      %v719 = vpop.permute.xlu0 %718
      %720 = vrot.lane.b32.xlu0 %v679, 8
      %v721 = vpop.permute.xlu0 %720
      %722 = vrot.lane.b32.xlu0 %v682, 8
      %v723 = vpop.permute.xlu0 %722
      %724 = vrot.lane.b32.xlu0 %v685, 8
      %v725 = vpop.permute.xlu0 %724
      %726 = vrot.lane.b32.xlu0 %v688, 8
      %v727 = vpop.permute.xlu0 %726
      %728 = vrot.lane.b32.xlu0 %v691, 8
      %v729 = vpop.permute.xlu0 %728
      %730 = vrot.lane.b32.xlu0 %v694, 8
      %v731 = vpop.permute.xlu0 %730
      %732 = vrot.lane.b32.xlu0 %v697, 8
      %v733 = vpop.permute.xlu0 %732
      %734 = vrot.lane.b32.xlu0 %v700, 8
      %v735 = vpop.permute.xlu0 %734
      %736 = vrot.lane.b32.xlu0 %v703, 8
      %v737 = vpop.permute.xlu0 %736
      %738 = vrot.lane.b32.xlu0 %v706, 8
      %v739 = vpop.permute.xlu0 %738
      %740 = vrot.lane.b32.xlu0 %v709, 8
      %v741 = vpop.permute.xlu0 %740
      %743 = vrot.lane.b32.xlu0 %v378, 12
      %v744 = vpop.permute.xlu0 %743
      %745 = vrot.lane.b32.xlu0 %v379, 12
      %v746 = vpop.permute.xlu0 %745
      %747 = vrot.lane.b32.xlu0 %v380, 12
      %v748 = vpop.permute.xlu0 %747
      %749 = vrot.lane.b32.xlu0 %v381, 12
      %v750 = vpop.permute.xlu0 %749
      %751 = vrot.lane.b32.xlu0 %v382, 12
      %v752 = vpop.permute.xlu0 %751
      %753 = vrot.lane.b32.xlu0 %v383, 12
      %v754 = vpop.permute.xlu0 %753
      %755 = vrot.lane.b32.xlu0 %v384, 12
      %v756 = vpop.permute.xlu0 %755
      %757 = vrot.lane.b32.xlu0 %v385, 12
      %v758 = vpop.permute.xlu0 %757
      %759 = vrot.lane.b32.xlu0 %v386, 12
      %v760 = vpop.permute.xlu0 %759
      %761 = vrot.lane.b32.xlu0 %v387, 12
      %v762 = vpop.permute.xlu0 %761
      %763 = vrot.lane.b32.xlu0 %v388, 12
      %v764 = vpop.permute.xlu0 %763
      %765 = vrot.lane.b32.xlu0 %v389, 12
      %v766 = vpop.permute.xlu0 %765
      %767 = vrot.lane.b32.xlu0 %v390, 12
      %v768 = vpop.permute.xlu0 %767
      %769 = vrot.lane.b32.xlu0 %v391, 12
      %v770 = vpop.permute.xlu0 %769
      %771 = vrot.lane.b32.xlu0 %v392, 12
      %v772 = vpop.permute.xlu0 %771
      %773 = vrot.lane.b32.xlu0 %v393, 12
      %v774 = vpop.permute.xlu0 %773
      %v776 = vshrl.u32 %v393, 16
      %v778 = vshll.u32 %v393, 16
      %v780 = vrot.slane %v778, 1
      %v781 = vor.u32 %v776, %v780
      %v783 = vshll.u32 %v409, 16
      %v785 = vrot.slane %v783, 1
      %v786 = vsel %vm410, %v781, %v785
      %787 = vrot.lane.b32.xlu0 %v430, 16
      %v788 = vpop.permute.xlu0 %787
      %789 = vrot.lane.b32.xlu0 %v442, 16
      %v790 = vpop.permute.xlu0 %789
      %791 = vrot.lane.b32.xlu0 %v454, 16
      %v792 = vpop.permute.xlu0 %791
      %793 = vrot.lane.b32.xlu0 %v466, 16
      %v794 = vpop.permute.xlu0 %793
      %795 = vrot.lane.b32.xlu0 %v478, 16
      %v796 = vpop.permute.xlu0 %795
      %797 = vrot.lane.b32.xlu0 %v490, 16
      %v798 = vpop.permute.xlu0 %797
      %799 = vrot.lane.b32.xlu0 %v502, 16
      %v800 = vpop.permute.xlu0 %799
      %801 = vrot.lane.b32.xlu0 %v514, 16
      %v802 = vpop.permute.xlu0 %801
      %803 = vrot.lane.b32.xlu0 %v526, 16
      %v804 = vpop.permute.xlu0 %803
      %805 = vrot.lane.b32.xlu0 %v538, 16
      %v806 = vpop.permute.xlu0 %805
      %807 = vrot.lane.b32.xlu0 %v550, 16
      %v808 = vpop.permute.xlu0 %807
      %809 = vrot.lane.b32.xlu0 %v562, 16
      %v810 = vpop.permute.xlu0 %809
      %811 = vrot.lane.b32.xlu0 %v574, 16
      %v812 = vpop.permute.xlu0 %811
      %813 = vrot.lane.b32.xlu0 %v586, 16
      %v814 = vpop.permute.xlu0 %813
      %815 = vrot.lane.b32.xlu0 %v598, 16
      %v816 = vpop.permute.xlu0 %815
      %817 = vrot.lane.b32.xlu0 %v786, 16
      %v818 = vpop.permute.xlu0 %817
      %v820 = vrot.slane %v393, 1
      %v821 = vrot.slane %v409, 1
      %v822 = vsel %vm662, %v820, %v821
      %823 = vrot.lane.b32.xlu0 %v667, 20
      %v824 = vpop.permute.xlu0 %823
      %825 = vrot.lane.b32.xlu0 %v670, 20
      %v826 = vpop.permute.xlu0 %825
      %827 = vrot.lane.b32.xlu0 %v673, 20
      %v828 = vpop.permute.xlu0 %827
      %829 = vrot.lane.b32.xlu0 %v676, 20
      %v830 = vpop.permute.xlu0 %829
      %831 = vrot.lane.b32.xlu0 %v679, 20
      %v832 = vpop.permute.xlu0 %831
      %833 = vrot.lane.b32.xlu0 %v682, 20
      %v834 = vpop.permute.xlu0 %833
      %835 = vrot.lane.b32.xlu0 %v685, 20
      %v836 = vpop.permute.xlu0 %835
      %837 = vrot.lane.b32.xlu0 %v688, 20
      %v838 = vpop.permute.xlu0 %837
      %839 = vrot.lane.b32.xlu0 %v691, 20
      %v840 = vpop.permute.xlu0 %839
      %841 = vrot.lane.b32.xlu0 %v694, 20
      %v842 = vpop.permute.xlu0 %841
      %843 = vrot.lane.b32.xlu0 %v697, 20
      %v844 = vpop.permute.xlu0 %843
      %845 = vrot.lane.b32.xlu0 %v700, 20
      %v846 = vpop.permute.xlu0 %845
      %847 = vrot.lane.b32.xlu0 %v703, 20
      %v848 = vpop.permute.xlu0 %847
      %849 = vrot.lane.b32.xlu0 %v706, 20
      %v850 = vpop.permute.xlu0 %849
      %851 = vrot.lane.b32.xlu0 %v709, 20
      %v852 = vpop.permute.xlu0 %851
      %853 = vrot.lane.b32.xlu0 %v822, 20
      %v854 = vpop.permute.xlu0 %853
      %855 = vrot.lane.b32.xlu0 %v379, 24
      %v856 = vpop.permute.xlu0 %855
      %857 = vrot.lane.b32.xlu0 %v380, 24
      %v858 = vpop.permute.xlu0 %857
      %859 = vrot.lane.b32.xlu0 %v381, 24
      %v860 = vpop.permute.xlu0 %859
      %861 = vrot.lane.b32.xlu0 %v382, 24
      %v862 = vpop.permute.xlu0 %861
      %863 = vrot.lane.b32.xlu0 %v383, 24
      %v864 = vpop.permute.xlu0 %863
      %865 = vrot.lane.b32.xlu0 %v384, 24
      %v866 = vpop.permute.xlu0 %865
      %867 = vrot.lane.b32.xlu0 %v385, 24
      %v868 = vpop.permute.xlu0 %867
      %869 = vrot.lane.b32.xlu0 %v386, 24
      %v870 = vpop.permute.xlu0 %869
      %871 = vrot.lane.b32.xlu0 %v387, 24
      %v872 = vpop.permute.xlu0 %871
      %873 = vrot.lane.b32.xlu0 %v388, 24
      %v874 = vpop.permute.xlu0 %873
      %875 = vrot.lane.b32.xlu0 %v389, 24
      %v876 = vpop.permute.xlu0 %875
      %877 = vrot.lane.b32.xlu0 %v390, 24
      %v878 = vpop.permute.xlu0 %877
      %879 = vrot.lane.b32.xlu0 %v391, 24
      %v880 = vpop.permute.xlu0 %879
      %881 = vrot.lane.b32.xlu0 %v392, 24
      %v882 = vpop.permute.xlu0 %881
      %883 = vrot.lane.b32.xlu0 %v393, 24
      %v884 = vpop.permute.xlu0 %883
      %885 = vrot.lane.b32.xlu0 0, 24
      %v886 = vpop.permute.xlu0 %885
      %887 = vrot.lane.b32.xlu0 %v442, 28
      %v888 = vpop.permute.xlu0 %887
      %889 = vrot.lane.b32.xlu0 %v454, 28
      %v890 = vpop.permute.xlu0 %889
      %891 = vrot.lane.b32.xlu0 %v466, 28
      %v892 = vpop.permute.xlu0 %891
      %893 = vrot.lane.b32.xlu0 %v478, 28
      %v894 = vpop.permute.xlu0 %893
      %895 = vrot.lane.b32.xlu0 %v490, 28
      %v896 = vpop.permute.xlu0 %895
      %897 = vrot.lane.b32.xlu0 %v502, 28
      %v898 = vpop.permute.xlu0 %897
      %899 = vrot.lane.b32.xlu0 %v514, 28
      %v900 = vpop.permute.xlu0 %899
      %901 = vrot.lane.b32.xlu0 %v526, 28
      %v902 = vpop.permute.xlu0 %901
      %903 = vrot.lane.b32.xlu0 %v538, 28
      %v904 = vpop.permute.xlu0 %903
      %905 = vrot.lane.b32.xlu0 %v550, 28
      %v906 = vpop.permute.xlu0 %905
      %907 = vrot.lane.b32.xlu0 %v562, 28
      %v908 = vpop.permute.xlu0 %907
      %909 = vrot.lane.b32.xlu0 %v574, 28
      %v910 = vpop.permute.xlu0 %909
      %911 = vrot.lane.b32.xlu0 %v586, 28
      %v912 = vpop.permute.xlu0 %911
      %913 = vrot.lane.b32.xlu0 %v598, 28
      %v914 = vpop.permute.xlu0 %913
      %915 = vrot.lane.b32.xlu0 %v786, 28
      %v916 = vpop.permute.xlu0 %915
      %917 = vrot.lane.b32.xlu0 %v418, 28
      %v918 = vpop.permute.xlu0 %917
      %919 = vrot.lane.b32.xlu0 %v670, 32
      %v920 = vpop.permute.xlu0 %919
      %921 = vrot.lane.b32.xlu0 %v673, 32
      %v922 = vpop.permute.xlu0 %921
      %923 = vrot.lane.b32.xlu0 %v676, 32
      %v924 = vpop.permute.xlu0 %923
      %925 = vrot.lane.b32.xlu0 %v679, 32
      %v926 = vpop.permute.xlu0 %925
      %927 = vrot.lane.b32.xlu0 %v682, 32
      %v928 = vpop.permute.xlu0 %927
      %929 = vrot.lane.b32.xlu0 %v685, 32
      %v930 = vpop.permute.xlu0 %929
      %931 = vrot.lane.b32.xlu0 %v688, 32
      %v932 = vpop.permute.xlu0 %931
      %933 = vrot.lane.b32.xlu0 %v691, 32
      %v934 = vpop.permute.xlu0 %933
      %935 = vrot.lane.b32.xlu0 %v694, 32
      %v936 = vpop.permute.xlu0 %935
      %937 = vrot.lane.b32.xlu0 %v697, 32
      %v938 = vpop.permute.xlu0 %937
      %939 = vrot.lane.b32.xlu0 %v700, 32
      %v940 = vpop.permute.xlu0 %939
      %941 = vrot.lane.b32.xlu0 %v703, 32
      %v942 = vpop.permute.xlu0 %941
      %943 = vrot.lane.b32.xlu0 %v706, 32
      %v944 = vpop.permute.xlu0 %943
      %945 = vrot.lane.b32.xlu0 %v709, 32
      %v946 = vpop.permute.xlu0 %945
      %947 = vrot.lane.b32.xlu0 %v822, 32
      %v948 = vpop.permute.xlu0 %947
      %949 = vrot.lane.b32.xlu0 %v664, 32
      %v950 = vpop.permute.xlu0 %949
      %vm951 = vcmask 31744
      %v953 = vsel %vm951, 0, %v600
      %v955 = vsel %vm951, %v378, %v602
      %v957 = vsel %vm951, %v379, %v604
      %v959 = vsel %vm951, %v380, %v606
      %v961 = vsel %vm951, %v381, %v608
      %v963 = vsel %vm951, %v382, %v610
      %v965 = vsel %vm951, %v383, %v612
      %v967 = vsel %vm951, %v384, %v614
      %v969 = vsel %vm951, %v385, %v616
      %v971 = vsel %vm951, %v386, %v618
      %v973 = vsel %vm951, %v387, %v620
      %v975 = vsel %vm951, %v388, %v622
      %v977 = vsel %vm951, %v389, %v624
      %v979 = vsel %vm951, %v390, %v626
      %v981 = vsel %vm951, %v391, %v628
      %v983 = vsel %vm951, %v392, %v630
      %vm984 = vcmask 64512
      %v986 = vsel %vm984, %v953, %v711
      %v988 = vsel %vm984, %v955, %v713
      %v990 = vsel %vm984, %v957, %v715
      %v992 = vsel %vm984, %v959, %v717
      %v994 = vsel %vm984, %v961, %v719
      %v996 = vsel %vm984, %v963, %v721
      %v998 = vsel %vm984, %v965, %v723
      %v1000 = vsel %vm984, %v967, %v725
      %v1002 = vsel %vm984, %v969, %v727
      %v1004 = vsel %vm984, %v971, %v729
      %v1006 = vsel %vm984, %v973, %v731
      %v1008 = vsel %vm984, %v975, %v733
      %v1010 = vsel %vm984, %v977, %v735
      %v1012 = vsel %vm984, %v979, %v737
      %v1014 = vsel %vm984, %v981, %v739
      %v1016 = vsel %vm984, %v983, %v741
      %vm1017 = vcmask 97280
      %v1019 = vsel %vm1017, %v986, %v744
      %v1021 = vsel %vm1017, %v988, %v746
      %v1023 = vsel %vm1017, %v990, %v748
      %v1025 = vsel %vm1017, %v992, %v750
      %v1027 = vsel %vm1017, %v994, %v752
      %v1029 = vsel %vm1017, %v996, %v754
      %v1031 = vsel %vm1017, %v998, %v756
      %v1033 = vsel %vm1017, %v1000, %v758
      %v1035 = vsel %vm1017, %v1002, %v760
      %v1037 = vsel %vm1017, %v1004, %v762
      %v1039 = vsel %vm1017, %v1006, %v764
      %v1041 = vsel %vm1017, %v1008, %v766
      %v1043 = vsel %vm1017, %v1010, %v768
      %v1045 = vsel %vm1017, %v1012, %v770
      %v1047 = vsel %vm1017, %v1014, %v772
      %v1049 = vsel %vm1017, %v1016, %v774
      %vm1050 = vcmask 130048
      %v1052 = vsel %vm1050, %v1019, %v788
      %v1054 = vsel %vm1050, %v1021, %v790
      %v1056 = vsel %vm1050, %v1023, %v792
      %v1058 = vsel %vm1050, %v1025, %v794
      %v1060 = vsel %vm1050, %v1027, %v796
      %v1062 = vsel %vm1050, %v1029, %v798
      %v1064 = vsel %vm1050, %v1031, %v800
      %v1066 = vsel %vm1050, %v1033, %v802
      %v1068 = vsel %vm1050, %v1035, %v804
      %v1070 = vsel %vm1050, %v1037, %v806
      %v1072 = vsel %vm1050, %v1039, %v808
      %v1074 = vsel %vm1050, %v1041, %v810
      %v1076 = vsel %vm1050, %v1043, %v812
      %v1078 = vsel %vm1050, %v1045, %v814
      %v1080 = vsel %vm1050, %v1047, %v816
      %v1082 = vsel %vm1050, %v1049, %v818
      %vm1083 = vcmask 162816
      %v1085 = vsel %vm1083, %v1052, %v824
      %v1087 = vsel %vm1083, %v1054, %v826
      %v1089 = vsel %vm1083, %v1056, %v828
      %v1091 = vsel %vm1083, %v1058, %v830
      %v1093 = vsel %vm1083, %v1060, %v832
      %v1095 = vsel %vm1083, %v1062, %v834
      %v1097 = vsel %vm1083, %v1064, %v836
      %v1099 = vsel %vm1083, %v1066, %v838
      %v1101 = vsel %vm1083, %v1068, %v840
      %v1103 = vsel %vm1083, %v1070, %v842
      %v1105 = vsel %vm1083, %v1072, %v844
      %v1107 = vsel %vm1083, %v1074, %v846
      %v1109 = vsel %vm1083, %v1076, %v848
      %v1111 = vsel %vm1083, %v1078, %v850
      %v1113 = vsel %vm1083, %v1080, %v852
      %v1115 = vsel %vm1083, %v1082, %v854
      %vm1116 = vcmask 195584
      %v1118 = vsel %vm1116, %v1085, %v856
      %v1120 = vsel %vm1116, %v1087, %v858
      %v1122 = vsel %vm1116, %v1089, %v860
      %v1124 = vsel %vm1116, %v1091, %v862
      %v1126 = vsel %vm1116, %v1093, %v864
      %v1128 = vsel %vm1116, %v1095, %v866
      %v1130 = vsel %vm1116, %v1097, %v868
      %v1132 = vsel %vm1116, %v1099, %v870
      %v1134 = vsel %vm1116, %v1101, %v872
      %v1136 = vsel %vm1116, %v1103, %v874
      %v1138 = vsel %vm1116, %v1105, %v876
      %v1140 = vsel %vm1116, %v1107, %v878
      %v1142 = vsel %vm1116, %v1109, %v880
      %v1144 = vsel %vm1116, %v1111, %v882
      %v1146 = vsel %vm1116, %v1113, %v884
      %v1148 = vsel %vm1116, %v1115, %v886
      %vm1149 = vcmask 228352
      %v1151 = vsel %vm1149, %v1118, %v888
      %v1153 = vsel %vm1149, %v1120, %v890
      %v1155 = vsel %vm1149, %v1122, %v892
      %v1157 = vsel %vm1149, %v1124, %v894
      %v1159 = vsel %vm1149, %v1126, %v896
      %v1161 = vsel %vm1149, %v1128, %v898
      %v1163 = vsel %vm1149, %v1130, %v900
      %v1165 = vsel %vm1149, %v1132, %v902
      %v1167 = vsel %vm1149, %v1134, %v904
      %v1169 = vsel %vm1149, %v1136, %v906
      %v1171 = vsel %vm1149, %v1138, %v908
      %v1173 = vsel %vm1149, %v1140, %v910
      %v1175 = vsel %vm1149, %v1142, %v912
      %v1177 = vsel %vm1149, %v1144, %v914
      %v1179 = vsel %vm1149, %v1146, %v916
      %v1181 = vsel %vm1149, %v1148, %v918
      %vm1182 = vcmask 261120
      %v1184 = vsel %vm1182, %v1151, %v920
      %v1186 = vsel %vm1182, %v1153, %v922
      %v1188 = vsel %vm1182, %v1155, %v924
      %v1190 = vsel %vm1182, %v1157, %v926
      %v1192 = vsel %vm1182, %v1159, %v928
      %v1194 = vsel %vm1182, %v1161, %v930
      %v1196 = vsel %vm1182, %v1163, %v932
      %v1198 = vsel %vm1182, %v1165, %v934
      %v1200 = vsel %vm1182, %v1167, %v936
      %v1202 = vsel %vm1182, %v1169, %v938
      %v1204 = vsel %vm1182, %v1171, %v940
      %v1206 = vsel %vm1182, %v1173, %v942
      %v1208 = vsel %vm1182, %v1175, %v944
      %v1210 = vsel %vm1182, %v1177, %v946
      %v1212 = vsel %vm1182, %v1179, %v948
      %v1214 = vsel %vm1182, %v1181, %v950
      %v1215 = vld [vmem:[%s1] sm:$0xf]
      %v1216 = vld [vmem:[%s1 + $0x4] sm:$0xf]
      %v1217 = vld [vmem:[%s1 + $0x8] sm:$0xf]
      %v1218 = vld [vmem:[%s1 + $0xc] sm:$0xf]
      %v1219 = vld [vmem:[%s1 + $0x10] sm:$0x3]
      %v1225 = vunpack.c.l.b16 %v1215
      %v1226 = vunpack.c.l.b16 %v1216
      %v1227 = vunpack.c.l.b16 %v1217
      %v1228 = vunpack.c.l.b16 %v1218
      %v1229 = vunpack.c.l.b16 %v1219
      %v1230 = vpack.c.b16 %v1226, %v1225
      %v1231 = vpack.c.b16 %v1228, %v1227
      %v1232 = vpack.c.b16 %v1229, %v1229
      %vm1235 = vcmask 293888
      %v1236 = vsel %vm1235, %v1184, 0
      %v1238 = vsel %vm1235, %v1186, 0
      %v1240 = vsel %vm1235, %v1188, 0
      %v1242 = vsel %vm1235, %v1190, 0
      %v1244 = vsel %vm1235, %v1192, 0
      %v1246 = vsel %vm1235, %v1194, 0
      %v1248 = vsel %vm1235, %v1196, 0
      %v1250 = vsel %vm1235, %v1198, 0
      %v1252 = vsel %vm1235, %v1200, 0
      %v1254 = vsel %vm1235, %v1202, 0
      %v1256 = vsel %vm1235, %v1204, 0
      %v1258 = vsel %vm1235, %v1206, 0
      %v1260 = vsel %vm1235, %v1208, 0
      %v1262 = vsel %vm1235, %v1210, 0
      %v1264 = vsel %vm1235, %v1212, 0
      %v1266 = vsel %vm1235, %v1214, 0
      %vm1268 = vcmask 1041408
      %v1270 = vsel %vm1268, %v1232, 0
      %1272 = vmatprep.subr.bf16.mxu0 0
      %1273 = vmatpush1.bf16.msra.mxu0 %v1230
      %1274 = vmatprep.subr.bf16.mxu0 0
      %1275 = vmatpush1.bf16.msra.mxu0 %v1231
      %1276 = vmatprep.subr.bf16.mxu0 0
      %1277 = vmatpush1.bf16.msra.mxu0 %v1270
      %1278 = vmatprep.subr.bf16.mxu0 0
      %1279 = vmatpush1.bf16.msra.mxu0 0
      %1280 = vmatprep.subr.bf16.mxu0 0
      %1281 = vmatpush1.bf16.msra.mxu0 0
      %1282 = vmatprep.subr.bf16.mxu0 0
      %1283 = vmatpush1.bf16.msra.mxu0 0
      %1284 = vmatprep.subr.bf16.mxu0 0
      %1285 = vmatpush1.bf16.msra.mxu0 0
      %1286 = vmatprep.subr.bf16.mxu0 0
      %1287 = vmatpush1.bf16.msra.mxu0 0
      %1288 = vmatprep.subr.bf16.mxu0 0
      %1289 = vmatpush1.bf16.msra.mxu0 0
      %1290 = vmatprep.subr.bf16.mxu0 0
      %1291 = vmatpush1.bf16.msra.mxu0 0
      %1292 = vmatprep.subr.bf16.mxu0 0
      %1293 = vmatpush1.bf16.msra.mxu0 0
      %1294 = vmatprep.subr.bf16.mxu0 0
      %1295 = vmatpush1.bf16.msra.mxu0 0
      %1296 = vmatprep.subr.bf16.mxu0 0
      %1297 = vmatpush1.bf16.msra.mxu0 0
      %1298 = vmatprep.subr.bf16.mxu0 0
      %1299 = vmatpush1.bf16.msra.mxu0 0
      %1300 = vmatprep.subr.bf16.mxu0 0
      %1301 = vmatpush1.bf16.msra.mxu0 0
      %1302 = vmatprep.subr.bf16.mxu0 0
      %1303 = vmatpush1.bf16.msra.mxu0 0
      %1304 = vmatprep.mubr.bf16.mxu0 0
      %1305 = vmatmul.mubr.bf16.gmra.mrb[0].mxu0 %v1236
      %v1306 = vpop.f32.mrb[0].mxu0
      %v1307 = vadd.f32 0.0, %v1306
      %v1308 = vpop.f32.mrb[0].mxu0
      %v1309 = vpop.f32.mrb[0].mxu0
      %v1310 = vadd.f32 0.0, %v1309
      %v1311 = vpop.f32.mrb[0].mxu0
      %1312 = vmatprep.mubr.bf16.mxu0 0
      %1313 = vmatmul.mubr.bf16.gmra.mrb[0].mxu0 %v1238
      %v1314 = vpop.f32.mrb[0].mxu0
      %v1315 = vadd.f32 0.0, %v1314
      %v1316 = vpop.f32.mrb[0].mxu0
      %v1317 = vpop.f32.mrb[0].mxu0
      %v1318 = vadd.f32 0.0, %v1317
      %v1319 = vpop.f32.mrb[0].mxu0
      %1320 = vmatprep.mubr.bf16.mxu0 0
      %1321 = vmatmul.mubr.bf16.gmra.mrb[0].mxu0 %v1240
      %v1322 = vpop.f32.mrb[0].mxu0
      %v1323 = vadd.f32 0.0, %v1322
      %v1324 = vpop.f32.mrb[0].mxu0
      %v1325 = vpop.f32.mrb[0].mxu0
      %v1326 = vadd.f32 0.0, %v1325
      %v1327 = vpop.f32.mrb[0].mxu0
      %1328 = vmatprep.mubr.bf16.mxu0 0
      %1329 = vmatmul.mubr.bf16.gmra.mrb[0].mxu0 %v1242
      %v1330 = vpop.f32.mrb[0].mxu0
      %v1331 = vadd.f32 0.0, %v1330
      %v1332 = vpop.f32.mrb[0].mxu0
      %v1333 = vpop.f32.mrb[0].mxu0
      %v1334 = vadd.f32 0.0, %v1333
      %v1335 = vpop.f32.mrb[0].mxu0
      %1336 = vmatprep.mubr.bf16.mxu0 0
      %1337 = vmatmul.mubr.bf16.gmra.mrb[0].mxu0 %v1244
      %v1338 = vpop.f32.mrb[0].mxu0
      %v1339 = vadd.f32 0.0, %v1338
      %v1340 = vpop.f32.mrb[0].mxu0
      %v1341 = vpop.f32.mrb[0].mxu0
      %v1342 = vadd.f32 0.0, %v1341
      %v1343 = vpop.f32.mrb[0].mxu0
      %1344 = vmatprep.mubr.bf16.mxu0 0
      %1345 = vmatmul.mubr.bf16.gmra.mrb[0].mxu0 %v1246
      %v1346 = vpop.f32.mrb[0].mxu0
      %v1347 = vadd.f32 0.0, %v1346
      %v1348 = vpop.f32.mrb[0].mxu0
      %v1349 = vpop.f32.mrb[0].mxu0
      %v1350 = vadd.f32 0.0, %v1349
      %v1351 = vpop.f32.mrb[0].mxu0
      %1352 = vmatprep.mubr.bf16.mxu0 0
      %1353 = vmatmul.mubr.bf16.gmra.mrb[0].mxu0 %v1248
      %v1354 = vpop.f32.mrb[0].mxu0
      %v1355 = vadd.f32 0.0, %v1354
      %v1356 = vpop.f32.mrb[0].mxu0
      %v1357 = vpop.f32.mrb[0].mxu0
      %v1358 = vadd.f32 0.0, %v1357
      %v1359 = vpop.f32.mrb[0].mxu0
      %1360 = vmatprep.mubr.bf16.mxu0 0
      %1361 = vmatmul.mubr.bf16.gmra.mrb[0].mxu0 %v1250
      %v1362 = vpop.f32.mrb[0].mxu0
      %v1363 = vadd.f32 0.0, %v1362
      %v1364 = vpop.f32.mrb[0].mxu0
      %v1365 = vpop.f32.mrb[0].mxu0
      %v1366 = vadd.f32 0.0, %v1365
      %v1367 = vpop.f32.mrb[0].mxu0
      %1368 = vmatprep.mubr.bf16.mxu0 0
      %1369 = vmatmul.mubr.bf16.gmra.mrb[0].mxu0 %v1252
      %v1370 = vpop.f32.mrb[0].mxu0
      %v1371 = vadd.f32 0.0, %v1370
      %v1372 = vpop.f32.mrb[0].mxu0
      %v1373 = vpop.f32.mrb[0].mxu0
      %v1374 = vadd.f32 0.0, %v1373
      %v1375 = vpop.f32.mrb[0].mxu0
      %1376 = vmatprep.mubr.bf16.mxu0 0
      %1377 = vmatmul.mubr.bf16.gmra.mrb[0].mxu0 %v1254
      %v1378 = vpop.f32.mrb[0].mxu0
      %v1379 = vadd.f32 0.0, %v1378
      %v1380 = vpop.f32.mrb[0].mxu0
      %v1381 = vpop.f32.mrb[0].mxu0
      %v1382 = vadd.f32 0.0, %v1381
      %v1383 = vpop.f32.mrb[0].mxu0
      %1384 = vmatprep.mubr.bf16.mxu0 0
      %1385 = vmatmul.mubr.bf16.gmra.mrb[0].mxu0 %v1256
      %v1386 = vpop.f32.mrb[0].mxu0
      %v1387 = vadd.f32 0.0, %v1386
      %v1388 = vpop.f32.mrb[0].mxu0
      %v1389 = vpop.f32.mrb[0].mxu0
      %v1390 = vadd.f32 0.0, %v1389
      %v1391 = vpop.f32.mrb[0].mxu0
      %1392 = vmatprep.mubr.bf16.mxu0 0
      %1393 = vmatmul.mubr.bf16.gmra.mrb[0].mxu0 %v1258
      %v1394 = vpop.f32.mrb[0].mxu0
      %v1395 = vadd.f32 0.0, %v1394
      %v1396 = vpop.f32.mrb[0].mxu0
      %v1397 = vpop.f32.mrb[0].mxu0
      %v1398 = vadd.f32 0.0, %v1397
      %v1399 = vpop.f32.mrb[0].mxu0
      %1400 = vmatprep.mubr.bf16.mxu0 0
      %1401 = vmatmul.mubr.bf16.gmra.mrb[0].mxu0 %v1260
      %v1402 = vpop.f32.mrb[0].mxu0
      %v1403 = vadd.f32 0.0, %v1402
      %v1404 = vpop.f32.mrb[0].mxu0
      %v1405 = vpop.f32.mrb[0].mxu0
      %v1406 = vadd.f32 0.0, %v1405
      %v1407 = vpop.f32.mrb[0].mxu0
      %1408 = vmatprep.mubr.bf16.mxu0 0
      %1409 = vmatmul.mubr.bf16.gmra.mrb[0].mxu0 %v1262
      %v1410 = vpop.f32.mrb[0].mxu0
      %v1411 = vadd.f32 0.0, %v1410
      %v1412 = vpop.f32.mrb[0].mxu0
      %v1413 = vpop.f32.mrb[0].mxu0
      %v1414 = vadd.f32 0.0, %v1413
      %v1415 = vpop.f32.mrb[0].mxu0
      %1416 = vmatprep.mubr.bf16.mxu0 0
      %1417 = vmatmul.mubr.bf16.gmra.mrb[0].mxu0 %v1264
      %v1418 = vpop.f32.mrb[0].mxu0
      %v1419 = vadd.f32 0.0, %v1418
      %v1420 = vpop.f32.mrb[0].mxu0
      %v1421 = vpop.f32.mrb[0].mxu0
      %v1422 = vadd.f32 0.0, %v1421
      %v1423 = vpop.f32.mrb[0].mxu0
      %1424 = vmatprep.mubr.bf16.mxu0 0
      %1425 = vmatmul.mubr.bf16.gmra.mrb[0].mxu0 %v1266
      %v1426 = vpop.f32.mrb[0].mxu0
      %v1427 = vadd.f32 0.0, %v1426
      %v1428 = vpop.f32.mrb[0].mxu0
      %v1429 = vpop.f32.mrb[0].mxu0
      %v1430 = vadd.f32 0.0, %v1429
      %v1431 = vpop.f32.mrb[0].mxu0
      %1432 = vdwg.mxu0
      %v1433 = vpack.c.bf16 %v1310, %v1307
      %v1434 = vpack.c.bf16 %v1318, %v1315
      %v1435 = vpack.c.bf16 %v1326, %v1323
      %v1436 = vpack.c.bf16 %v1334, %v1331
      %v1437 = vpack.c.bf16 %v1342, %v1339
      %v1438 = vpack.c.bf16 %v1350, %v1347
      %v1439 = vpack.c.bf16 %v1358, %v1355
      %v1440 = vpack.c.bf16 %v1366, %v1363
      %v1441 = vpack.c.bf16 %v1374, %v1371
      %v1442 = vpack.c.bf16 %v1382, %v1379
      %v1443 = vpack.c.bf16 %v1390, %v1387
      %v1444 = vpack.c.bf16 %v1398, %v1395
      %v1445 = vpack.c.bf16 %v1406, %v1403
      %v1446 = vpack.c.bf16 %v1414, %v1411
      %v1447 = vpack.c.bf16 %v1422, %v1419
      %v1448 = vpack.c.bf16 %v1430, %v1427
      %v1465 = vunpack.c.l.b16 %v1433
      %v1466 = vunpack.c.h.b16 %v1433
      %v1467 = vunpack.c.l.b16 %v1434
      %v1468 = vunpack.c.h.b16 %v1434
      %v1469 = vunpack.c.l.b16 %v1435
      %v1470 = vunpack.c.h.b16 %v1435
      %v1471 = vunpack.c.l.b16 %v1436
      %v1472 = vunpack.c.h.b16 %v1436
      %v1473 = vunpack.c.l.b16 %v1437
      %v1474 = vunpack.c.h.b16 %v1437
      %v1475 = vunpack.c.l.b16 %v1438
      %v1476 = vunpack.c.h.b16 %v1438
      %v1477 = vunpack.c.l.b16 %v1439
      %v1478 = vunpack.c.h.b16 %v1439
      %v1479 = vunpack.c.l.b16 %v1440
      %v1480 = vunpack.c.h.b16 %v1440
      %v1481 = vunpack.c.l.b16 %v1441
      %v1482 = vunpack.c.h.b16 %v1441
      %v1483 = vunpack.c.l.b16 %v1442
      %v1484 = vunpack.c.h.b16 %v1442
      %v1485 = vunpack.c.l.b16 %v1443
      %v1486 = vunpack.c.h.b16 %v1443
      %v1487 = vunpack.c.l.b16 %v1444
      %v1488 = vunpack.c.h.b16 %v1444
      %v1489 = vunpack.c.l.b16 %v1445
      %v1490 = vunpack.c.h.b16 %v1445
      %v1491 = vunpack.c.l.b16 %v1446
      %v1492 = vunpack.c.h.b16 %v1446
      %v1493 = vunpack.c.l.b16 %v1447
      %v1494 = vunpack.c.h.b16 %v1447
      %v1495 = vunpack.c.l.b16 %v1448
      %v1496 = vunpack.c.h.b16 %v1448
      %v1497 = vpack.c.b16 %v1465, %v1465
      %v1498 = vpack.c.b16 %v1466, %v1466
      %v1499 = vpack.c.b16 %v1467, %v1467
      %v1500 = vpack.c.b16 %v1468, %v1468
      %v1501 = vpack.c.b16 %v1469, %v1469
      %v1502 = vpack.c.b16 %v1470, %v1470
      %v1503 = vpack.c.b16 %v1471, %v1471
      %v1504 = vpack.c.b16 %v1472, %v1472
      %v1505 = vpack.c.b16 %v1473, %v1473
      %v1506 = vpack.c.b16 %v1474, %v1474
      %v1507 = vpack.c.b16 %v1475, %v1475
      %v1508 = vpack.c.b16 %v1476, %v1476
      %v1509 = vpack.c.b16 %v1477, %v1477
      %v1510 = vpack.c.b16 %v1478, %v1478
      %v1511 = vpack.c.b16 %v1479, %v1479
      %v1512 = vpack.c.b16 %v1480, %v1480
      %v1513 = vpack.c.b16 %v1481, %v1481
      %v1514 = vpack.c.b16 %v1482, %v1482
      %v1515 = vpack.c.b16 %v1483, %v1483
      %v1516 = vpack.c.b16 %v1484, %v1484
      %v1517 = vpack.c.b16 %v1485, %v1485
      %v1518 = vpack.c.b16 %v1486, %v1486
      %v1519 = vpack.c.b16 %v1487, %v1487
      %v1520 = vpack.c.b16 %v1488, %v1488
      %v1521 = vpack.c.b16 %v1489, %v1489
      %v1522 = vpack.c.b16 %v1490, %v1490
      %v1523 = vpack.c.b16 %v1491, %v1491
      %v1524 = vpack.c.b16 %v1492, %v1492
      %v1525 = vpack.c.b16 %v1493, %v1493
      %v1526 = vpack.c.b16 %v1494, %v1494
      %v1527 = vpack.c.b16 %v1495, %v1495
      %v1528 = vpack.c.b16 %v1496, %v1496
      %vm1561 = vcmask 27648
      %1562 = vst.msk [vmem:[%s177] sm:$0xf] %vm1561, %v1497
      %1563 = vst.msk [vmem:[%s177 + $0x4] sm:$0xf] %vm1561, %v1498
      %1564 = vst.msk [vmem:[%s177 + $0x8] sm:$0xf] %vm1561, %v1499
      %1565 = vst.msk [vmem:[%s177 + $0xc] sm:$0xf] %vm1561, %v1500
      %1566 = vst.msk [vmem:[%s177 + $0x10] sm:$0xf] %vm1561, %v1501
      %1567 = vst.msk [vmem:[%s177 + $0x14] sm:$0xf] %vm1561, %v1502
      %1568 = vst.msk [vmem:[%s177 + $0x18] sm:$0xf] %vm1561, %v1503
      %1569 = vst.msk [vmem:[%s177 + $0x1c] sm:$0xf] %vm1561, %v1504
      %1570 = vst.msk [vmem:[%s177 + $0x20] sm:$0xf] %vm1561, %v1505
      %1571 = vst.msk [vmem:[%s177 + $0x24] sm:$0xf] %vm1561, %v1506
      %1572 = vst.msk [vmem:[%s177 + $0x28] sm:$0xf] %vm1561, %v1507
      %1573 = vst.msk [vmem:[%s177 + $0x2c] sm:$0xf] %vm1561, %v1508
      %1574 = vst.msk [vmem:[%s177 + $0x30] sm:$0xf] %vm1561, %v1509
      %1575 = vst.msk [vmem:[%s177 + $0x34] sm:$0xf] %vm1561, %v1510
      %1576 = vst.msk [vmem:[%s177 + $0x38] sm:$0xf] %vm1561, %v1511
      %1577 = vst.msk [vmem:[%s177 + $0x3c] sm:$0xf] %vm1561, %v1512
      %1578 = vst.msk [vmem:[%s177 + $0x40] sm:$0xf] %vm1561, %v1513
      %1579 = vst.msk [vmem:[%s177 + $0x44] sm:$0xf] %vm1561, %v1514
      %1580 = vst.msk [vmem:[%s177 + $0x48] sm:$0xf] %vm1561, %v1515
      %1581 = vst.msk [vmem:[%s177 + $0x4c] sm:$0xf] %vm1561, %v1516
      %1582 = vst.msk [vmem:[%s177 + $0x50] sm:$0xf] %vm1561, %v1517
      %1583 = vst.msk [vmem:[%s177 + $0x54] sm:$0xf] %vm1561, %v1518
      %1584 = vst.msk [vmem:[%s177 + $0x58] sm:$0xf] %vm1561, %v1519
      %1585 = vst.msk [vmem:[%s177 + $0x5c] sm:$0xf] %vm1561, %v1520
      %1586 = vst.msk [vmem:[%s177 + $0x60] sm:$0xf] %vm1561, %v1521
      %1587 = vst.msk [vmem:[%s177 + $0x64] sm:$0xf] %vm1561, %v1522
      %1588 = vst.msk [vmem:[%s177 + $0x68] sm:$0xf] %vm1561, %v1523
      %1589 = vst.msk [vmem:[%s177 + $0x6c] sm:$0xf] %vm1561, %v1524
      %1590 = vst.msk [vmem:[%s177 + $0x70] sm:$0xf] %vm1561, %v1525
      %1591 = vst.msk [vmem:[%s177 + $0x74] sm:$0xf] %vm1561, %v1526
      %1592 = vst.msk [vmem:[%s177 + $0x78] sm:$0xf] %vm1561, %v1527
      %1593 = vst.msk [vmem:[%s177 + $0x7c] sm:$0xf] %vm1561, %v1528
      %1594 = vmatprep.subr.mxu0 0.0
      %1595 = vmatpush1.msra.mxu0 %v1307
      %1596 = vmatprep.subr.mxu0 0.0
      %1597 = vmatpush1.msra.mxu0 %v1310
      %1598 = vmatprep.subr.mxu0 0.0
      %1599 = vmatpush1.msra.mxu0 %v1315
      %1600 = vmatprep.subr.mxu0 0.0
      %1601 = vmatpush1.msra.mxu0 %v1318
      %1602 = vmatprep.subr.mxu0 0.0
      %1603 = vmatpush1.msra.mxu0 %v1323
      %1604 = vmatprep.subr.mxu0 0.0
      %1605 = vmatpush1.msra.mxu0 %v1326
      %1606 = vmatprep.subr.mxu0 0.0
      %1607 = vmatpush1.msra.mxu0 %v1331
      %1608 = vmatprep.subr.mxu0 0.0
      %1609 = vmatpush1.msra.mxu0 %v1334
      %1610 = vmatprep.subr.mxu0 0.0
      %1611 = vmatpush1.msra.mxu0 %v1339
      %1612 = vmatprep.subr.mxu0 0.0
      %1613 = vmatpush1.msra.mxu0 %v1342
      %1614 = vmatprep.subr.mxu0 0.0
      %1615 = vmatpush1.msra.mxu0 %v1347
      %1616 = vmatprep.subr.mxu0 0.0
      %1617 = vmatpush1.msra.mxu0 %v1350
      %1618 = vmatprep.subr.mxu0 0.0
      %1619 = vmatpush1.msra.mxu0 %v1355
      %1620 = vmatprep.subr.mxu0 0.0
      %1621 = vmatpush1.msra.mxu0 %v1358
      %1622 = vmatprep.subr.mxu0 0.0
      %1623 = vmatpush1.msra.mxu0 %v1363
      %1624 = vmatprep.subr.mxu0 0.0
      %1625 = vmatpush1.msra.mxu0 %v1366
      %1626 = vmatprep.subr.mxu0 0.0
      %1627 = vmatpush1.msra.mxu0 %v1371
      %1628 = vmatprep.subr.mxu0 0.0
      %1629 = vmatpush1.msra.mxu0 %v1374
      %1630 = vmatprep.subr.mxu0 0.0
      %1631 = vmatpush1.msra.mxu0 %v1379
      %1632 = vmatprep.subr.mxu0 0.0
      %1633 = vmatpush1.msra.mxu0 %v1382
      %1634 = vmatprep.subr.mxu0 0.0
      %1635 = vmatpush1.msra.mxu0 %v1387
      %1636 = vmatprep.subr.mxu0 0.0
      %1637 = vmatpush1.msra.mxu0 %v1390
      %1638 = vmatprep.subr.mxu0 0.0
      %1639 = vmatpush1.msra.mxu0 %v1395
      %1640 = vmatprep.subr.mxu0 0.0
      %1641 = vmatpush1.msra.mxu0 %v1398
      %1642 = vmatprep.subr.mxu0 0.0
      %1643 = vmatpush1.msra.mxu0 %v1403
      %1644 = vmatprep.subr.mxu0 0.0
      %1645 = vmatpush1.msra.mxu0 %v1406
      %1646 = vmatprep.subr.mxu0 0.0
      %1647 = vmatpush1.msra.mxu0 %v1411
      %1648 = vmatprep.subr.mxu0 0.0
      %1649 = vmatpush1.msra.mxu0 %v1414
      %1650 = vmatprep.subr.mxu0 0.0
      %1651 = vmatpush1.msra.mxu0 %v1419
      %1652 = vmatprep.subr.mxu0 0.0
      %1653 = vmatpush1.msra.mxu0 %v1422
      %1654 = vmatprep.subr.mxu0 0.0
      %1655 = vmatpush1.msra.mxu0 %v1427
      %1656 = vmatprep.subr.mxu0 0.0
      %1657 = vmatpush1.msra.mxu0 %v1430
      %1658 = vmatprep.mubr.f32.mxu0 1.0
      %1659 = vmatmul.mubr.f32.gmra.mrb[0].mxu0 1.0
      %v1660 = vpop.f32.mrb[0].mxu0
      %v1661 = vadd.f32 0.0, %v1660
      %v1662 = vpop.f32.mrb[0].mxu0
      %1663 = vdwg.mxu0
      %v1664 = vrcp.pop 256.0
      %v1665 = vmul.f32 %v1661, %v1664
      %v1666 = vlaneseq
      %v1667 = vshrl.u32 %v1666, 7
      %v1668 = vsub.s32 0, %v1667
      %v1669 = vrot.slane %v1665, %v1668
      %v1670 = vsub.f32 %v1307, %v1669
      %v1671 = vsub.f32 %v1310, %v1669
      %v1672 = vsub.f32 %v1315, %v1669
      %v1673 = vsub.f32 %v1318, %v1669
      %v1674 = vsub.f32 %v1323, %v1669
      %v1675 = vsub.f32 %v1326, %v1669
      %v1676 = vsub.f32 %v1331, %v1669
      %v1677 = vsub.f32 %v1334, %v1669
      %v1678 = vsub.f32 %v1339, %v1669
      %v1679 = vsub.f32 %v1342, %v1669
      %v1680 = vsub.f32 %v1347, %v1669
      %v1681 = vsub.f32 %v1350, %v1669
      %v1682 = vsub.f32 %v1355, %v1669
      %v1683 = vsub.f32 %v1358, %v1669
      %v1684 = vsub.f32 %v1363, %v1669
      %v1685 = vsub.f32 %v1366, %v1669
      %v1686 = vsub.f32 %v1371, %v1669
      %v1687 = vsub.f32 %v1374, %v1669
      %v1688 = vsub.f32 %v1379, %v1669
      %v1689 = vsub.f32 %v1382, %v1669
      %v1690 = vsub.f32 %v1387, %v1669
      %v1691 = vsub.f32 %v1390, %v1669
      %v1692 = vsub.f32 %v1395, %v1669
      %v1693 = vsub.f32 %v1398, %v1669
      %v1694 = vsub.f32 %v1403, %v1669
      %v1695 = vsub.f32 %v1406, %v1669
      %v1696 = vsub.f32 %v1411, %v1669
      %v1697 = vsub.f32 %v1414, %v1669
      %v1698 = vsub.f32 %v1419, %v1669
      %v1699 = vsub.f32 %v1422, %v1669
      %v1700 = vsub.f32 %v1427, %v1669
      %v1701 = vsub.f32 %v1430, %v1669
      %v1702 = vmul.f32 %v1670, %v1670
      %v1703 = vmul.f32 %v1671, %v1671
      %v1704 = vmul.f32 %v1672, %v1672
      %v1705 = vmul.f32 %v1673, %v1673
      %v1706 = vmul.f32 %v1674, %v1674
      %v1707 = vmul.f32 %v1675, %v1675
      %v1708 = vmul.f32 %v1676, %v1676
      %v1709 = vmul.f32 %v1677, %v1677
      %v1710 = vmul.f32 %v1678, %v1678
      %v1711 = vmul.f32 %v1679, %v1679
      %v1712 = vmul.f32 %v1680, %v1680
      %v1713 = vmul.f32 %v1681, %v1681
      %v1714 = vmul.f32 %v1682, %v1682
      %v1715 = vmul.f32 %v1683, %v1683
      %v1716 = vmul.f32 %v1684, %v1684
      %v1717 = vmul.f32 %v1685, %v1685
      %v1718 = vmul.f32 %v1686, %v1686
      %v1719 = vmul.f32 %v1687, %v1687
      %v1720 = vmul.f32 %v1688, %v1688
      %v1721 = vmul.f32 %v1689, %v1689
      %v1722 = vmul.f32 %v1690, %v1690
      %v1723 = vmul.f32 %v1691, %v1691
      %v1724 = vmul.f32 %v1692, %v1692
      %v1725 = vmul.f32 %v1693, %v1693
      %v1726 = vmul.f32 %v1694, %v1694
      %v1727 = vmul.f32 %v1695, %v1695
      %v1728 = vmul.f32 %v1696, %v1696
      %v1729 = vmul.f32 %v1697, %v1697
      %v1730 = vmul.f32 %v1698, %v1698
      %v1731 = vmul.f32 %v1699, %v1699
      %v1732 = vmul.f32 %v1700, %v1700
      %v1733 = vmul.f32 %v1701, %v1701
      %1734 = vmatprep.subr.mxu0 0.0
      %1735 = vmatpush1.msra.mxu0 %v1702
      %1736 = vmatprep.subr.mxu0 0.0
      %1737 = vmatpush1.msra.mxu0 %v1703
      %1738 = vmatprep.subr.mxu0 0.0
      %1739 = vmatpush1.msra.mxu0 %v1704
      %1740 = vmatprep.subr.mxu0 0.0
      %1741 = vmatpush1.msra.mxu0 %v1705
      %1742 = vmatprep.subr.mxu0 0.0
      %1743 = vmatpush1.msra.mxu0 %v1706
      %1744 = vmatprep.subr.mxu0 0.0
      %1745 = vmatpush1.msra.mxu0 %v1707
      %1746 = vmatprep.subr.mxu0 0.0
      %1747 = vmatpush1.msra.mxu0 %v1708
      %1748 = vmatprep.subr.mxu0 0.0
      %1749 = vmatpush1.msra.mxu0 %v1709
      %1750 = vmatprep.subr.mxu0 0.0
      %1751 = vmatpush1.msra.mxu0 %v1710
      %1752 = vmatprep.subr.mxu0 0.0
      %1753 = vmatpush1.msra.mxu0 %v1711
      %1754 = vmatprep.subr.mxu0 0.0
      %1755 = vmatpush1.msra.mxu0 %v1712
      %1756 = vmatprep.subr.mxu0 0.0
      %1757 = vmatpush1.msra.mxu0 %v1713
      %1758 = vmatprep.subr.mxu0 0.0
      %1759 = vmatpush1.msra.mxu0 %v1714
      %1760 = vmatprep.subr.mxu0 0.0
      %1761 = vmatpush1.msra.mxu0 %v1715
      %1762 = vmatprep.subr.mxu0 0.0
      %1763 = vmatpush1.msra.mxu0 %v1716
      %1764 = vmatprep.subr.mxu0 0.0
      %1765 = vmatpush1.msra.mxu0 %v1717
      %1766 = vmatprep.subr.mxu0 0.0
      %1767 = vmatpush1.msra.mxu0 %v1718
      %1768 = vmatprep.subr.mxu0 0.0
      %1769 = vmatpush1.msra.mxu0 %v1719
      %1770 = vmatprep.subr.mxu0 0.0
      %1771 = vmatpush1.msra.mxu0 %v1720
      %1772 = vmatprep.subr.mxu0 0.0
      %1773 = vmatpush1.msra.mxu0 %v1721
      %1774 = vmatprep.subr.mxu0 0.0
      %1775 = vmatpush1.msra.mxu0 %v1722
      %1776 = vmatprep.subr.mxu0 0.0
      %1777 = vmatpush1.msra.mxu0 %v1723
      %1778 = vmatprep.subr.mxu0 0.0
      %1779 = vmatpush1.msra.mxu0 %v1724
      %1780 = vmatprep.subr.mxu0 0.0
      %1781 = vmatpush1.msra.mxu0 %v1725
      %1782 = vmatprep.subr.mxu0 0.0
      %1783 = vmatpush1.msra.mxu0 %v1726
      %1784 = vmatprep.subr.mxu0 0.0
      %1785 = vmatpush1.msra.mxu0 %v1727
      %1786 = vmatprep.subr.mxu0 0.0
      %1787 = vmatpush1.msra.mxu0 %v1728
      %1788 = vmatprep.subr.mxu0 0.0
      %1789 = vmatpush1.msra.mxu0 %v1729
      %1790 = vmatprep.subr.mxu0 0.0
      %1791 = vmatpush1.msra.mxu0 %v1730
      %1792 = vmatprep.subr.mxu0 0.0
      %1793 = vmatpush1.msra.mxu0 %v1731
      %1794 = vmatprep.subr.mxu0 0.0
      %1795 = vmatpush1.msra.mxu0 %v1732
      %1796 = vmatprep.subr.mxu0 0.0
      %1797 = vmatpush1.msra.mxu0 %v1733
      %1798 = vmatprep.mubr.f32.mxu0 1.0
      %1799 = vmatmul.mubr.f32.gmra.mrb[0].mxu0 1.0
      %v1800 = vpop.f32.mrb[0].mxu0
      %v1801 = vadd.f32 0.0, %v1800
      %v1802 = vpop.f32.mrb[0].mxu0
      %1803 = vdwg.mxu0
      %v1805 = vrot.slane %v1801, 7
      %vm1807 = vcmask 1040384
      %v1808 = vsel %vm1807, %v1665, %v1805
      %vm1809 = vcmask 25600
      %1810 = vst.msk [vmem:[%s181] sm:$0x3] %vm1809, %v1808
      %p1811 = scmp.lt.s32.totalorder %s15, 1
      %s1812 = scalar_select %p1811, %s15, 1
      %s1813 = smul.addr %s1812, 32
      %s1814 = smul.addr %s1813, 4
      %s1815 = scalar_lea.vmem %s2, %s1814
      %p1816 = scmp.lt.s32.totalorder %s15, 1
      %s1817 = scalar_select %p1816, %s15, 1
      %s1818 = smul.addr %s1817, 2
      %s1819 = scalar_lea.vmem %s3, %s1818
      // Predicated region
      $region29: #{basic_block_forward.3} parent=27 // pred_check
        %p1820 = pneg %p80
      $region30: #{basic_block_forward.3} parent=27 // pred_check_branch
        %1822 = sbr.rel (%p1820) target = $region32
      $region31: #{basic_block_forward.3} parent=27 // pred_region
        _
      $region32: #{basic_block_forward.3} parent=27 // pred_fallthru
        _
      // Predicated region
      $region33: #{basic_block_forward.3} parent=27 // pred_check
        %p1823 = pneg %p106
      $region34: #{basic_block_forward.3} parent=27 // pred_check_branch
        %1825 = sbr.rel (%p1823) target = $region36
      $region35: #{basic_block_forward.3} parent=27 // pred_region
        _
      $region36: #{basic_block_forward.3} parent=27 // pred_fallthru
        _
    $region28: #{basic_block_forward.3} parent=5 // pred_fallthru
      _
    %p1826 = scmp.le.s32.totalorder 2, %s10
    // Predicated region
    $region37: #{basic_block_forward.3} parent=5 // pred_check
      %p1827 = pneg %p1826
    $region38: #{basic_block_forward.3} parent=5 // pred_check_branch
      %1829 = sbr.rel (%p1827) target = $region40
    $region39: #{basic_block_forward.3} parent=5 // pred_region
      %s1830 = ssub.s32 %s10, 2
      // Predicated region
      $region41: #{basic_block_forward.3} parent=39 // pred_check
        %p1831 = pneg %p86
      $region42: #{basic_block_forward.3} parent=39 // pred_check_branch
        %1833 = sbr.rel (%p1831) target = $region44
      $region43: #{basic_block_forward.3} parent=39 // pred_region
        %p1834 = scmp.lt.s32.totalorder %s16, 1
        %s1835 = scalar_select %p1834, %s16, 1
        %s1836 = smul.addr %s1835, 32
        %s1837 = smul.addr %s1836, 4
        %s1838 = scalar_lea.vmem %s2, %s1837
      $region44: #{basic_block_forward.3} parent=39 // pred_fallthru
        _
      // Predicated region
      $region45: #{basic_block_forward.3} parent=39 // pred_check
        %p1839 = pneg %p112
      $region46: #{basic_block_forward.3} parent=39 // pred_check_branch
        %1841 = sbr.rel (%p1839) target = $region48
      $region47: #{basic_block_forward.3} parent=39 // pred_region
        %p1842 = scmp.lt.s32.totalorder %s16, 1
        %s1843 = scalar_select %p1842, %s16, 1
        %s1844 = smul.addr %s1843, 2
        %s1845 = scalar_lea.vmem %s3, %s1844
      $region48: #{basic_block_forward.3} parent=39 // pred_fallthru
        _
    $region40: #{basic_block_forward.3} parent=5 // pred_fallthru
      _
  $region6: #{basic_block_forward.3} parent=0 // loop_footer
    %s14 = sadd.s32 1, %s10
  $region7: #{basic_block_forward.3} parent=0 // loop_footer_branch
    %9 = sbr.rel target = $region3
  $region8: #{basic_block_forward.3} parent=0 // loop_exit
    _

// kernel: basic_block_forward.4
$region0: #{basic_block_forward.4}
  #allocation0 [shape = 'u32[]', space=smem, size = 0x4, offset = 0x4, fixed_abs, tag = 'smem constant byte address 0x4 - core index']
  #allocation1 [shape = 'u32[144,128]{1,0:T(1,128)}', space=vmem, size = 0x12000, scoped, tag = 'internal scratch']
  %s0 = inlined_call_operand.vmem [shape: bf16[2,16,16,4], index: 0, kind: input, shape index: {}]
  %s1 = inlined_call_operand.vmem [shape: bf16[36,4], index: 1, kind: input, shape index: {}]
  %s2 = inlined_call_operand.vmem [shape: f32[1,4], index: 2, kind: input, shape index: {}]
  %s3 = inlined_call_operand.vmem [shape: f32[1,4], index: 3, kind: input, shape index: {}]
  %s4 = inlined_call_operand.vmem [shape: bf16[2,256,4], index: 4, kind: output, shape index: {0}]
  %s5 = inlined_call_operand.vmem [shape: f32[2,2,4], index: 5, kind: output, shape index: {1}]
  %6 = xla_tuple %s4, %s5
  %s7 = sld [smem:[#allocation0]]
  $region57: #{basic_block_forward.4} parent=0
    _
  %s9 = ssub.s32 1, %s7
  %s10 = scalar_select 0, %s9, %s7
  loop: start=0, step=1, limit=4
  $region2: #{basic_block_forward.4} parent=0 // loop_pre_header
    _
  $region3: #{basic_block_forward.4} parent=0 // loop_header
    %s12 = sphi 0, %s16
    %p13 = scmp.ge.s32.totalorder %s12, 4
    %s22 = sphi 0, %s24
    %s25 = sphi 0, %s22
    %s26 = sphi 0, %s25
    %s42 = sphi 0, %s26
    %s46 = sphi 0, %s46
    %s48 = sphi 0, %s46
    %s49 = sphi 0, %s48
    %s63 = sphi 0, %s49
    %s67 = sphi 0, %s67
    %s69 = sphi 0, %s67
    %s70 = sphi 0, %s69
    %s84 = sphi 0, %s70
    %s88 = sphi 0, %s88
    %s90 = sphi 0, %s88
    %s91 = sphi 0, %s90
    %s105 = sphi 0, %s91
    %s111 = sphi 0, %s113
    %s114 = sphi 0, %s111
    %s115 = sphi 0, %s114
    %s131 = sphi 0, %s115
    %s137 = sphi 0, %s139
    %s140 = sphi 0, %s137
    %s141 = sphi 0, %s140
    %s157 = sphi 0, %s141
  $region4: #{basic_block_forward.4} parent=0 // loop_header_branch
    %15 = sbr.rel (%p13) target = $region8
  $region5: #{basic_block_forward.4} parent=0 // loop_body
    %s17 = ssub.s32 %s12, 1
    %s18 = ssub.s32 %s12, 2
    %s19 = sadd.s32 %s12, 1
    %s20 = ssub.s32 %s12, %s19
    %p21 = scmp.eq.s32.totalorder %s20, 0
    %s23 = sadd.s32 %s22, 1
    %s24 = scalar_select %p21, %s22, %s23
    %p27 = pneg %p21
    %p28 = scmp.eq.s32.totalorder %s12, 1
    %p29 = por %p27, %p28
    %p30 = scmp.ne.s32.totalorder %s22, %s25
    %p31 = scmp.eq.s32.totalorder %s12, 0
    %p32 = por %p30, %p31
    %p33 = scmp.ne.s32.totalorder %s22, %s25
    %p34 = scmp.eq.s32.totalorder %s17, 1
    %p35 = por %p33, %p34
    %p36 = scmp.ne.s32.totalorder %s25, %s26
    %p37 = scmp.eq.s32.totalorder %s17, 0
    %p38 = por %p36, %p37
    %p39 = scmp.ne.s32.totalorder %s25, %s26
    %p40 = scmp.eq.s32.totalorder %s18, 1
    %p41 = por %p39, %p40
    %p43 = scmp.ne.s32.totalorder %s26, %s42
    %p44 = scmp.eq.s32.totalorder %s18, 0
    %p45 = por %p43, %p44
    %s47 = sadd.s32 %s46, 1
    %p50 = scmp.eq.s32.totalorder %s12, 1
    %p51 = scmp.ne.s32.totalorder %s46, %s48
    %p52 = scmp.eq.s32.totalorder %s12, 0
    %p53 = por %p51, %p52
    %p54 = scmp.ne.s32.totalorder %s46, %s48
    %p55 = scmp.eq.s32.totalorder %s17, 1
    %p56 = por %p54, %p55
    %p57 = scmp.ne.s32.totalorder %s48, %s49
    %p58 = scmp.eq.s32.totalorder %s17, 0
    %p59 = por %p57, %p58
    %p60 = scmp.ne.s32.totalorder %s48, %s49
    %p61 = scmp.eq.s32.totalorder %s18, 1
    %p62 = por %p60, %p61
    %p64 = scmp.ne.s32.totalorder %s49, %s63
    %p65 = scmp.eq.s32.totalorder %s18, 0
    %p66 = por %p64, %p65
    %s68 = sadd.s32 %s67, 1
    %p71 = scmp.eq.s32.totalorder %s12, 1
    %p72 = scmp.ne.s32.totalorder %s67, %s69
    %p73 = scmp.eq.s32.totalorder %s12, 0
    %p74 = por %p72, %p73
    %p75 = scmp.ne.s32.totalorder %s67, %s69
    %p76 = scmp.eq.s32.totalorder %s17, 1
    %p77 = por %p75, %p76
    %p78 = scmp.ne.s32.totalorder %s69, %s70
    %p79 = scmp.eq.s32.totalorder %s17, 0
    %p80 = por %p78, %p79
    %p81 = scmp.ne.s32.totalorder %s69, %s70
    %p82 = scmp.eq.s32.totalorder %s18, 1
    %p83 = por %p81, %p82
    %p85 = scmp.ne.s32.totalorder %s70, %s84
    %p86 = scmp.eq.s32.totalorder %s18, 0
    %p87 = por %p85, %p86
    %s89 = sadd.s32 %s88, 1
    %p92 = scmp.eq.s32.totalorder %s12, 1
    %p93 = scmp.ne.s32.totalorder %s88, %s90
    %p94 = scmp.eq.s32.totalorder %s12, 0
    %p95 = por %p93, %p94
    %p96 = scmp.ne.s32.totalorder %s88, %s90
    %p97 = scmp.eq.s32.totalorder %s17, 1
    %p98 = por %p96, %p97
    %p99 = scmp.ne.s32.totalorder %s90, %s91
    %p100 = scmp.eq.s32.totalorder %s17, 0
    %p101 = por %p99, %p100
    %p102 = scmp.ne.s32.totalorder %s90, %s91
    %p103 = scmp.eq.s32.totalorder %s18, 1
    %p104 = por %p102, %p103
    %p106 = scmp.ne.s32.totalorder %s91, %s105
    %p107 = scmp.eq.s32.totalorder %s18, 0
    %p108 = por %p106, %p107
    %s109 = ssub.s32 %s12, %s19
    %p110 = scmp.eq.s32.totalorder %s109, 0
    %s112 = sadd.s32 %s111, 1
    %s113 = scalar_select %p110, %s111, %s112
    %p116 = pneg %p110
    %p117 = scmp.eq.s32.totalorder %s12, 1
    %p118 = por %p116, %p117
    %p119 = scmp.ne.s32.totalorder %s111, %s114
    %p120 = scmp.eq.s32.totalorder %s12, 0
    %p121 = por %p119, %p120
    %p122 = scmp.ne.s32.totalorder %s111, %s114
    %p123 = scmp.eq.s32.totalorder %s17, 1
    %p124 = por %p122, %p123
    %p125 = scmp.ne.s32.totalorder %s114, %s115
    %p126 = scmp.eq.s32.totalorder %s17, 0
    %p127 = por %p125, %p126
    %p128 = scmp.ne.s32.totalorder %s114, %s115
    %p129 = scmp.eq.s32.totalorder %s18, 1
    %p130 = por %p128, %p129
    %p132 = scmp.ne.s32.totalorder %s115, %s131
    %p133 = scmp.eq.s32.totalorder %s18, 0
    %p134 = por %p132, %p133
    %s135 = ssub.s32 %s12, %s19
    %p136 = scmp.eq.s32.totalorder %s135, 0
    %s138 = sadd.s32 %s137, 1
    %s139 = scalar_select %p136, %s137, %s138
    %p142 = pneg %p136
    %p143 = scmp.eq.s32.totalorder %s12, 1
    %p144 = por %p142, %p143
    %p145 = scmp.ne.s32.totalorder %s137, %s140
    %p146 = scmp.eq.s32.totalorder %s12, 0
    %p147 = por %p145, %p146
    %p148 = scmp.ne.s32.totalorder %s137, %s140
    %p149 = scmp.eq.s32.totalorder %s17, 1
    %p150 = por %p148, %p149
    %p151 = scmp.ne.s32.totalorder %s140, %s141
    %p152 = scmp.eq.s32.totalorder %s17, 0
    %p153 = por %p151, %p152
    %p154 = scmp.ne.s32.totalorder %s140, %s141
    %p155 = scmp.eq.s32.totalorder %s18, 1
    %p156 = por %p154, %p155
    %p158 = scmp.ne.s32.totalorder %s141, %s157
    %p159 = scmp.eq.s32.totalorder %s18, 0
    %p160 = por %p158, %p159
    %p161 = scmp.le.s32.totalorder 1, %s12
    %p162 = scmp.lt.s32.totalorder %s12, 3
    %p163 = pnand %p161, %p162
    %p164 = pneg %p163
    // Predicated region
    $region9: #{basic_block_forward.4} parent=5 // pred_check
      _
    $region10: #{basic_block_forward.4} parent=5 // pred_check_branch
      %166 = sbr.rel (%p163) target = $region12
    $region11: #{basic_block_forward.4} parent=5 // pred_region
      %s167 = ssub.s32 %s12, 1
      // Predicated region
      $region13: #{basic_block_forward.4} parent=11 // pred_check
        %p168 = pneg %p59
      $region14: #{basic_block_forward.4} parent=11 // pred_check_branch
        %170 = sbr.rel (%p168) target = $region16
      $region15: #{basic_block_forward.4} parent=11 // pred_region
        _
      $region16: #{basic_block_forward.4} parent=11 // pred_fallthru
        _
      // Predicated region
      $region17: #{basic_block_forward.4} parent=11 // pred_check
        %p171 = pneg %p80
      $region18: #{basic_block_forward.4} parent=11 // pred_check_branch
        %173 = sbr.rel (%p171) target = $region20
      $region19: #{basic_block_forward.4} parent=11 // pred_region
        _
      $region20: #{basic_block_forward.4} parent=11 // pred_fallthru
        _
      // Predicated region
      $region21: #{basic_block_forward.4} parent=11 // pred_check
        %p174 = pneg %p101
      $region22: #{basic_block_forward.4} parent=11 // pred_check_branch
        %176 = sbr.rel (%p174) target = $region24
      $region23: #{basic_block_forward.4} parent=11 // pred_region
        _
      $region24: #{basic_block_forward.4} parent=11 // pred_fallthru
        _
    $region12: #{basic_block_forward.4} parent=5 // pred_fallthru
      _
    %p177 = scmp.lt.s32.totalorder %s12, 2
    // Predicated region
    $region25: #{basic_block_forward.4} parent=5 // pred_check
      %p178 = pneg %p177
    $region26: #{basic_block_forward.4} parent=5 // pred_check_branch
      %180 = sbr.rel (%p178) target = $region28
    $region27: #{basic_block_forward.4} parent=5 // pred_region
      // Predicated region
      $region29: #{basic_block_forward.4} parent=27 // pred_check
        %p181 = pneg %p32
      $region30: #{basic_block_forward.4} parent=27 // pred_check_branch
        %183 = sbr.rel (%p181) target = $region32
      $region31: #{basic_block_forward.4} parent=27 // pred_region
        %p184 = scmp.lt.s32.totalorder %s12, 1
        %s185 = scalar_select %p184, %s12, 1
        %s186 = smul.addr %s185, 32
        %s187 = smul.addr %s186, 4
        %s188 = scalar_lea.vmem %s0, %s187
      $region32: #{basic_block_forward.4} parent=27 // pred_fallthru
        _
    $region28: #{basic_block_forward.4} parent=5 // pred_fallthru
      _
    %p189 = scmp.le.s32.totalorder 1, %s12
    %p190 = scmp.lt.s32.totalorder %s12, 3
    %p191 = pnand %p189, %p190
    %p192 = pneg %p191
    // Predicated region
    $region33: #{basic_block_forward.4} parent=5 // pred_check
      _
    $region34: #{basic_block_forward.4} parent=5 // pred_check_branch
      %194 = sbr.rel (%p191) target = $region36
    $region35: #{basic_block_forward.4} parent=5 // pred_region
      %s195 = ssub.s32 %s12, 1
      %p196 = scmp.lt.s32.totalorder %s17, 1
      %s197 = scalar_select %p196, %s17, 1
      %s198 = smul.addr %s197, 32
      %s199 = smul.addr %s198, 4
      %s200 = scalar_lea.vmem %s0, %s199
      %p201 = pneg %p38
      %p202 = pneg %p35
      %p203 = pneg %p59
      %p204 = pneg %p56
      %p205 = pneg %p80
      %p206 = pneg %p77
      %p207 = pneg %p101
      %p208 = pneg %p98
      %p209 = pneg %p127
      %p210 = pneg %p124
      %p211 = scmp.lt.s32.totalorder %s17, 1
      %s212 = scalar_select %p211, %s17, 1
      %s213 = smul.addr %s212, 32
      %s214 = smul.addr %s213, 4
      %s215 = scalar_lea.vmem %s4, %s214
      %p216 = pneg %p153
      %p217 = pneg %p150
      %p218 = scmp.lt.s32.totalorder %s17, 1
      %s219 = scalar_select %p218, %s17, 1
      %s220 = smul.addr %s219, 2
      %s221 = scalar_lea.vmem %s5, %s220
      %p222 = scmp.lt.s32.totalorder %s17, 1
      %s223 = scalar_select %p222, %s17, 1
      %s224 = smul.addr %s223, 32
      %s225 = smul.addr %s224, 4
      %s226 = scalar_lea.vmem %s0, %s225
      %p227 = scmp.lt.s32.totalorder %s17, 1
      %s228 = scalar_select %p227, %s17, 1
      %s229 = smul.addr %s228, 32
      %s230 = smul.addr %s229, 4
      %s231 = scalar_lea.vmem %s4, %s230
      %p232 = scmp.lt.s32.totalorder %s17, 1
      %s233 = scalar_select %p232, %s17, 1
      %s234 = smul.addr %s233, 2
      %s235 = scalar_lea.vmem %s5, %s234
      %v237 = vld [vmem:[%s226] sm:$0xf]
      %v238 = vld [vmem:[%s226 + $0x4] sm:$0xf]
      %v239 = vld [vmem:[%s226 + $0x8] sm:$0xf]
      %v240 = vld [vmem:[%s226 + $0xc] sm:$0xf]
      %v241 = vld [vmem:[%s226 + $0x10] sm:$0xf]
      %v242 = vld [vmem:[%s226 + $0x14] sm:$0xf]
      %v243 = vld [vmem:[%s226 + $0x18] sm:$0xf]
      %v244 = vld [vmem:[%s226 + $0x1c] sm:$0xf]
      %v245 = vld [vmem:[%s226 + $0x20] sm:$0xf]
      %v246 = vld [vmem:[%s226 + $0x24] sm:$0xf]
      %v247 = vld [vmem:[%s226 + $0x28] sm:$0xf]
      %v248 = vld [vmem:[%s226 + $0x2c] sm:$0xf]
      %v249 = vld [vmem:[%s226 + $0x30] sm:$0xf]
      %v250 = vld [vmem:[%s226 + $0x34] sm:$0xf]
      %v251 = vld [vmem:[%s226 + $0x38] sm:$0xf]
      %v252 = vld [vmem:[%s226 + $0x3c] sm:$0xf]
      %v253 = vld [vmem:[%s226 + $0x40] sm:$0xf]
      %v254 = vld [vmem:[%s226 + $0x44] sm:$0xf]
      %v255 = vld [vmem:[%s226 + $0x48] sm:$0xf]
      %v256 = vld [vmem:[%s226 + $0x4c] sm:$0xf]
      %v257 = vld [vmem:[%s226 + $0x50] sm:$0xf]
      %v258 = vld [vmem:[%s226 + $0x54] sm:$0xf]
      %v259 = vld [vmem:[%s226 + $0x58] sm:$0xf]
      %v260 = vld [vmem:[%s226 + $0x5c] sm:$0xf]
      %v261 = vld [vmem:[%s226 + $0x60] sm:$0xf]
      %v262 = vld [vmem:[%s226 + $0x64] sm:$0xf]
      %v263 = vld [vmem:[%s226 + $0x68] sm:$0xf]
      %v264 = vld [vmem:[%s226 + $0x6c] sm:$0xf]
      %v265 = vld [vmem:[%s226 + $0x70] sm:$0xf]
      %v266 = vld [vmem:[%s226 + $0x74] sm:$0xf]
      %v267 = vld [vmem:[%s226 + $0x78] sm:$0xf]
      %v268 = vld [vmem:[%s226 + $0x7c] sm:$0xf]
      %v269 = vunpack.c.l.bf16 %v237
      %v270 = vunpack.c.l.bf16 %v238
      %v271 = vunpack.c.l.bf16 %v239
      %v272 = vunpack.c.l.bf16 %v240
      %v273 = vunpack.c.l.bf16 %v241
      %v274 = vunpack.c.l.bf16 %v242
      %v275 = vunpack.c.l.bf16 %v243
      %v276 = vunpack.c.l.bf16 %v244
      %v277 = vunpack.c.l.bf16 %v245
      %v278 = vunpack.c.l.bf16 %v246
      %v279 = vunpack.c.l.bf16 %v247
      %v280 = vunpack.c.l.bf16 %v248
      %v281 = vunpack.c.l.bf16 %v249
      %v282 = vunpack.c.l.bf16 %v250
      %v283 = vunpack.c.l.bf16 %v251
      %v284 = vunpack.c.l.bf16 %v252
      %v285 = vunpack.c.l.bf16 %v253
      %v286 = vunpack.c.l.bf16 %v254
      %v287 = vunpack.c.l.bf16 %v255
      %v288 = vunpack.c.l.bf16 %v256
      %v289 = vunpack.c.l.bf16 %v257
      %v290 = vunpack.c.l.bf16 %v258
      %v291 = vunpack.c.l.bf16 %v259
      %v292 = vunpack.c.l.bf16 %v260
      %v293 = vunpack.c.l.bf16 %v261
      %v294 = vunpack.c.l.bf16 %v262
      %v295 = vunpack.c.l.bf16 %v263
      %v296 = vunpack.c.l.bf16 %v264
      %v297 = vunpack.c.l.bf16 %v265
      %v298 = vunpack.c.l.bf16 %v266
      %v299 = vunpack.c.l.bf16 %v267
      %v300 = vunpack.c.l.bf16 %v268
      %v301 = vld [vmem:[%s2] sm:$0x1]
      %v303 = vlaneseq
      %v304 = vshrl.u32 %v303, 7
      %v305 = vsub.s32 0, %v304
      %v306 = vrot.slane %v301, %v305
      %v308 = vmul.f32 %v269, %v306
      %v309 = vmul.f32 %v270, %v306
      %v310 = vmul.f32 %v271, %v306
      %v311 = vmul.f32 %v272, %v306
      %v312 = vmul.f32 %v273, %v306
      %v313 = vmul.f32 %v274, %v306
      %v314 = vmul.f32 %v275, %v306
      %v315 = vmul.f32 %v276, %v306
      %v316 = vmul.f32 %v277, %v306
      %v317 = vmul.f32 %v278, %v306
      %v318 = vmul.f32 %v279, %v306
      %v319 = vmul.f32 %v280, %v306
      %v320 = vmul.f32 %v281, %v306
      %v321 = vmul.f32 %v282, %v306
      %v322 = vmul.f32 %v283, %v306
      %v323 = vmul.f32 %v284, %v306
      %v324 = vmul.f32 %v285, %v306
      %v325 = vmul.f32 %v286, %v306
      %v326 = vmul.f32 %v287, %v306
      %v327 = vmul.f32 %v288, %v306
      %v328 = vmul.f32 %v289, %v306
      %v329 = vmul.f32 %v290, %v306
      %v330 = vmul.f32 %v291, %v306
      %v331 = vmul.f32 %v292, %v306
      %v332 = vmul.f32 %v293, %v306
      %v333 = vmul.f32 %v294, %v306
      %v334 = vmul.f32 %v295, %v306
      %v335 = vmul.f32 %v296, %v306
      %v336 = vmul.f32 %v297, %v306
      %v337 = vmul.f32 %v298, %v306
      %v338 = vmul.f32 %v299, %v306
      %v339 = vmul.f32 %v300, %v306
      %v340 = vld [vmem:[%s3] sm:$0x1]
      %v342 = vlaneseq
      %v343 = vshrl.u32 %v342, 7
      %v344 = vsub.s32 0, %v343
      %v345 = vrot.slane %v340, %v344
      %v347 = vadd.f32 %v308, %v345
      %v348 = vadd.f32 %v309, %v345
      %v349 = vadd.f32 %v310, %v345
      %v350 = vadd.f32 %v311, %v345
      %v351 = vadd.f32 %v312, %v345
      %v352 = vadd.f32 %v313, %v345
      %v353 = vadd.f32 %v314, %v345
      %v354 = vadd.f32 %v315, %v345
      %v355 = vadd.f32 %v316, %v345
      %v356 = vadd.f32 %v317, %v345
      %v357 = vadd.f32 %v318, %v345
      %v358 = vadd.f32 %v319, %v345
      %v359 = vadd.f32 %v320, %v345
      %v360 = vadd.f32 %v321, %v345
      %v361 = vadd.f32 %v322, %v345
      %v362 = vadd.f32 %v323, %v345
      %v363 = vadd.f32 %v324, %v345
      %v364 = vadd.f32 %v325, %v345
      %v365 = vadd.f32 %v326, %v345
      %v366 = vadd.f32 %v327, %v345
      %v367 = vadd.f32 %v328, %v345
      %v368 = vadd.f32 %v329, %v345
      %v369 = vadd.f32 %v330, %v345
      %v370 = vadd.f32 %v331, %v345
      %v371 = vadd.f32 %v332, %v345
      %v372 = vadd.f32 %v333, %v345
      %v373 = vadd.f32 %v334, %v345
      %v374 = vadd.f32 %v335, %v345
      %v375 = vadd.f32 %v336, %v345
      %v376 = vadd.f32 %v337, %v345
      %v377 = vadd.f32 %v338, %v345
      %v378 = vadd.f32 %v339, %v345
      %v379 = vmax.f32 %v347, 0.0
      %v380 = vmax.f32 %v348, 0.0
      %v381 = vmax.f32 %v349, 0.0
      %v382 = vmax.f32 %v350, 0.0
      %v383 = vmax.f32 %v351, 0.0
      %v384 = vmax.f32 %v352, 0.0
      %v385 = vmax.f32 %v353, 0.0
      %v386 = vmax.f32 %v354, 0.0
      %v387 = vmax.f32 %v355, 0.0
      %v388 = vmax.f32 %v356, 0.0
      %v389 = vmax.f32 %v357, 0.0
      %v390 = vmax.f32 %v358, 0.0
      %v391 = vmax.f32 %v359, 0.0
      %v392 = vmax.f32 %v360, 0.0
      %v393 = vmax.f32 %v361, 0.0
      %v394 = vmax.f32 %v362, 0.0
      %v395 = vmax.f32 %v363, 0.0
      %v396 = vmax.f32 %v364, 0.0
      %v397 = vmax.f32 %v365, 0.0
      %v398 = vmax.f32 %v366, 0.0
      %v399 = vmax.f32 %v367, 0.0
      %v400 = vmax.f32 %v368, 0.0
      %v401 = vmax.f32 %v369, 0.0
      %v402 = vmax.f32 %v370, 0.0
      %v403 = vmax.f32 %v371, 0.0
      %v404 = vmax.f32 %v372, 0.0
      %v405 = vmax.f32 %v373, 0.0
      %v406 = vmax.f32 %v374, 0.0
      %v407 = vmax.f32 %v375, 0.0
      %v408 = vmax.f32 %v376, 0.0
      %v409 = vmax.f32 %v377, 0.0
      %v410 = vmax.f32 %v378, 0.0
      %v411 = vpack.c.bf16 %v380, %v379
      %v412 = vpack.c.bf16 %v382, %v381
      %v413 = vpack.c.bf16 %v384, %v383
      %v414 = vpack.c.bf16 %v386, %v385
      %v415 = vpack.c.bf16 %v388, %v387
      %v416 = vpack.c.bf16 %v390, %v389
      %v417 = vpack.c.bf16 %v392, %v391
      %v418 = vpack.c.bf16 %v394, %v393
      %v419 = vpack.c.bf16 %v396, %v395
      %v420 = vpack.c.bf16 %v398, %v397
      %v421 = vpack.c.bf16 %v400, %v399
      %v422 = vpack.c.bf16 %v402, %v401
      %v423 = vpack.c.bf16 %v404, %v403
      %v424 = vpack.c.bf16 %v406, %v405
      %v425 = vpack.c.bf16 %v408, %v407
      %v426 = vpack.c.bf16 %v410, %v409
      %v428 = vshrl.u32 %v411, 16
      %v430 = vrot.slane %v428, 7
      %v431 = vshll.u32 %v411, 16
      %v433 = vor.u32 %v430, %v431
      %v435 = vshrl.u32 %v412, 16
      %v437 = vrot.slane %v435, 7
      %v438 = vshll.u32 %v412, 16
      %v440 = vor.u32 %v437, %v438
      %v442 = vshrl.u32 %v413, 16
      %v444 = vrot.slane %v442, 7
      %v445 = vshll.u32 %v413, 16
      %v447 = vor.u32 %v444, %v445
      %v449 = vshrl.u32 %v414, 16
      %v451 = vrot.slane %v449, 7
      %v452 = vshll.u32 %v414, 16
      %v454 = vor.u32 %v451, %v452
      %v456 = vshrl.u32 %v415, 16
      %v458 = vrot.slane %v456, 7
      %v459 = vshll.u32 %v415, 16
      %v461 = vor.u32 %v458, %v459
      %v463 = vshrl.u32 %v416, 16
      %v465 = vrot.slane %v463, 7
      %v466 = vshll.u32 %v416, 16
      %v468 = vor.u32 %v465, %v466
      %v470 = vshrl.u32 %v417, 16
      %v472 = vrot.slane %v470, 7
      %v473 = vshll.u32 %v417, 16
      %v475 = vor.u32 %v472, %v473
      %v477 = vshrl.u32 %v418, 16
      %v479 = vrot.slane %v477, 7
      %v480 = vshll.u32 %v418, 16
      %v482 = vor.u32 %v479, %v480
      %v484 = vshrl.u32 %v419, 16
      %v486 = vrot.slane %v484, 7
      %v487 = vshll.u32 %v419, 16
      %v489 = vor.u32 %v486, %v487
      %v491 = vshrl.u32 %v420, 16
      %v493 = vrot.slane %v491, 7
      %v494 = vshll.u32 %v420, 16
      %v496 = vor.u32 %v493, %v494
      %v498 = vshrl.u32 %v421, 16
      %v500 = vrot.slane %v498, 7
      %v501 = vshll.u32 %v421, 16
      %v503 = vor.u32 %v500, %v501
      %v505 = vshrl.u32 %v422, 16
      %v507 = vrot.slane %v505, 7
      %v508 = vshll.u32 %v422, 16
      %v510 = vor.u32 %v507, %v508
      %v512 = vshrl.u32 %v423, 16
      %v514 = vrot.slane %v512, 7
      %v515 = vshll.u32 %v423, 16
      %v517 = vor.u32 %v514, %v515
      %v519 = vshrl.u32 %v424, 16
      %v521 = vrot.slane %v519, 7
      %v522 = vshll.u32 %v424, 16
      %v524 = vor.u32 %v521, %v522
      %v526 = vshrl.u32 %v425, 16
      %v528 = vrot.slane %v526, 7
      %v529 = vshll.u32 %v425, 16
      %v531 = vor.u32 %v528, %v529
      %v533 = vshrl.u32 %v426, 16
      %v535 = vrot.slane %v533, 7
      %v536 = vshll.u32 %v426, 16
      %v538 = vor.u32 %v535, %v536
      %vm571 = vcmask 1040384
      %vm572 = vsmask.f32 256
      %vm573 = vmand %vm571, %vm572
      %v574 = vsel %vm573, 0, %v433
      %v575 = vsel %vm573, 0, %v440
      %v576 = vsel %vm573, 0, %v447
      %v577 = vsel %vm573, 0, %v454
      %v578 = vsel %vm573, 0, %v461
      %v579 = vsel %vm573, 0, %v468
      %v580 = vsel %vm573, 0, %v475
      %v581 = vsel %vm573, 0, %v482
      %v582 = vsel %vm573, 0, %v489
      %v583 = vsel %vm573, 0, %v496
      %v584 = vsel %vm573, 0, %v503
      %v585 = vsel %vm573, 0, %v510
      %v586 = vsel %vm573, 0, %v517
      %v587 = vsel %vm573, 0, %v524
      %v588 = vsel %vm573, 0, %v531
      %v589 = vsel %vm573, 0, %v538
      %v590 = vsel %vm573, %v430, 0
      %v591 = vsel %vm573, %v437, 0
      %v592 = vsel %vm573, %v444, 0
      %v593 = vsel %vm573, %v451, 0
      %v594 = vsel %vm573, %v458, 0
      %v595 = vsel %vm573, %v465, 0
      %v596 = vsel %vm573, %v472, 0
      %v597 = vsel %vm573, %v479, 0
      %v598 = vsel %vm573, %v486, 0
      %v599 = vsel %vm573, %v493, 0
      %v600 = vsel %vm573, %v500, 0
      %v601 = vsel %vm573, %v507, 0
      %v602 = vsel %vm573, %v514, 0
      %v603 = vsel %vm573, %v521, 0
      %v604 = vsel %vm573, %v528, 0
      %v605 = vsel %vm573, %v535, 0
      %vm606 = vsmask.f32 7424
      %v608 = vshrl.u32 0, 16
      %v610 = vshll.u32 0, 16
      %v612 = vrot.slane %v610, 1
      %v613 = vor.u32 %v608, %v612
      %v614 = vsel %vm606, %v613, %v612
      %v616 = vshrl.u32 %v574, 16
      %v618 = vshll.u32 %v574, 16
      %v620 = vrot.slane %v618, 1
      %v621 = vor.u32 %v616, %v620
      %v623 = vshll.u32 %v590, 16
      %v625 = vrot.slane %v623, 1
      %v626 = vsel %vm606, %v621, %v625
      %v628 = vshrl.u32 %v575, 16
      %v630 = vshll.u32 %v575, 16
      %v632 = vrot.slane %v630, 1
      %v633 = vor.u32 %v628, %v632
      %v635 = vshll.u32 %v591, 16
      %v637 = vrot.slane %v635, 1
      %v638 = vsel %vm606, %v633, %v637
      %v640 = vshrl.u32 %v576, 16
      %v642 = vshll.u32 %v576, 16
      %v644 = vrot.slane %v642, 1
      %v645 = vor.u32 %v640, %v644
      %v647 = vshll.u32 %v592, 16
      %v649 = vrot.slane %v647, 1
      %v650 = vsel %vm606, %v645, %v649
      %v652 = vshrl.u32 %v577, 16
      %v654 = vshll.u32 %v577, 16
      %v656 = vrot.slane %v654, 1
      %v657 = vor.u32 %v652, %v656
      %v659 = vshll.u32 %v593, 16
      %v661 = vrot.slane %v659, 1
      %v662 = vsel %vm606, %v657, %v661
      %v664 = vshrl.u32 %v578, 16
      %v666 = vshll.u32 %v578, 16
      %v668 = vrot.slane %v666, 1
      %v669 = vor.u32 %v664, %v668
      %v671 = vshll.u32 %v594, 16
      %v673 = vrot.slane %v671, 1
      %v674 = vsel %vm606, %v669, %v673
      %v676 = vshrl.u32 %v579, 16
      %v678 = vshll.u32 %v579, 16
      %v680 = vrot.slane %v678, 1
      %v681 = vor.u32 %v676, %v680
      %v683 = vshll.u32 %v595, 16
      %v685 = vrot.slane %v683, 1
      %v686 = vsel %vm606, %v681, %v685
      %v688 = vshrl.u32 %v580, 16
      %v690 = vshll.u32 %v580, 16
      %v692 = vrot.slane %v690, 1
      %v693 = vor.u32 %v688, %v692
      %v695 = vshll.u32 %v596, 16
      %v697 = vrot.slane %v695, 1
      %v698 = vsel %vm606, %v693, %v697
      %v700 = vshrl.u32 %v581, 16
      %v702 = vshll.u32 %v581, 16
      %v704 = vrot.slane %v702, 1
      %v705 = vor.u32 %v700, %v704
      %v707 = vshll.u32 %v597, 16
      %v709 = vrot.slane %v707, 1
      %v710 = vsel %vm606, %v705, %v709
      %v712 = vshrl.u32 %v582, 16
      %v714 = vshll.u32 %v582, 16
      %v716 = vrot.slane %v714, 1
      %v717 = vor.u32 %v712, %v716
      %v719 = vshll.u32 %v598, 16
      %v721 = vrot.slane %v719, 1
      %v722 = vsel %vm606, %v717, %v721
      %v724 = vshrl.u32 %v583, 16
      %v726 = vshll.u32 %v583, 16
      %v728 = vrot.slane %v726, 1
      %v729 = vor.u32 %v724, %v728
      %v731 = vshll.u32 %v599, 16
      %v733 = vrot.slane %v731, 1
      %v734 = vsel %vm606, %v729, %v733
      %v736 = vshrl.u32 %v584, 16
      %v738 = vshll.u32 %v584, 16
      %v740 = vrot.slane %v738, 1
      %v741 = vor.u32 %v736, %v740
      %v743 = vshll.u32 %v600, 16
      %v745 = vrot.slane %v743, 1
      %v746 = vsel %vm606, %v741, %v745
      %v748 = vshrl.u32 %v585, 16
      %v750 = vshll.u32 %v585, 16
      %v752 = vrot.slane %v750, 1
      %v753 = vor.u32 %v748, %v752
      %v755 = vshll.u32 %v601, 16
      %v757 = vrot.slane %v755, 1
      %v758 = vsel %vm606, %v753, %v757
      %v760 = vshrl.u32 %v586, 16
      %v762 = vshll.u32 %v586, 16
      %v764 = vrot.slane %v762, 1
      %v765 = vor.u32 %v760, %v764
      %v767 = vshll.u32 %v602, 16
      %v769 = vrot.slane %v767, 1
      %v770 = vsel %vm606, %v765, %v769
      %v772 = vshrl.u32 %v587, 16
      %v774 = vshll.u32 %v587, 16
      %v776 = vrot.slane %v774, 1
      %v777 = vor.u32 %v772, %v776
      %v779 = vshll.u32 %v603, 16
      %v781 = vrot.slane %v779, 1
      %v782 = vsel %vm606, %v777, %v781
      %v784 = vshrl.u32 %v588, 16
      %v786 = vshll.u32 %v588, 16
      %v788 = vrot.slane %v786, 1
      %v789 = vor.u32 %v784, %v788
      %v791 = vshll.u32 %v604, 16
      %v793 = vrot.slane %v791, 1
      %v794 = vsel %vm606, %v789, %v793
      %795 = vrot.lane.b32.xlu0 %v614, 4
      %v796 = vpop.permute.xlu0 %795
      %797 = vrot.lane.b32.xlu0 %v626, 4
      %v798 = vpop.permute.xlu0 %797
      %799 = vrot.lane.b32.xlu0 %v638, 4
      %v800 = vpop.permute.xlu0 %799
      %801 = vrot.lane.b32.xlu0 %v650, 4
      %v802 = vpop.permute.xlu0 %801
      %803 = vrot.lane.b32.xlu0 %v662, 4
      %v804 = vpop.permute.xlu0 %803
      %805 = vrot.lane.b32.xlu0 %v674, 4
      %v806 = vpop.permute.xlu0 %805
      %807 = vrot.lane.b32.xlu0 %v686, 4
      %v808 = vpop.permute.xlu0 %807
      %809 = vrot.lane.b32.xlu0 %v698, 4
      %v810 = vpop.permute.xlu0 %809
      %811 = vrot.lane.b32.xlu0 %v710, 4
      %v812 = vpop.permute.xlu0 %811
      %813 = vrot.lane.b32.xlu0 %v722, 4
      %v814 = vpop.permute.xlu0 %813
      %815 = vrot.lane.b32.xlu0 %v734, 4
      %v816 = vpop.permute.xlu0 %815
      %817 = vrot.lane.b32.xlu0 %v746, 4
      %v818 = vpop.permute.xlu0 %817
      %819 = vrot.lane.b32.xlu0 %v758, 4
      %v820 = vpop.permute.xlu0 %819
      %821 = vrot.lane.b32.xlu0 %v770, 4
      %v822 = vpop.permute.xlu0 %821
      %823 = vrot.lane.b32.xlu0 %v782, 4
      %v824 = vpop.permute.xlu0 %823
      %825 = vrot.lane.b32.xlu0 %v794, 4
      %v826 = vpop.permute.xlu0 %825
      %vm858 = vcmask 1046528
      %v859 = vrot.slane 0, 1
      %v860 = vsel %vm858, %v859, %v859
      %v861 = vrot.slane %v574, 1
      %v862 = vrot.slane %v590, 1
      %v863 = vsel %vm858, %v861, %v862
      %v864 = vrot.slane %v575, 1
      %v865 = vrot.slane %v591, 1
      %v866 = vsel %vm858, %v864, %v865
      %v867 = vrot.slane %v576, 1
      %v868 = vrot.slane %v592, 1
      %v869 = vsel %vm858, %v867, %v868
      %v870 = vrot.slane %v577, 1
      %v871 = vrot.slane %v593, 1
      %v872 = vsel %vm858, %v870, %v871
      %v873 = vrot.slane %v578, 1
      %v874 = vrot.slane %v594, 1
      %v875 = vsel %vm858, %v873, %v874
      %v876 = vrot.slane %v579, 1
      %v877 = vrot.slane %v595, 1
      %v878 = vsel %vm858, %v876, %v877
      %v879 = vrot.slane %v580, 1
      %v880 = vrot.slane %v596, 1
      %v881 = vsel %vm858, %v879, %v880
      %v882 = vrot.slane %v581, 1
      %v883 = vrot.slane %v597, 1
      %v884 = vsel %vm858, %v882, %v883
      %v885 = vrot.slane %v582, 1
      %v886 = vrot.slane %v598, 1
      %v887 = vsel %vm858, %v885, %v886
      %v888 = vrot.slane %v583, 1
      %v889 = vrot.slane %v599, 1
      %v890 = vsel %vm858, %v888, %v889
      %v891 = vrot.slane %v584, 1
      %v892 = vrot.slane %v600, 1
      %v893 = vsel %vm858, %v891, %v892
      %v894 = vrot.slane %v585, 1
      %v895 = vrot.slane %v601, 1
      %v896 = vsel %vm858, %v894, %v895
      %v897 = vrot.slane %v586, 1
      %v898 = vrot.slane %v602, 1
      %v899 = vsel %vm858, %v897, %v898
      %v900 = vrot.slane %v587, 1
      %v901 = vrot.slane %v603, 1
      %v902 = vsel %vm858, %v900, %v901
      %v903 = vrot.slane %v588, 1
      %v904 = vrot.slane %v604, 1
      %v905 = vsel %vm858, %v903, %v904
      %906 = vrot.lane.b32.xlu0 %v860, 8
      %v907 = vpop.permute.xlu0 %906
      %908 = vrot.lane.b32.xlu0 %v863, 8
      %v909 = vpop.permute.xlu0 %908
      %910 = vrot.lane.b32.xlu0 %v866, 8
      %v911 = vpop.permute.xlu0 %910
      %912 = vrot.lane.b32.xlu0 %v869, 8
      %v913 = vpop.permute.xlu0 %912
      %914 = vrot.lane.b32.xlu0 %v872, 8
      %v915 = vpop.permute.xlu0 %914
      %916 = vrot.lane.b32.xlu0 %v875, 8
      %v917 = vpop.permute.xlu0 %916
      %918 = vrot.lane.b32.xlu0 %v878, 8
      %v919 = vpop.permute.xlu0 %918
      %920 = vrot.lane.b32.xlu0 %v881, 8
      %v921 = vpop.permute.xlu0 %920
      %922 = vrot.lane.b32.xlu0 %v884, 8
      %v923 = vpop.permute.xlu0 %922
      %924 = vrot.lane.b32.xlu0 %v887, 8
      %v925 = vpop.permute.xlu0 %924
      %926 = vrot.lane.b32.xlu0 %v890, 8
      %v927 = vpop.permute.xlu0 %926
      %928 = vrot.lane.b32.xlu0 %v893, 8
      %v929 = vpop.permute.xlu0 %928
      %930 = vrot.lane.b32.xlu0 %v896, 8
      %v931 = vpop.permute.xlu0 %930
      %932 = vrot.lane.b32.xlu0 %v899, 8
      %v933 = vpop.permute.xlu0 %932
      %934 = vrot.lane.b32.xlu0 %v902, 8
      %v935 = vpop.permute.xlu0 %934
      %936 = vrot.lane.b32.xlu0 %v905, 8
      %v937 = vpop.permute.xlu0 %936
      %939 = vrot.lane.b32.xlu0 %v574, 12
      %v940 = vpop.permute.xlu0 %939
      %941 = vrot.lane.b32.xlu0 %v575, 12
      %v942 = vpop.permute.xlu0 %941
      %943 = vrot.lane.b32.xlu0 %v576, 12
      %v944 = vpop.permute.xlu0 %943
      %945 = vrot.lane.b32.xlu0 %v577, 12
      %v946 = vpop.permute.xlu0 %945
      %947 = vrot.lane.b32.xlu0 %v578, 12
      %v948 = vpop.permute.xlu0 %947
      %949 = vrot.lane.b32.xlu0 %v579, 12
      %v950 = vpop.permute.xlu0 %949
      %951 = vrot.lane.b32.xlu0 %v580, 12
      %v952 = vpop.permute.xlu0 %951
      %953 = vrot.lane.b32.xlu0 %v581, 12
      %v954 = vpop.permute.xlu0 %953
      %955 = vrot.lane.b32.xlu0 %v582, 12
      %v956 = vpop.permute.xlu0 %955
      %957 = vrot.lane.b32.xlu0 %v583, 12
      %v958 = vpop.permute.xlu0 %957
      %959 = vrot.lane.b32.xlu0 %v584, 12
      %v960 = vpop.permute.xlu0 %959
      %961 = vrot.lane.b32.xlu0 %v585, 12
      %v962 = vpop.permute.xlu0 %961
      %963 = vrot.lane.b32.xlu0 %v586, 12
      %v964 = vpop.permute.xlu0 %963
      %965 = vrot.lane.b32.xlu0 %v587, 12
      %v966 = vpop.permute.xlu0 %965
      %967 = vrot.lane.b32.xlu0 %v588, 12
      %v968 = vpop.permute.xlu0 %967
      %969 = vrot.lane.b32.xlu0 %v589, 12
      %v970 = vpop.permute.xlu0 %969
      %v972 = vshrl.u32 %v589, 16
      %v974 = vshll.u32 %v589, 16
      %v976 = vrot.slane %v974, 1
      %v977 = vor.u32 %v972, %v976
      %v979 = vshll.u32 %v605, 16
      %v981 = vrot.slane %v979, 1
      %v982 = vsel %vm606, %v977, %v981
      %983 = vrot.lane.b32.xlu0 %v626, 16
      %v984 = vpop.permute.xlu0 %983
      %985 = vrot.lane.b32.xlu0 %v638, 16
      %v986 = vpop.permute.xlu0 %985
      %987 = vrot.lane.b32.xlu0 %v650, 16
      %v988 = vpop.permute.xlu0 %987
      %989 = vrot.lane.b32.xlu0 %v662, 16
      %v990 = vpop.permute.xlu0 %989
      %991 = vrot.lane.b32.xlu0 %v674, 16
      %v992 = vpop.permute.xlu0 %991
      %993 = vrot.lane.b32.xlu0 %v686, 16
      %v994 = vpop.permute.xlu0 %993
      %995 = vrot.lane.b32.xlu0 %v698, 16
      %v996 = vpop.permute.xlu0 %995
      %997 = vrot.lane.b32.xlu0 %v710, 16
      %v998 = vpop.permute.xlu0 %997
      %999 = vrot.lane.b32.xlu0 %v722, 16
      %v1000 = vpop.permute.xlu0 %999
      %1001 = vrot.lane.b32.xlu0 %v734, 16
      %v1002 = vpop.permute.xlu0 %1001
      %1003 = vrot.lane.b32.xlu0 %v746, 16
      %v1004 = vpop.permute.xlu0 %1003
      %1005 = vrot.lane.b32.xlu0 %v758, 16
      %v1006 = vpop.permute.xlu0 %1005
      %1007 = vrot.lane.b32.xlu0 %v770, 16
      %v1008 = vpop.permute.xlu0 %1007
      %1009 = vrot.lane.b32.xlu0 %v782, 16
      %v1010 = vpop.permute.xlu0 %1009
      %1011 = vrot.lane.b32.xlu0 %v794, 16
      %v1012 = vpop.permute.xlu0 %1011
      %1013 = vrot.lane.b32.xlu0 %v982, 16
      %v1014 = vpop.permute.xlu0 %1013
      %v1016 = vrot.slane %v589, 1
      %v1017 = vrot.slane %v605, 1
      %v1018 = vsel %vm858, %v1016, %v1017
      %1019 = vrot.lane.b32.xlu0 %v863, 20
      %v1020 = vpop.permute.xlu0 %1019
      %1021 = vrot.lane.b32.xlu0 %v866, 20
      %v1022 = vpop.permute.xlu0 %1021
      %1023 = vrot.lane.b32.xlu0 %v869, 20
      %v1024 = vpop.permute.xlu0 %1023
      %1025 = vrot.lane.b32.xlu0 %v872, 20
      %v1026 = vpop.permute.xlu0 %1025
      %1027 = vrot.lane.b32.xlu0 %v875, 20
      %v1028 = vpop.permute.xlu0 %1027
      %1029 = vrot.lane.b32.xlu0 %v878, 20
      %v1030 = vpop.permute.xlu0 %1029
      %1031 = vrot.lane.b32.xlu0 %v881, 20
      %v1032 = vpop.permute.xlu0 %1031
      %1033 = vrot.lane.b32.xlu0 %v884, 20
      %v1034 = vpop.permute.xlu0 %1033
      %1035 = vrot.lane.b32.xlu0 %v887, 20
      %v1036 = vpop.permute.xlu0 %1035
      %1037 = vrot.lane.b32.xlu0 %v890, 20
      %v1038 = vpop.permute.xlu0 %1037
      %1039 = vrot.lane.b32.xlu0 %v893, 20
      %v1040 = vpop.permute.xlu0 %1039
      %1041 = vrot.lane.b32.xlu0 %v896, 20
      %v1042 = vpop.permute.xlu0 %1041
      %1043 = vrot.lane.b32.xlu0 %v899, 20
      %v1044 = vpop.permute.xlu0 %1043
      %1045 = vrot.lane.b32.xlu0 %v902, 20
      %v1046 = vpop.permute.xlu0 %1045
      %1047 = vrot.lane.b32.xlu0 %v905, 20
      %v1048 = vpop.permute.xlu0 %1047
      %1049 = vrot.lane.b32.xlu0 %v1018, 20
      %v1050 = vpop.permute.xlu0 %1049
      %1051 = vrot.lane.b32.xlu0 %v575, 24
      %v1052 = vpop.permute.xlu0 %1051
      %1053 = vrot.lane.b32.xlu0 %v576, 24
      %v1054 = vpop.permute.xlu0 %1053
      %1055 = vrot.lane.b32.xlu0 %v577, 24
      %v1056 = vpop.permute.xlu0 %1055
      %1057 = vrot.lane.b32.xlu0 %v578, 24
      %v1058 = vpop.permute.xlu0 %1057
      %1059 = vrot.lane.b32.xlu0 %v579, 24
      %v1060 = vpop.permute.xlu0 %1059
      %1061 = vrot.lane.b32.xlu0 %v580, 24
      %v1062 = vpop.permute.xlu0 %1061
      %1063 = vrot.lane.b32.xlu0 %v581, 24
      %v1064 = vpop.permute.xlu0 %1063
      %1065 = vrot.lane.b32.xlu0 %v582, 24
      %v1066 = vpop.permute.xlu0 %1065
      %1067 = vrot.lane.b32.xlu0 %v583, 24
      %v1068 = vpop.permute.xlu0 %1067
      %1069 = vrot.lane.b32.xlu0 %v584, 24
      %v1070 = vpop.permute.xlu0 %1069
      %1071 = vrot.lane.b32.xlu0 %v585, 24
      %v1072 = vpop.permute.xlu0 %1071
      %1073 = vrot.lane.b32.xlu0 %v586, 24
      %v1074 = vpop.permute.xlu0 %1073
      %1075 = vrot.lane.b32.xlu0 %v587, 24
      %v1076 = vpop.permute.xlu0 %1075
      %1077 = vrot.lane.b32.xlu0 %v588, 24
      %v1078 = vpop.permute.xlu0 %1077
      %1079 = vrot.lane.b32.xlu0 %v589, 24
      %v1080 = vpop.permute.xlu0 %1079
      %1081 = vrot.lane.b32.xlu0 0, 24
      %v1082 = vpop.permute.xlu0 %1081
      %1083 = vrot.lane.b32.xlu0 %v638, 28
      %v1084 = vpop.permute.xlu0 %1083
      %1085 = vrot.lane.b32.xlu0 %v650, 28
      %v1086 = vpop.permute.xlu0 %1085
      %1087 = vrot.lane.b32.xlu0 %v662, 28
      %v1088 = vpop.permute.xlu0 %1087
      %1089 = vrot.lane.b32.xlu0 %v674, 28
      %v1090 = vpop.permute.xlu0 %1089
      %1091 = vrot.lane.b32.xlu0 %v686, 28
      %v1092 = vpop.permute.xlu0 %1091
      %1093 = vrot.lane.b32.xlu0 %v698, 28
      %v1094 = vpop.permute.xlu0 %1093
      %1095 = vrot.lane.b32.xlu0 %v710, 28
      %v1096 = vpop.permute.xlu0 %1095
      %1097 = vrot.lane.b32.xlu0 %v722, 28
      %v1098 = vpop.permute.xlu0 %1097
      %1099 = vrot.lane.b32.xlu0 %v734, 28
      %v1100 = vpop.permute.xlu0 %1099
      %1101 = vrot.lane.b32.xlu0 %v746, 28
      %v1102 = vpop.permute.xlu0 %1101
      %1103 = vrot.lane.b32.xlu0 %v758, 28
      %v1104 = vpop.permute.xlu0 %1103
      %1105 = vrot.lane.b32.xlu0 %v770, 28
      %v1106 = vpop.permute.xlu0 %1105
      %1107 = vrot.lane.b32.xlu0 %v782, 28
      %v1108 = vpop.permute.xlu0 %1107
      %1109 = vrot.lane.b32.xlu0 %v794, 28
      %v1110 = vpop.permute.xlu0 %1109
      %1111 = vrot.lane.b32.xlu0 %v982, 28
      %v1112 = vpop.permute.xlu0 %1111
      %1113 = vrot.lane.b32.xlu0 %v614, 28
      %v1114 = vpop.permute.xlu0 %1113
      %1115 = vrot.lane.b32.xlu0 %v866, 32
      %v1116 = vpop.permute.xlu0 %1115
      %1117 = vrot.lane.b32.xlu0 %v869, 32
      %v1118 = vpop.permute.xlu0 %1117
      %1119 = vrot.lane.b32.xlu0 %v872, 32
      %v1120 = vpop.permute.xlu0 %1119
      %1121 = vrot.lane.b32.xlu0 %v875, 32
      %v1122 = vpop.permute.xlu0 %1121
      %1123 = vrot.lane.b32.xlu0 %v878, 32
      %v1124 = vpop.permute.xlu0 %1123
      %1125 = vrot.lane.b32.xlu0 %v881, 32
      %v1126 = vpop.permute.xlu0 %1125
      %1127 = vrot.lane.b32.xlu0 %v884, 32
      %v1128 = vpop.permute.xlu0 %1127
      %1129 = vrot.lane.b32.xlu0 %v887, 32
      %v1130 = vpop.permute.xlu0 %1129
      %1131 = vrot.lane.b32.xlu0 %v890, 32
      %v1132 = vpop.permute.xlu0 %1131
      %1133 = vrot.lane.b32.xlu0 %v893, 32
      %v1134 = vpop.permute.xlu0 %1133
      %1135 = vrot.lane.b32.xlu0 %v896, 32
      %v1136 = vpop.permute.xlu0 %1135
      %1137 = vrot.lane.b32.xlu0 %v899, 32
      %v1138 = vpop.permute.xlu0 %1137
      %1139 = vrot.lane.b32.xlu0 %v902, 32
      %v1140 = vpop.permute.xlu0 %1139
      %1141 = vrot.lane.b32.xlu0 %v905, 32
      %v1142 = vpop.permute.xlu0 %1141
      %1143 = vrot.lane.b32.xlu0 %v1018, 32
      %v1144 = vpop.permute.xlu0 %1143
      %1145 = vrot.lane.b32.xlu0 %v860, 32
      %v1146 = vpop.permute.xlu0 %1145
      %vm1147 = vcmask 31744
      %v1149 = vsel %vm1147, 0, %v796
      %v1151 = vsel %vm1147, %v574, %v798
      %v1153 = vsel %vm1147, %v575, %v800
      %v1155 = vsel %vm1147, %v576, %v802
      %v1157 = vsel %vm1147, %v577, %v804
      %v1159 = vsel %vm1147, %v578, %v806
      %v1161 = vsel %vm1147, %v579, %v808
      %v1163 = vsel %vm1147, %v580, %v810
      %v1165 = vsel %vm1147, %v581, %v812
      %v1167 = vsel %vm1147, %v582, %v814
      %v1169 = vsel %vm1147, %v583, %v816
      %v1171 = vsel %vm1147, %v584, %v818
      %v1173 = vsel %vm1147, %v585, %v820
      %v1175 = vsel %vm1147, %v586, %v822
      %v1177 = vsel %vm1147, %v587, %v824
      %v1179 = vsel %vm1147, %v588, %v826
      %vm1180 = vcmask 64512
      %v1182 = vsel %vm1180, %v1149, %v907
      %v1184 = vsel %vm1180, %v1151, %v909
      %v1186 = vsel %vm1180, %v1153, %v911
      %v1188 = vsel %vm1180, %v1155, %v913
      %v1190 = vsel %vm1180, %v1157, %v915
      %v1192 = vsel %vm1180, %v1159, %v917
      %v1194 = vsel %vm1180, %v1161, %v919
      %v1196 = vsel %vm1180, %v1163, %v921
      %v1198 = vsel %vm1180, %v1165, %v923
      %v1200 = vsel %vm1180, %v1167, %v925
      %v1202 = vsel %vm1180, %v1169, %v927
      %v1204 = vsel %vm1180, %v1171, %v929
      %v1206 = vsel %vm1180, %v1173, %v931
      %v1208 = vsel %vm1180, %v1175, %v933
      %v1210 = vsel %vm1180, %v1177, %v935
      %v1212 = vsel %vm1180, %v1179, %v937
      %vm1213 = vcmask 97280
      %v1215 = vsel %vm1213, %v1182, %v940
      %v1217 = vsel %vm1213, %v1184, %v942
      %v1219 = vsel %vm1213, %v1186, %v944
      %v1221 = vsel %vm1213, %v1188, %v946
      %v1223 = vsel %vm1213, %v1190, %v948
      %v1225 = vsel %vm1213, %v1192, %v950
      %v1227 = vsel %vm1213, %v1194, %v952
      %v1229 = vsel %vm1213, %v1196, %v954
      %v1231 = vsel %vm1213, %v1198, %v956
      %v1233 = vsel %vm1213, %v1200, %v958
      %v1235 = vsel %vm1213, %v1202, %v960
      %v1237 = vsel %vm1213, %v1204, %v962
      %v1239 = vsel %vm1213, %v1206, %v964
      %v1241 = vsel %vm1213, %v1208, %v966
      %v1243 = vsel %vm1213, %v1210, %v968
      %v1245 = vsel %vm1213, %v1212, %v970
      %vm1246 = vcmask 130048
      %v1248 = vsel %vm1246, %v1215, %v984
      %v1250 = vsel %vm1246, %v1217, %v986
      %v1252 = vsel %vm1246, %v1219, %v988
      %v1254 = vsel %vm1246, %v1221, %v990
      %v1256 = vsel %vm1246, %v1223, %v992
      %v1258 = vsel %vm1246, %v1225, %v994
      %v1260 = vsel %vm1246, %v1227, %v996
      %v1262 = vsel %vm1246, %v1229, %v998
      %v1264 = vsel %vm1246, %v1231, %v1000
      %v1266 = vsel %vm1246, %v1233, %v1002
      %v1268 = vsel %vm1246, %v1235, %v1004
      %v1270 = vsel %vm1246, %v1237, %v1006
      %v1272 = vsel %vm1246, %v1239, %v1008
      %v1274 = vsel %vm1246, %v1241, %v1010
      %v1276 = vsel %vm1246, %v1243, %v1012
      %v1278 = vsel %vm1246, %v1245, %v1014
      %vm1279 = vcmask 162816
      %v1281 = vsel %vm1279, %v1248, %v1020
      %v1283 = vsel %vm1279, %v1250, %v1022
      %v1285 = vsel %vm1279, %v1252, %v1024
      %v1287 = vsel %vm1279, %v1254, %v1026
      %v1289 = vsel %vm1279, %v1256, %v1028
      %v1291 = vsel %vm1279, %v1258, %v1030
      %v1293 = vsel %vm1279, %v1260, %v1032
      %v1295 = vsel %vm1279, %v1262, %v1034
      %v1297 = vsel %vm1279, %v1264, %v1036
      %v1299 = vsel %vm1279, %v1266, %v1038
      %v1301 = vsel %vm1279, %v1268, %v1040
      %v1303 = vsel %vm1279, %v1270, %v1042
      %v1305 = vsel %vm1279, %v1272, %v1044
      %v1307 = vsel %vm1279, %v1274, %v1046
      %v1309 = vsel %vm1279, %v1276, %v1048
      %v1311 = vsel %vm1279, %v1278, %v1050
      %vm1312 = vcmask 195584
      %v1314 = vsel %vm1312, %v1281, %v1052
      %v1316 = vsel %vm1312, %v1283, %v1054
      %v1318 = vsel %vm1312, %v1285, %v1056
      %v1320 = vsel %vm1312, %v1287, %v1058
      %v1322 = vsel %vm1312, %v1289, %v1060
      %v1324 = vsel %vm1312, %v1291, %v1062
      %v1326 = vsel %vm1312, %v1293, %v1064
      %v1328 = vsel %vm1312, %v1295, %v1066
      %v1330 = vsel %vm1312, %v1297, %v1068
      %v1332 = vsel %vm1312, %v1299, %v1070
      %v1334 = vsel %vm1312, %v1301, %v1072
      %v1336 = vsel %vm1312, %v1303, %v1074
      %v1338 = vsel %vm1312, %v1305, %v1076
      %v1340 = vsel %vm1312, %v1307, %v1078
      %v1342 = vsel %vm1312, %v1309, %v1080
      %v1344 = vsel %vm1312, %v1311, %v1082
      %vm1345 = vcmask 228352
      %v1347 = vsel %vm1345, %v1314, %v1084
      %v1349 = vsel %vm1345, %v1316, %v1086
      %v1351 = vsel %vm1345, %v1318, %v1088
      %v1353 = vsel %vm1345, %v1320, %v1090
      %v1355 = vsel %vm1345, %v1322, %v1092
      %v1357 = vsel %vm1345, %v1324, %v1094
      %v1359 = vsel %vm1345, %v1326, %v1096
      %v1361 = vsel %vm1345, %v1328, %v1098
      %v1363 = vsel %vm1345, %v1330, %v1100
      %v1365 = vsel %vm1345, %v1332, %v1102
      %v1367 = vsel %vm1345, %v1334, %v1104
      %v1369 = vsel %vm1345, %v1336, %v1106
      %v1371 = vsel %vm1345, %v1338, %v1108
      %v1373 = vsel %vm1345, %v1340, %v1110
      %v1375 = vsel %vm1345, %v1342, %v1112
      %v1377 = vsel %vm1345, %v1344, %v1114
      %vm1378 = vcmask 261120
      %v1380 = vsel %vm1378, %v1347, %v1116
      %v1382 = vsel %vm1378, %v1349, %v1118
      %v1384 = vsel %vm1378, %v1351, %v1120
      %v1386 = vsel %vm1378, %v1353, %v1122
      %v1388 = vsel %vm1378, %v1355, %v1124
      %v1390 = vsel %vm1378, %v1357, %v1126
      %v1392 = vsel %vm1378, %v1359, %v1128
      %v1394 = vsel %vm1378, %v1361, %v1130
      %v1396 = vsel %vm1378, %v1363, %v1132
      %v1398 = vsel %vm1378, %v1365, %v1134
      %v1400 = vsel %vm1378, %v1367, %v1136
      %v1402 = vsel %vm1378, %v1369, %v1138
      %v1404 = vsel %vm1378, %v1371, %v1140
      %v1406 = vsel %vm1378, %v1373, %v1142
      %v1408 = vsel %vm1378, %v1375, %v1144
      %v1410 = vsel %vm1378, %v1377, %v1146
      %v1411 = vld [vmem:[%s1] sm:$0xf]
      %v1412 = vld [vmem:[%s1 + $0x4] sm:$0xf]
      %v1413 = vld [vmem:[%s1 + $0x8] sm:$0xf]
      %v1414 = vld [vmem:[%s1 + $0xc] sm:$0xf]
      %v1415 = vld [vmem:[%s1 + $0x10] sm:$0x3]
      %v1421 = vunpack.c.l.b16 %v1411
      %v1422 = vunpack.c.l.b16 %v1412
      %v1423 = vunpack.c.l.b16 %v1413
      %v1424 = vunpack.c.l.b16 %v1414
      %v1425 = vunpack.c.l.b16 %v1415
      %v1426 = vpack.c.b16 %v1422, %v1421
      %v1427 = vpack.c.b16 %v1424, %v1423
      %v1428 = vpack.c.b16 %v1425, %v1425
      %vm1431 = vcmask 293888
      %v1432 = vsel %vm1431, %v1380, 0
      %v1434 = vsel %vm1431, %v1382, 0
      %v1436 = vsel %vm1431, %v1384, 0
      %v1438 = vsel %vm1431, %v1386, 0
      %v1440 = vsel %vm1431, %v1388, 0
      %v1442 = vsel %vm1431, %v1390, 0
      %v1444 = vsel %vm1431, %v1392, 0
      %v1446 = vsel %vm1431, %v1394, 0
      %v1448 = vsel %vm1431, %v1396, 0
      %v1450 = vsel %vm1431, %v1398, 0
      %v1452 = vsel %vm1431, %v1400, 0
      %v1454 = vsel %vm1431, %v1402, 0
      %v1456 = vsel %vm1431, %v1404, 0
      %v1458 = vsel %vm1431, %v1406, 0
      %v1460 = vsel %vm1431, %v1408, 0
      %v1462 = vsel %vm1431, %v1410, 0
      %vm1464 = vcmask 1041408
      %v1466 = vsel %vm1464, %v1428, 0
      %1468 = vmatprep.subr.bf16.mxu0 0
      %1469 = vmatpush1.bf16.msra.mxu0 %v1426
      %1470 = vmatprep.subr.bf16.mxu0 0
      %1471 = vmatpush1.bf16.msra.mxu0 %v1427
      %1472 = vmatprep.subr.bf16.mxu0 0
      %1473 = vmatpush1.bf16.msra.mxu0 %v1466
      %1474 = vmatprep.subr.bf16.mxu0 0
      %1475 = vmatpush1.bf16.msra.mxu0 0
      %1476 = vmatprep.subr.bf16.mxu0 0
      %1477 = vmatpush1.bf16.msra.mxu0 0
      %1478 = vmatprep.subr.bf16.mxu0 0
      %1479 = vmatpush1.bf16.msra.mxu0 0
      %1480 = vmatprep.subr.bf16.mxu0 0
      %1481 = vmatpush1.bf16.msra.mxu0 0
      %1482 = vmatprep.subr.bf16.mxu0 0
      %1483 = vmatpush1.bf16.msra.mxu0 0
      %1484 = vmatprep.subr.bf16.mxu0 0
      %1485 = vmatpush1.bf16.msra.mxu0 0
      %1486 = vmatprep.subr.bf16.mxu0 0
      %1487 = vmatpush1.bf16.msra.mxu0 0
      %1488 = vmatprep.subr.bf16.mxu0 0
      %1489 = vmatpush1.bf16.msra.mxu0 0
      %1490 = vmatprep.subr.bf16.mxu0 0
      %1491 = vmatpush1.bf16.msra.mxu0 0
      %1492 = vmatprep.subr.bf16.mxu0 0
      %1493 = vmatpush1.bf16.msra.mxu0 0
      %1494 = vmatprep.subr.bf16.mxu0 0
      %1495 = vmatpush1.bf16.msra.mxu0 0
      %1496 = vmatprep.subr.bf16.mxu0 0
      %1497 = vmatpush1.bf16.msra.mxu0 0
      %1498 = vmatprep.subr.bf16.mxu0 0
      %1499 = vmatpush1.bf16.msra.mxu0 0
      %1500 = vmatprep.mubr.bf16.mxu0 0
      %1501 = vmatmul.mubr.bf16.gmra.mrb[0].mxu0 %v1432
      %v1502 = vpop.f32.mrb[0].mxu0
      %v1503 = vadd.f32 0.0, %v1502
      %v1504 = vpop.f32.mrb[0].mxu0
      %v1505 = vpop.f32.mrb[0].mxu0
      %v1506 = vadd.f32 0.0, %v1505
      %v1507 = vpop.f32.mrb[0].mxu0
      %1508 = vmatprep.mubr.bf16.mxu0 0
      %1509 = vmatmul.mubr.bf16.gmra.mrb[0].mxu0 %v1434
      %v1510 = vpop.f32.mrb[0].mxu0
      %v1511 = vadd.f32 0.0, %v1510
      %v1512 = vpop.f32.mrb[0].mxu0
      %v1513 = vpop.f32.mrb[0].mxu0
      %v1514 = vadd.f32 0.0, %v1513
      %v1515 = vpop.f32.mrb[0].mxu0
      %1516 = vmatprep.mubr.bf16.mxu0 0
      %1517 = vmatmul.mubr.bf16.gmra.mrb[0].mxu0 %v1436
      %v1518 = vpop.f32.mrb[0].mxu0
      %v1519 = vadd.f32 0.0, %v1518
      %v1520 = vpop.f32.mrb[0].mxu0
      %v1521 = vpop.f32.mrb[0].mxu0
      %v1522 = vadd.f32 0.0, %v1521
      %v1523 = vpop.f32.mrb[0].mxu0
      %1524 = vmatprep.mubr.bf16.mxu0 0
      %1525 = vmatmul.mubr.bf16.gmra.mrb[0].mxu0 %v1438
      %v1526 = vpop.f32.mrb[0].mxu0
      %v1527 = vadd.f32 0.0, %v1526
      %v1528 = vpop.f32.mrb[0].mxu0
      %v1529 = vpop.f32.mrb[0].mxu0
      %v1530 = vadd.f32 0.0, %v1529
      %v1531 = vpop.f32.mrb[0].mxu0
      %1532 = vmatprep.mubr.bf16.mxu0 0
      %1533 = vmatmul.mubr.bf16.gmra.mrb[0].mxu0 %v1440
      %v1534 = vpop.f32.mrb[0].mxu0
      %v1535 = vadd.f32 0.0, %v1534
      %v1536 = vpop.f32.mrb[0].mxu0
      %v1537 = vpop.f32.mrb[0].mxu0
      %v1538 = vadd.f32 0.0, %v1537
      %v1539 = vpop.f32.mrb[0].mxu0
      %1540 = vmatprep.mubr.bf16.mxu0 0
      %1541 = vmatmul.mubr.bf16.gmra.mrb[0].mxu0 %v1442
      %v1542 = vpop.f32.mrb[0].mxu0
      %v1543 = vadd.f32 0.0, %v1542
      %v1544 = vpop.f32.mrb[0].mxu0
      %v1545 = vpop.f32.mrb[0].mxu0
      %v1546 = vadd.f32 0.0, %v1545
      %v1547 = vpop.f32.mrb[0].mxu0
      %1548 = vmatprep.mubr.bf16.mxu0 0
      %1549 = vmatmul.mubr.bf16.gmra.mrb[0].mxu0 %v1444
      %v1550 = vpop.f32.mrb[0].mxu0
      %v1551 = vadd.f32 0.0, %v1550
      %v1552 = vpop.f32.mrb[0].mxu0
      %v1553 = vpop.f32.mrb[0].mxu0
      %v1554 = vadd.f32 0.0, %v1553
      %v1555 = vpop.f32.mrb[0].mxu0
      %1556 = vmatprep.mubr.bf16.mxu0 0
      %1557 = vmatmul.mubr.bf16.gmra.mrb[0].mxu0 %v1446
      %v1558 = vpop.f32.mrb[0].mxu0
      %v1559 = vadd.f32 0.0, %v1558
      %v1560 = vpop.f32.mrb[0].mxu0
      %v1561 = vpop.f32.mrb[0].mxu0
      %v1562 = vadd.f32 0.0, %v1561
      %v1563 = vpop.f32.mrb[0].mxu0
      %1564 = vmatprep.mubr.bf16.mxu0 0
      %1565 = vmatmul.mubr.bf16.gmra.mrb[0].mxu0 %v1448
      %v1566 = vpop.f32.mrb[0].mxu0
      %v1567 = vadd.f32 0.0, %v1566
      %v1568 = vpop.f32.mrb[0].mxu0
      %v1569 = vpop.f32.mrb[0].mxu0
      %v1570 = vadd.f32 0.0, %v1569
      %v1571 = vpop.f32.mrb[0].mxu0
      %1572 = vmatprep.mubr.bf16.mxu0 0
      %1573 = vmatmul.mubr.bf16.gmra.mrb[0].mxu0 %v1450
      %v1574 = vpop.f32.mrb[0].mxu0
      %v1575 = vadd.f32 0.0, %v1574
      %v1576 = vpop.f32.mrb[0].mxu0
      %v1577 = vpop.f32.mrb[0].mxu0
      %v1578 = vadd.f32 0.0, %v1577
      %v1579 = vpop.f32.mrb[0].mxu0
      %1580 = vmatprep.mubr.bf16.mxu0 0
      %1581 = vmatmul.mubr.bf16.gmra.mrb[0].mxu0 %v1452
      %v1582 = vpop.f32.mrb[0].mxu0
      %v1583 = vadd.f32 0.0, %v1582
      %v1584 = vpop.f32.mrb[0].mxu0
      %v1585 = vpop.f32.mrb[0].mxu0
      %v1586 = vadd.f32 0.0, %v1585
      %v1587 = vpop.f32.mrb[0].mxu0
      %1588 = vmatprep.mubr.bf16.mxu0 0
      %1589 = vmatmul.mubr.bf16.gmra.mrb[0].mxu0 %v1454
      %v1590 = vpop.f32.mrb[0].mxu0
      %v1591 = vadd.f32 0.0, %v1590
      %v1592 = vpop.f32.mrb[0].mxu0
      %v1593 = vpop.f32.mrb[0].mxu0
      %v1594 = vadd.f32 0.0, %v1593
      %v1595 = vpop.f32.mrb[0].mxu0
      %1596 = vmatprep.mubr.bf16.mxu0 0
      %1597 = vmatmul.mubr.bf16.gmra.mrb[0].mxu0 %v1456
      %v1598 = vpop.f32.mrb[0].mxu0
      %v1599 = vadd.f32 0.0, %v1598
      %v1600 = vpop.f32.mrb[0].mxu0
      %v1601 = vpop.f32.mrb[0].mxu0
      %v1602 = vadd.f32 0.0, %v1601
      %v1603 = vpop.f32.mrb[0].mxu0
      %1604 = vmatprep.mubr.bf16.mxu0 0
      %1605 = vmatmul.mubr.bf16.gmra.mrb[0].mxu0 %v1458
      %v1606 = vpop.f32.mrb[0].mxu0
      %v1607 = vadd.f32 0.0, %v1606
      %v1608 = vpop.f32.mrb[0].mxu0
      %v1609 = vpop.f32.mrb[0].mxu0
      %v1610 = vadd.f32 0.0, %v1609
      %v1611 = vpop.f32.mrb[0].mxu0
      %1612 = vmatprep.mubr.bf16.mxu0 0
      %1613 = vmatmul.mubr.bf16.gmra.mrb[0].mxu0 %v1460
      %v1614 = vpop.f32.mrb[0].mxu0
      %v1615 = vadd.f32 0.0, %v1614
      %v1616 = vpop.f32.mrb[0].mxu0
      %v1617 = vpop.f32.mrb[0].mxu0
      %v1618 = vadd.f32 0.0, %v1617
      %v1619 = vpop.f32.mrb[0].mxu0
      %1620 = vmatprep.mubr.bf16.mxu0 0
      %1621 = vmatmul.mubr.bf16.gmra.mrb[0].mxu0 %v1462
      %v1622 = vpop.f32.mrb[0].mxu0
      %v1623 = vadd.f32 0.0, %v1622
      %v1624 = vpop.f32.mrb[0].mxu0
      %v1625 = vpop.f32.mrb[0].mxu0
      %v1626 = vadd.f32 0.0, %v1625
      %v1627 = vpop.f32.mrb[0].mxu0
      %1628 = vdwg.mxu0
      %v1629 = vpack.c.bf16 %v1506, %v1503
      %v1630 = vpack.c.bf16 %v1514, %v1511
      %v1631 = vpack.c.bf16 %v1522, %v1519
      %v1632 = vpack.c.bf16 %v1530, %v1527
      %v1633 = vpack.c.bf16 %v1538, %v1535
      %v1634 = vpack.c.bf16 %v1546, %v1543
      %v1635 = vpack.c.bf16 %v1554, %v1551
      %v1636 = vpack.c.bf16 %v1562, %v1559
      %v1637 = vpack.c.bf16 %v1570, %v1567
      %v1638 = vpack.c.bf16 %v1578, %v1575
      %v1639 = vpack.c.bf16 %v1586, %v1583
      %v1640 = vpack.c.bf16 %v1594, %v1591
      %v1641 = vpack.c.bf16 %v1602, %v1599
      %v1642 = vpack.c.bf16 %v1610, %v1607
      %v1643 = vpack.c.bf16 %v1618, %v1615
      %v1644 = vpack.c.bf16 %v1626, %v1623
      %v1661 = vunpack.c.l.b16 %v1629
      %v1662 = vunpack.c.h.b16 %v1629
      %v1663 = vunpack.c.l.b16 %v1630
      %v1664 = vunpack.c.h.b16 %v1630
      %v1665 = vunpack.c.l.b16 %v1631
      %v1666 = vunpack.c.h.b16 %v1631
      %v1667 = vunpack.c.l.b16 %v1632
      %v1668 = vunpack.c.h.b16 %v1632
      %v1669 = vunpack.c.l.b16 %v1633
      %v1670 = vunpack.c.h.b16 %v1633
      %v1671 = vunpack.c.l.b16 %v1634
      %v1672 = vunpack.c.h.b16 %v1634
      %v1673 = vunpack.c.l.b16 %v1635
      %v1674 = vunpack.c.h.b16 %v1635
      %v1675 = vunpack.c.l.b16 %v1636
      %v1676 = vunpack.c.h.b16 %v1636
      %v1677 = vunpack.c.l.b16 %v1637
      %v1678 = vunpack.c.h.b16 %v1637
      %v1679 = vunpack.c.l.b16 %v1638
      %v1680 = vunpack.c.h.b16 %v1638
      %v1681 = vunpack.c.l.b16 %v1639
      %v1682 = vunpack.c.h.b16 %v1639
      %v1683 = vunpack.c.l.b16 %v1640
      %v1684 = vunpack.c.h.b16 %v1640
      %v1685 = vunpack.c.l.b16 %v1641
      %v1686 = vunpack.c.h.b16 %v1641
      %v1687 = vunpack.c.l.b16 %v1642
      %v1688 = vunpack.c.h.b16 %v1642
      %v1689 = vunpack.c.l.b16 %v1643
      %v1690 = vunpack.c.h.b16 %v1643
      %v1691 = vunpack.c.l.b16 %v1644
      %v1692 = vunpack.c.h.b16 %v1644
      %v1693 = vpack.c.b16 %v1661, %v1661
      %v1694 = vpack.c.b16 %v1662, %v1662
      %v1695 = vpack.c.b16 %v1663, %v1663
      %v1696 = vpack.c.b16 %v1664, %v1664
      %v1697 = vpack.c.b16 %v1665, %v1665
      %v1698 = vpack.c.b16 %v1666, %v1666
      %v1699 = vpack.c.b16 %v1667, %v1667
      %v1700 = vpack.c.b16 %v1668, %v1668
      %v1701 = vpack.c.b16 %v1669, %v1669
      %v1702 = vpack.c.b16 %v1670, %v1670
      %v1703 = vpack.c.b16 %v1671, %v1671
      %v1704 = vpack.c.b16 %v1672, %v1672
      %v1705 = vpack.c.b16 %v1673, %v1673
      %v1706 = vpack.c.b16 %v1674, %v1674
      %v1707 = vpack.c.b16 %v1675, %v1675
      %v1708 = vpack.c.b16 %v1676, %v1676
      %v1709 = vpack.c.b16 %v1677, %v1677
      %v1710 = vpack.c.b16 %v1678, %v1678
      %v1711 = vpack.c.b16 %v1679, %v1679
      %v1712 = vpack.c.b16 %v1680, %v1680
      %v1713 = vpack.c.b16 %v1681, %v1681
      %v1714 = vpack.c.b16 %v1682, %v1682
      %v1715 = vpack.c.b16 %v1683, %v1683
      %v1716 = vpack.c.b16 %v1684, %v1684
      %v1717 = vpack.c.b16 %v1685, %v1685
      %v1718 = vpack.c.b16 %v1686, %v1686
      %v1719 = vpack.c.b16 %v1687, %v1687
      %v1720 = vpack.c.b16 %v1688, %v1688
      %v1721 = vpack.c.b16 %v1689, %v1689
      %v1722 = vpack.c.b16 %v1690, %v1690
      %v1723 = vpack.c.b16 %v1691, %v1691
      %v1724 = vpack.c.b16 %v1692, %v1692
      %vm1757 = vcmask 27648
      %1758 = vst.msk [vmem:[%s231] sm:$0xf] %vm1757, %v1693
      %1759 = vst.msk [vmem:[%s231 + $0x4] sm:$0xf] %vm1757, %v1694
      %1760 = vst.msk [vmem:[%s231 + $0x8] sm:$0xf] %vm1757, %v1695
      %1761 = vst.msk [vmem:[%s231 + $0xc] sm:$0xf] %vm1757, %v1696
      %1762 = vst.msk [vmem:[%s231 + $0x10] sm:$0xf] %vm1757, %v1697
      %1763 = vst.msk [vmem:[%s231 + $0x14] sm:$0xf] %vm1757, %v1698
      %1764 = vst.msk [vmem:[%s231 + $0x18] sm:$0xf] %vm1757, %v1699
      %1765 = vst.msk [vmem:[%s231 + $0x1c] sm:$0xf] %vm1757, %v1700
      %1766 = vst.msk [vmem:[%s231 + $0x20] sm:$0xf] %vm1757, %v1701
      %1767 = vst.msk [vmem:[%s231 + $0x24] sm:$0xf] %vm1757, %v1702
      %1768 = vst.msk [vmem:[%s231 + $0x28] sm:$0xf] %vm1757, %v1703
      %1769 = vst.msk [vmem:[%s231 + $0x2c] sm:$0xf] %vm1757, %v1704
      %1770 = vst.msk [vmem:[%s231 + $0x30] sm:$0xf] %vm1757, %v1705
      %1771 = vst.msk [vmem:[%s231 + $0x34] sm:$0xf] %vm1757, %v1706
      %1772 = vst.msk [vmem:[%s231 + $0x38] sm:$0xf] %vm1757, %v1707
      %1773 = vst.msk [vmem:[%s231 + $0x3c] sm:$0xf] %vm1757, %v1708
      %1774 = vst.msk [vmem:[%s231 + $0x40] sm:$0xf] %vm1757, %v1709
      %1775 = vst.msk [vmem:[%s231 + $0x44] sm:$0xf] %vm1757, %v1710
      %1776 = vst.msk [vmem:[%s231 + $0x48] sm:$0xf] %vm1757, %v1711
      %1777 = vst.msk [vmem:[%s231 + $0x4c] sm:$0xf] %vm1757, %v1712
      %1778 = vst.msk [vmem:[%s231 + $0x50] sm:$0xf] %vm1757, %v1713
      %1779 = vst.msk [vmem:[%s231 + $0x54] sm:$0xf] %vm1757, %v1714
      %1780 = vst.msk [vmem:[%s231 + $0x58] sm:$0xf] %vm1757, %v1715
      %1781 = vst.msk [vmem:[%s231 + $0x5c] sm:$0xf] %vm1757, %v1716
      %1782 = vst.msk [vmem:[%s231 + $0x60] sm:$0xf] %vm1757, %v1717
      %1783 = vst.msk [vmem:[%s231 + $0x64] sm:$0xf] %vm1757, %v1718
      %1784 = vst.msk [vmem:[%s231 + $0x68] sm:$0xf] %vm1757, %v1719
      %1785 = vst.msk [vmem:[%s231 + $0x6c] sm:$0xf] %vm1757, %v1720
      %1786 = vst.msk [vmem:[%s231 + $0x70] sm:$0xf] %vm1757, %v1721
      %1787 = vst.msk [vmem:[%s231 + $0x74] sm:$0xf] %vm1757, %v1722
      %1788 = vst.msk [vmem:[%s231 + $0x78] sm:$0xf] %vm1757, %v1723
      %1789 = vst.msk [vmem:[%s231 + $0x7c] sm:$0xf] %vm1757, %v1724
      %1790 = vmatprep.subr.mxu0 0.0
      %1791 = vmatpush1.msra.mxu0 %v1503
      %1792 = vmatprep.subr.mxu0 0.0
      %1793 = vmatpush1.msra.mxu0 %v1506
      %1794 = vmatprep.subr.mxu0 0.0
      %1795 = vmatpush1.msra.mxu0 %v1511
      %1796 = vmatprep.subr.mxu0 0.0
      %1797 = vmatpush1.msra.mxu0 %v1514
      %1798 = vmatprep.subr.mxu0 0.0
      %1799 = vmatpush1.msra.mxu0 %v1519
      %1800 = vmatprep.subr.mxu0 0.0
      %1801 = vmatpush1.msra.mxu0 %v1522
      %1802 = vmatprep.subr.mxu0 0.0
      %1803 = vmatpush1.msra.mxu0 %v1527
      %1804 = vmatprep.subr.mxu0 0.0
      %1805 = vmatpush1.msra.mxu0 %v1530
      %1806 = vmatprep.subr.mxu0 0.0
      %1807 = vmatpush1.msra.mxu0 %v1535
      %1808 = vmatprep.subr.mxu0 0.0
      %1809 = vmatpush1.msra.mxu0 %v1538
      %1810 = vmatprep.subr.mxu0 0.0
      %1811 = vmatpush1.msra.mxu0 %v1543
      %1812 = vmatprep.subr.mxu0 0.0
      %1813 = vmatpush1.msra.mxu0 %v1546
      %1814 = vmatprep.subr.mxu0 0.0
      %1815 = vmatpush1.msra.mxu0 %v1551
      %1816 = vmatprep.subr.mxu0 0.0
      %1817 = vmatpush1.msra.mxu0 %v1554
      %1818 = vmatprep.subr.mxu0 0.0
      %1819 = vmatpush1.msra.mxu0 %v1559
      %1820 = vmatprep.subr.mxu0 0.0
      %1821 = vmatpush1.msra.mxu0 %v1562
      %1822 = vmatprep.subr.mxu0 0.0
      %1823 = vmatpush1.msra.mxu0 %v1567
      %1824 = vmatprep.subr.mxu0 0.0
      %1825 = vmatpush1.msra.mxu0 %v1570
      %1826 = vmatprep.subr.mxu0 0.0
      %1827 = vmatpush1.msra.mxu0 %v1575
      %1828 = vmatprep.subr.mxu0 0.0
      %1829 = vmatpush1.msra.mxu0 %v1578
      %1830 = vmatprep.subr.mxu0 0.0
      %1831 = vmatpush1.msra.mxu0 %v1583
      %1832 = vmatprep.subr.mxu0 0.0
      %1833 = vmatpush1.msra.mxu0 %v1586
      %1834 = vmatprep.subr.mxu0 0.0
      %1835 = vmatpush1.msra.mxu0 %v1591
      %1836 = vmatprep.subr.mxu0 0.0
      %1837 = vmatpush1.msra.mxu0 %v1594
      %1838 = vmatprep.subr.mxu0 0.0
      %1839 = vmatpush1.msra.mxu0 %v1599
      %1840 = vmatprep.subr.mxu0 0.0
      %1841 = vmatpush1.msra.mxu0 %v1602
      %1842 = vmatprep.subr.mxu0 0.0
      %1843 = vmatpush1.msra.mxu0 %v1607
      %1844 = vmatprep.subr.mxu0 0.0
      %1845 = vmatpush1.msra.mxu0 %v1610
      %1846 = vmatprep.subr.mxu0 0.0
      %1847 = vmatpush1.msra.mxu0 %v1615
      %1848 = vmatprep.subr.mxu0 0.0
      %1849 = vmatpush1.msra.mxu0 %v1618
      %1850 = vmatprep.subr.mxu0 0.0
      %1851 = vmatpush1.msra.mxu0 %v1623
      %1852 = vmatprep.subr.mxu0 0.0
      %1853 = vmatpush1.msra.mxu0 %v1626
      %1854 = vmatprep.mubr.f32.mxu0 1.0
      %1855 = vmatmul.mubr.f32.gmra.mrb[0].mxu0 1.0
      %v1856 = vpop.f32.mrb[0].mxu0
      %v1857 = vadd.f32 0.0, %v1856
      %v1858 = vpop.f32.mrb[0].mxu0
      %1859 = vdwg.mxu0
      %v1860 = vrcp.pop 256.0
      %v1861 = vmul.f32 %v1857, %v1860
      %v1862 = vlaneseq
      %v1863 = vshrl.u32 %v1862, 7
      %v1864 = vsub.s32 0, %v1863
      %v1865 = vrot.slane %v1861, %v1864
      %v1866 = vsub.f32 %v1503, %v1865
      %v1867 = vsub.f32 %v1506, %v1865
      %v1868 = vsub.f32 %v1511, %v1865
      %v1869 = vsub.f32 %v1514, %v1865
      %v1870 = vsub.f32 %v1519, %v1865
      %v1871 = vsub.f32 %v1522, %v1865
      %v1872 = vsub.f32 %v1527, %v1865
      %v1873 = vsub.f32 %v1530, %v1865
      %v1874 = vsub.f32 %v1535, %v1865
      %v1875 = vsub.f32 %v1538, %v1865
      %v1876 = vsub.f32 %v1543, %v1865
      %v1877 = vsub.f32 %v1546, %v1865
      %v1878 = vsub.f32 %v1551, %v1865
      %v1879 = vsub.f32 %v1554, %v1865
      %v1880 = vsub.f32 %v1559, %v1865
      %v1881 = vsub.f32 %v1562, %v1865
      %v1882 = vsub.f32 %v1567, %v1865
      %v1883 = vsub.f32 %v1570, %v1865
      %v1884 = vsub.f32 %v1575, %v1865
      %v1885 = vsub.f32 %v1578, %v1865
      %v1886 = vsub.f32 %v1583, %v1865
      %v1887 = vsub.f32 %v1586, %v1865
      %v1888 = vsub.f32 %v1591, %v1865
      %v1889 = vsub.f32 %v1594, %v1865
      %v1890 = vsub.f32 %v1599, %v1865
      %v1891 = vsub.f32 %v1602, %v1865
      %v1892 = vsub.f32 %v1607, %v1865
      %v1893 = vsub.f32 %v1610, %v1865
      %v1894 = vsub.f32 %v1615, %v1865
      %v1895 = vsub.f32 %v1618, %v1865
      %v1896 = vsub.f32 %v1623, %v1865
      %v1897 = vsub.f32 %v1626, %v1865
      %v1898 = vmul.f32 %v1866, %v1866
      %v1899 = vmul.f32 %v1867, %v1867
      %v1900 = vmul.f32 %v1868, %v1868
      %v1901 = vmul.f32 %v1869, %v1869
      %v1902 = vmul.f32 %v1870, %v1870
      %v1903 = vmul.f32 %v1871, %v1871
      %v1904 = vmul.f32 %v1872, %v1872
      %v1905 = vmul.f32 %v1873, %v1873
      %v1906 = vmul.f32 %v1874, %v1874
      %v1907 = vmul.f32 %v1875, %v1875
      %v1908 = vmul.f32 %v1876, %v1876
      %v1909 = vmul.f32 %v1877, %v1877
      %v1910 = vmul.f32 %v1878, %v1878
      %v1911 = vmul.f32 %v1879, %v1879
      %v1912 = vmul.f32 %v1880, %v1880
      %v1913 = vmul.f32 %v1881, %v1881
      %v1914 = vmul.f32 %v1882, %v1882
      %v1915 = vmul.f32 %v1883, %v1883
      %v1916 = vmul.f32 %v1884, %v1884
      %v1917 = vmul.f32 %v1885, %v1885
      %v1918 = vmul.f32 %v1886, %v1886
      %v1919 = vmul.f32 %v1887, %v1887
      %v1920 = vmul.f32 %v1888, %v1888
      %v1921 = vmul.f32 %v1889, %v1889
      %v1922 = vmul.f32 %v1890, %v1890
      %v1923 = vmul.f32 %v1891, %v1891
      %v1924 = vmul.f32 %v1892, %v1892
      %v1925 = vmul.f32 %v1893, %v1893
      %v1926 = vmul.f32 %v1894, %v1894
      %v1927 = vmul.f32 %v1895, %v1895
      %v1928 = vmul.f32 %v1896, %v1896
      %v1929 = vmul.f32 %v1897, %v1897
      %1930 = vmatprep.subr.mxu0 0.0
      %1931 = vmatpush1.msra.mxu0 %v1898
      %1932 = vmatprep.subr.mxu0 0.0
      %1933 = vmatpush1.msra.mxu0 %v1899
      %1934 = vmatprep.subr.mxu0 0.0
      %1935 = vmatpush1.msra.mxu0 %v1900
      %1936 = vmatprep.subr.mxu0 0.0
      %1937 = vmatpush1.msra.mxu0 %v1901
      %1938 = vmatprep.subr.mxu0 0.0
      %1939 = vmatpush1.msra.mxu0 %v1902
      %1940 = vmatprep.subr.mxu0 0.0
      %1941 = vmatpush1.msra.mxu0 %v1903
      %1942 = vmatprep.subr.mxu0 0.0
      %1943 = vmatpush1.msra.mxu0 %v1904
      %1944 = vmatprep.subr.mxu0 0.0
      %1945 = vmatpush1.msra.mxu0 %v1905
      %1946 = vmatprep.subr.mxu0 0.0
      %1947 = vmatpush1.msra.mxu0 %v1906
      %1948 = vmatprep.subr.mxu0 0.0
      %1949 = vmatpush1.msra.mxu0 %v1907
      %1950 = vmatprep.subr.mxu0 0.0
      %1951 = vmatpush1.msra.mxu0 %v1908
      %1952 = vmatprep.subr.mxu0 0.0
      %1953 = vmatpush1.msra.mxu0 %v1909
      %1954 = vmatprep.subr.mxu0 0.0
      %1955 = vmatpush1.msra.mxu0 %v1910
      %1956 = vmatprep.subr.mxu0 0.0
      %1957 = vmatpush1.msra.mxu0 %v1911
      %1958 = vmatprep.subr.mxu0 0.0
      %1959 = vmatpush1.msra.mxu0 %v1912
      %1960 = vmatprep.subr.mxu0 0.0
      %1961 = vmatpush1.msra.mxu0 %v1913
      %1962 = vmatprep.subr.mxu0 0.0
      %1963 = vmatpush1.msra.mxu0 %v1914
      %1964 = vmatprep.subr.mxu0 0.0
      %1965 = vmatpush1.msra.mxu0 %v1915
      %1966 = vmatprep.subr.mxu0 0.0
      %1967 = vmatpush1.msra.mxu0 %v1916
      %1968 = vmatprep.subr.mxu0 0.0
      %1969 = vmatpush1.msra.mxu0 %v1917
      %1970 = vmatprep.subr.mxu0 0.0
      %1971 = vmatpush1.msra.mxu0 %v1918
      %1972 = vmatprep.subr.mxu0 0.0
      %1973 = vmatpush1.msra.mxu0 %v1919
      %1974 = vmatprep.subr.mxu0 0.0
      %1975 = vmatpush1.msra.mxu0 %v1920
      %1976 = vmatprep.subr.mxu0 0.0
      %1977 = vmatpush1.msra.mxu0 %v1921
      %1978 = vmatprep.subr.mxu0 0.0
      %1979 = vmatpush1.msra.mxu0 %v1922
      %1980 = vmatprep.subr.mxu0 0.0
      %1981 = vmatpush1.msra.mxu0 %v1923
      %1982 = vmatprep.subr.mxu0 0.0
      %1983 = vmatpush1.msra.mxu0 %v1924
      %1984 = vmatprep.subr.mxu0 0.0
      %1985 = vmatpush1.msra.mxu0 %v1925
      %1986 = vmatprep.subr.mxu0 0.0
      %1987 = vmatpush1.msra.mxu0 %v1926
      %1988 = vmatprep.subr.mxu0 0.0
      %1989 = vmatpush1.msra.mxu0 %v1927
      %1990 = vmatprep.subr.mxu0 0.0
      %1991 = vmatpush1.msra.mxu0 %v1928
      %1992 = vmatprep.subr.mxu0 0.0
      %1993 = vmatpush1.msra.mxu0 %v1929
      %1994 = vmatprep.mubr.f32.mxu0 1.0
      %1995 = vmatmul.mubr.f32.gmra.mrb[0].mxu0 1.0
      %v1996 = vpop.f32.mrb[0].mxu0
      %v1997 = vadd.f32 0.0, %v1996
      %v1998 = vpop.f32.mrb[0].mxu0
      %1999 = vdwg.mxu0
      %v2001 = vrot.slane %v1997, 7
      %vm2003 = vcmask 1040384
      %v2004 = vsel %vm2003, %v1861, %v2001
      %vm2005 = vcmask 25600
      %2006 = vst.msk [vmem:[%s235] sm:$0x3] %vm2005, %v2004
      %p2007 = scmp.lt.s32.totalorder %s17, 1
      %s2008 = scalar_select %p2007, %s17, 1
      %s2009 = smul.addr %s2008, 32
      %s2010 = smul.addr %s2009, 4
      %s2011 = scalar_lea.vmem %s4, %s2010
      %p2012 = scmp.lt.s32.totalorder %s17, 1
      %s2013 = scalar_select %p2012, %s17, 1
      %s2014 = smul.addr %s2013, 2
      %s2015 = scalar_lea.vmem %s5, %s2014
      // Predicated region
      $region37: #{basic_block_forward.4} parent=35 // pred_check
        %p2016 = pneg %p124
      $region38: #{basic_block_forward.4} parent=35 // pred_check_branch
        %2018 = sbr.rel (%p2016) target = $region40
      $region39: #{basic_block_forward.4} parent=35 // pred_region
        _
      $region40: #{basic_block_forward.4} parent=35 // pred_fallthru
        _
      // Predicated region
      $region41: #{basic_block_forward.4} parent=35 // pred_check
        %p2019 = pneg %p150
      $region42: #{basic_block_forward.4} parent=35 // pred_check_branch
        %2021 = sbr.rel (%p2019) target = $region44
      $region43: #{basic_block_forward.4} parent=35 // pred_region
        _
      $region44: #{basic_block_forward.4} parent=35 // pred_fallthru
        _
    $region36: #{basic_block_forward.4} parent=5 // pred_fallthru
      _
    %p2022 = scmp.le.s32.totalorder 2, %s12
    // Predicated region
    $region45: #{basic_block_forward.4} parent=5 // pred_check
      %p2023 = pneg %p2022
    $region46: #{basic_block_forward.4} parent=5 // pred_check_branch
      %2025 = sbr.rel (%p2023) target = $region48
    $region47: #{basic_block_forward.4} parent=5 // pred_region
      %s2026 = ssub.s32 %s12, 2
      // Predicated region
      $region49: #{basic_block_forward.4} parent=47 // pred_check
        %p2027 = pneg %p130
      $region50: #{basic_block_forward.4} parent=47 // pred_check_branch
        %2029 = sbr.rel (%p2027) target = $region52
      $region51: #{basic_block_forward.4} parent=47 // pred_region
        %p2030 = scmp.lt.s32.totalorder %s18, 1
        %s2031 = scalar_select %p2030, %s18, 1
        %s2032 = smul.addr %s2031, 32
        %s2033 = smul.addr %s2032, 4
        %s2034 = scalar_lea.vmem %s4, %s2033
      $region52: #{basic_block_forward.4} parent=47 // pred_fallthru
        _
      // Predicated region
      $region53: #{basic_block_forward.4} parent=47 // pred_check
        %p2035 = pneg %p156
      $region54: #{basic_block_forward.4} parent=47 // pred_check_branch
        %2037 = sbr.rel (%p2035) target = $region56
      $region55: #{basic_block_forward.4} parent=47 // pred_region
        %p2038 = scmp.lt.s32.totalorder %s18, 1
        %s2039 = scalar_select %p2038, %s18, 1
        %s2040 = smul.addr %s2039, 2
        %s2041 = scalar_lea.vmem %s5, %s2040
      $region56: #{basic_block_forward.4} parent=47 // pred_fallthru
        _
    $region48: #{basic_block_forward.4} parent=5 // pred_fallthru
      _
  $region6: #{basic_block_forward.4} parent=0 // loop_footer
    %s16 = sadd.s32 1, %s12
  $region7: #{basic_block_forward.4} parent=0 // loop_footer_branch
    %11 = sbr.rel target = $region3
  $region8: #{basic_block_forward.4} parent=0 // loop_exit
    _

// kernel: basic_block_forward.5
$region0: #{basic_block_forward.5}
  #allocation0 [shape = 'u32[]', space=smem, size = 0x4, offset = 0x4, fixed_abs, tag = 'smem constant byte address 0x4 - core index']
  #allocation1 [shape = 'u32[144,128]{1,0:T(1,128)}', space=vmem, size = 0x12000, scoped, tag = 'internal scratch']
  %s0 = inlined_call_operand.vmem [shape: bf16[2,8,128], index: 0, kind: input, shape index: {}]
  %s1 = inlined_call_operand.vmem [shape: f32[1,128], index: 1, kind: input, shape index: {}]
  %s2 = inlined_call_operand.vmem [shape: f32[1,128], index: 2, kind: input, shape index: {}]
  %s3 = inlined_call_operand.vmem [shape: f32[2,8,128], index: 3, kind: input, shape index: {}]
  %s4 = inlined_call_operand.vmem [shape: f32[2,8,128], index: 4, kind: output, shape index: {}]
  %s5 = sld [smem:[#allocation0]]
  $region49: #{basic_block_forward.5} parent=0
    _
  %s7 = ssub.s32 1, %s5
  %s8 = scalar_select 0, %s7, %s5
  loop: start=0, step=1, limit=4
  $region2: #{basic_block_forward.5} parent=0 // loop_pre_header
    _
  $region3: #{basic_block_forward.5} parent=0 // loop_header
    %s10 = sphi 0, %s14
    %p11 = scmp.ge.s32.totalorder %s10, 4
    %s17 = sphi 0, %s29
    %s18 = sphi 0, %s25
    %s19 = sphi 0, %s17
    %s20 = sphi 0, %s18
    %s21 = sphi 0, %s19
    %s22 = sphi 0, %s20
    %s34 = sphi 0, %s36
    %s37 = sphi 0, %s34
    %s38 = sphi 0, %s37
    %s54 = sphi 0, %s38
    %s58 = sphi 0, %s58
    %s60 = sphi 0, %s58
    %s61 = sphi 0, %s60
    %s75 = sphi 0, %s61
    %s79 = sphi 0, %s79
    %s81 = sphi 0, %s79
    %s82 = sphi 0, %s81
    %s96 = sphi 0, %s82
    %s104 = sphi 0, %s106
    %s107 = sphi 0, %s104
    %s108 = sphi 0, %s107
    %s124 = sphi 0, %s108
    %s132 = sphi 0, %s134
    %s135 = sphi 0, %s132
    %s136 = sphi 0, %s135
    %s152 = sphi 0, %s136
  $region4: #{basic_block_forward.5} parent=0 // loop_header_branch
    %13 = sbr.rel (%p11) target = $region8
  $region5: #{basic_block_forward.5} parent=0 // loop_body
    %s15 = ssub.s32 %s10, 1
    %s16 = ssub.s32 %s10, 2
    %s23 = sadd.s32 1, %s18
    %p24 = scmp.ge.s32.totalorder %s23, 1
    %s25 = scalar_select %p24, 0, %s23
    %s26 = sadd.s32 1, %s17
    %s27 = scalar_select %p24, %s26, %s17
    %p28 = scmp.ge.s32.totalorder %s27, 2
    %s29 = scalar_select %p28, 0, %s27
    %s30 = ssub.s32 %s17, %s29
    %s31 = ssub.s32 %s18, %s25
    %s32 = sor.u32 %s30, %s31
    %p33 = scmp.eq.s32.totalorder %s32, 0
    %s35 = sadd.s32 %s34, 1
    %s36 = scalar_select %p33, %s34, %s35
    %p39 = pneg %p33
    %p40 = scmp.eq.s32.totalorder %s10, 1
    %p41 = por %p39, %p40
    %p42 = scmp.ne.s32.totalorder %s34, %s37
    %p43 = scmp.eq.s32.totalorder %s10, 0
    %p44 = por %p42, %p43
    %p45 = scmp.ne.s32.totalorder %s34, %s37
    %p46 = scmp.eq.s32.totalorder %s15, 1
    %p47 = por %p45, %p46
    %p48 = scmp.ne.s32.totalorder %s37, %s38
    %p49 = scmp.eq.s32.totalorder %s15, 0
    %p50 = por %p48, %p49
    %p51 = scmp.ne.s32.totalorder %s37, %s38
    %p52 = scmp.eq.s32.totalorder %s16, 1
    %p53 = por %p51, %p52
    %p55 = scmp.ne.s32.totalorder %s38, %s54
    %p56 = scmp.eq.s32.totalorder %s16, 0
    %p57 = por %p55, %p56
    %s59 = sadd.s32 %s58, 1
    %p62 = scmp.eq.s32.totalorder %s10, 1
    %p63 = scmp.ne.s32.totalorder %s58, %s60
    %p64 = scmp.eq.s32.totalorder %s10, 0
    %p65 = por %p63, %p64
    %p66 = scmp.ne.s32.totalorder %s58, %s60
    %p67 = scmp.eq.s32.totalorder %s15, 1
    %p68 = por %p66, %p67
    %p69 = scmp.ne.s32.totalorder %s60, %s61
    %p70 = scmp.eq.s32.totalorder %s15, 0
    %p71 = por %p69, %p70
    %p72 = scmp.ne.s32.totalorder %s60, %s61
    %p73 = scmp.eq.s32.totalorder %s16, 1
    %p74 = por %p72, %p73
    %p76 = scmp.ne.s32.totalorder %s61, %s75
    %p77 = scmp.eq.s32.totalorder %s16, 0
    %p78 = por %p76, %p77
    %s80 = sadd.s32 %s79, 1
    %p83 = scmp.eq.s32.totalorder %s10, 1
    %p84 = scmp.ne.s32.totalorder %s79, %s81
    %p85 = scmp.eq.s32.totalorder %s10, 0
    %p86 = por %p84, %p85
    %p87 = scmp.ne.s32.totalorder %s79, %s81
    %p88 = scmp.eq.s32.totalorder %s15, 1
    %p89 = por %p87, %p88
    %p90 = scmp.ne.s32.totalorder %s81, %s82
    %p91 = scmp.eq.s32.totalorder %s15, 0
    %p92 = por %p90, %p91
    %p93 = scmp.ne.s32.totalorder %s81, %s82
    %p94 = scmp.eq.s32.totalorder %s16, 1
    %p95 = por %p93, %p94
    %p97 = scmp.ne.s32.totalorder %s82, %s96
    %p98 = scmp.eq.s32.totalorder %s16, 0
    %p99 = por %p97, %p98
    %s100 = ssub.s32 %s17, %s29
    %s101 = ssub.s32 %s18, %s25
    %s102 = sor.u32 %s100, %s101
    %p103 = scmp.eq.s32.totalorder %s102, 0
    %s105 = sadd.s32 %s104, 1
    %s106 = scalar_select %p103, %s104, %s105
    %p109 = pneg %p103
    %p110 = scmp.eq.s32.totalorder %s10, 1
    %p111 = por %p109, %p110
    %p112 = scmp.ne.s32.totalorder %s104, %s107
    %p113 = scmp.eq.s32.totalorder %s10, 0
    %p114 = por %p112, %p113
    %p115 = scmp.ne.s32.totalorder %s104, %s107
    %p116 = scmp.eq.s32.totalorder %s15, 1
    %p117 = por %p115, %p116
    %p118 = scmp.ne.s32.totalorder %s107, %s108
    %p119 = scmp.eq.s32.totalorder %s15, 0
    %p120 = por %p118, %p119
    %p121 = scmp.ne.s32.totalorder %s107, %s108
    %p122 = scmp.eq.s32.totalorder %s16, 1
    %p123 = por %p121, %p122
    %p125 = scmp.ne.s32.totalorder %s108, %s124
    %p126 = scmp.eq.s32.totalorder %s16, 0
    %p127 = por %p125, %p126
    %s128 = ssub.s32 %s17, %s29
    %s129 = ssub.s32 %s18, %s25
    %s130 = sor.u32 %s128, %s129
    %p131 = scmp.eq.s32.totalorder %s130, 0
    %s133 = sadd.s32 %s132, 1
    %s134 = scalar_select %p131, %s132, %s133
    %p137 = pneg %p131
    %p138 = scmp.eq.s32.totalorder %s10, 1
    %p139 = por %p137, %p138
    %p140 = scmp.ne.s32.totalorder %s132, %s135
    %p141 = scmp.eq.s32.totalorder %s10, 0
    %p142 = por %p140, %p141
    %p143 = scmp.ne.s32.totalorder %s132, %s135
    %p144 = scmp.eq.s32.totalorder %s15, 1
    %p145 = por %p143, %p144
    %p146 = scmp.ne.s32.totalorder %s135, %s136
    %p147 = scmp.eq.s32.totalorder %s15, 0
    %p148 = por %p146, %p147
    %p149 = scmp.ne.s32.totalorder %s135, %s136
    %p150 = scmp.eq.s32.totalorder %s16, 1
    %p151 = por %p149, %p150
    %p153 = scmp.ne.s32.totalorder %s136, %s152
    %p154 = scmp.eq.s32.totalorder %s16, 0
    %p155 = por %p153, %p154
    %p156 = scmp.le.s32.totalorder 1, %s10
    %p157 = scmp.lt.s32.totalorder %s10, 3
    %p158 = pnand %p156, %p157
    %p159 = pneg %p158
    // Predicated region
    $region9: #{basic_block_forward.5} parent=5 // pred_check
      _
    $region10: #{basic_block_forward.5} parent=5 // pred_check_branch
      %161 = sbr.rel (%p158) target = $region12
    $region11: #{basic_block_forward.5} parent=5 // pred_region
      %s162 = ssub.s32 %s10, 1
      // Predicated region
      $region13: #{basic_block_forward.5} parent=11 // pred_check
        %p163 = pneg %p71
      $region14: #{basic_block_forward.5} parent=11 // pred_check_branch
        %165 = sbr.rel (%p163) target = $region16
      $region15: #{basic_block_forward.5} parent=11 // pred_region
        _
      $region16: #{basic_block_forward.5} parent=11 // pred_fallthru
        _
      // Predicated region
      $region17: #{basic_block_forward.5} parent=11 // pred_check
        %p166 = pneg %p92
      $region18: #{basic_block_forward.5} parent=11 // pred_check_branch
        %168 = sbr.rel (%p166) target = $region20
      $region19: #{basic_block_forward.5} parent=11 // pred_region
        _
      $region20: #{basic_block_forward.5} parent=11 // pred_fallthru
        _
    $region12: #{basic_block_forward.5} parent=5 // pred_fallthru
      _
    %p169 = scmp.lt.s32.totalorder %s10, 2
    // Predicated region
    $region21: #{basic_block_forward.5} parent=5 // pred_check
      %p170 = pneg %p169
    $region22: #{basic_block_forward.5} parent=5 // pred_check_branch
      %172 = sbr.rel (%p170) target = $region24
    $region23: #{basic_block_forward.5} parent=5 // pred_region
      // Predicated region
      $region25: #{basic_block_forward.5} parent=23 // pred_check
        %p173 = pneg %p44
      $region26: #{basic_block_forward.5} parent=23 // pred_check_branch
        %175 = sbr.rel (%p173) target = $region28
      $region27: #{basic_block_forward.5} parent=23 // pred_region
        %p176 = scmp.lt.s32.totalorder %s17, 1
        %s177 = scalar_select %p176, %s17, 1
        %p178 = scmp.lt.s32.totalorder %s18, 0
        %s179 = scalar_select %p178, %s18, 0
        %s180 = sadd.s32 %s179, %s177
        %s181 = smul.addr %s180, 4
        %s182 = scalar_lea.vmem %s0, %s181
      $region28: #{basic_block_forward.5} parent=23 // pred_fallthru
        _
      // Predicated region
      $region29: #{basic_block_forward.5} parent=23 // pred_check
        %p183 = pneg %p114
      $region30: #{basic_block_forward.5} parent=23 // pred_check_branch
        %185 = sbr.rel (%p183) target = $region32
      $region31: #{basic_block_forward.5} parent=23 // pred_region
        %p186 = scmp.lt.s32.totalorder %s17, 1
        %s187 = scalar_select %p186, %s17, 1
        %p188 = scmp.lt.s32.totalorder %s18, 0
        %s189 = scalar_select %p188, %s18, 0
        %s190 = sadd.s32 %s189, %s187
        %s191 = smul.addr %s190, 8
        %s192 = scalar_lea.vmem %s3, %s191
      $region32: #{basic_block_forward.5} parent=23 // pred_fallthru
        _
    $region24: #{basic_block_forward.5} parent=5 // pred_fallthru
      _
    %p193 = scmp.le.s32.totalorder 1, %s10
    %p194 = scmp.lt.s32.totalorder %s10, 3
    %p195 = pnand %p193, %p194
    %p196 = pneg %p195
    // Predicated region
    $region33: #{basic_block_forward.5} parent=5 // pred_check
      _
    $region34: #{basic_block_forward.5} parent=5 // pred_check_branch
      %198 = sbr.rel (%p195) target = $region36
    $region35: #{basic_block_forward.5} parent=5 // pred_region
      %s199 = ssub.s32 %s10, 1
      %p200 = scmp.lt.s32.totalorder %s19, 1
      %s201 = scalar_select %p200, %s19, 1
      %p202 = scmp.lt.s32.totalorder %s20, 0
      %s203 = scalar_select %p202, %s20, 0
      %s204 = sadd.s32 %s203, %s201
      %s205 = smul.addr %s204, 4
      %s206 = scalar_lea.vmem %s0, %s205
      %p207 = pneg %p50
      %p208 = pneg %p47
      %p209 = pneg %p71
      %p210 = pneg %p68
      %p211 = pneg %p92
      %p212 = pneg %p89
      %p213 = scmp.lt.s32.totalorder %s19, 1
      %s214 = scalar_select %p213, %s19, 1
      %p215 = scmp.lt.s32.totalorder %s20, 0
      %s216 = scalar_select %p215, %s20, 0
      %s217 = sadd.s32 %s216, %s214
      %s218 = smul.addr %s217, 8
      %s219 = scalar_lea.vmem %s3, %s218
      %p220 = pneg %p120
      %p221 = pneg %p117
      %p222 = pneg %p148
      %p223 = pneg %p145
      %p224 = scmp.lt.s32.totalorder %s19, 1
      %s225 = scalar_select %p224, %s19, 1
      %p226 = scmp.lt.s32.totalorder %s20, 0
      %s227 = scalar_select %p226, %s20, 0
      %s228 = sadd.s32 %s227, %s225
      %s229 = smul.addr %s228, 8
      %s230 = scalar_lea.vmem %s4, %s229
      %p231 = scmp.lt.s32.totalorder %s19, 1
      %s232 = scalar_select %p231, %s19, 1
      %p233 = scmp.lt.s32.totalorder %s20, 0
      %s234 = scalar_select %p233, %s20, 0
      %s235 = sadd.s32 %s234, %s232
      %s236 = smul.addr %s235, 4
      %s237 = scalar_lea.vmem %s0, %s236
      %p238 = scmp.lt.s32.totalorder %s19, 1
      %s239 = scalar_select %p238, %s19, 1
      %p240 = scmp.lt.s32.totalorder %s20, 0
      %s241 = scalar_select %p240, %s20, 0
      %s242 = sadd.s32 %s241, %s239
      %s243 = smul.addr %s242, 8
      %s244 = scalar_lea.vmem %s3, %s243
      %p245 = scmp.lt.s32.totalorder %s19, 1
      %s246 = scalar_select %p245, %s19, 1
      %p247 = scmp.lt.s32.totalorder %s20, 0
      %s248 = scalar_select %p247, %s20, 0
      %s249 = sadd.s32 %s248, %s246
      %s250 = smul.addr %s249, 8
      %s251 = scalar_lea.vmem %s4, %s250
      %v252 = vld [vmem:[%s237] sm:$0xf]
      %v253 = vunpack.c.l.bf16 %v252
      %v254 = vld [vmem:[%s1] sm:$0x1]
      %v256 = vlaneseq
      %v257 = vshrl.u32 %v256, 7
      %v258 = vsub.s32 0, %v257
      %v259 = vrot.slane %v254, %v258
      %v261 = vmul.f32 %v253, %v259
      %v262 = vld [vmem:[%s2] sm:$0x1]
      %v264 = vlaneseq
      %v265 = vshrl.u32 %v264, 7
      %v266 = vsub.s32 0, %v265
      %v267 = vrot.slane %v262, %v266
      %v269 = vadd.f32 %v261, %v267
      %v270 = vld [vmem:[%s244] sm:$0xff]
      %v271 = vadd.f32 %v269, %v270
      %v272 = vmax.f32 %v271, 0.0
      %273 = vst [vmem:[%s251] sm:$0xff] %v272
      %p274 = scmp.lt.s32.totalorder %s19, 1
      %s275 = scalar_select %p274, %s19, 1
      %p276 = scmp.lt.s32.totalorder %s20, 0
      %s277 = scalar_select %p276, %s20, 0
      %s278 = sadd.s32 %s277, %s275
      %s279 = smul.addr %s278, 8
      %s280 = scalar_lea.vmem %s4, %s279
      // Predicated region
      $region37: #{basic_block_forward.5} parent=35 // pred_check
        %p281 = pneg %p145
      $region38: #{basic_block_forward.5} parent=35 // pred_check_branch
        %283 = sbr.rel (%p281) target = $region40
      $region39: #{basic_block_forward.5} parent=35 // pred_region
        _
      $region40: #{basic_block_forward.5} parent=35 // pred_fallthru
        _
    $region36: #{basic_block_forward.5} parent=5 // pred_fallthru
      _
    %p284 = scmp.le.s32.totalorder 2, %s10
    // Predicated region
    $region41: #{basic_block_forward.5} parent=5 // pred_check
      %p285 = pneg %p284
    $region42: #{basic_block_forward.5} parent=5 // pred_check_branch
      %287 = sbr.rel (%p285) target = $region44
    $region43: #{basic_block_forward.5} parent=5 // pred_region
      %s288 = ssub.s32 %s10, 2
      // Predicated region
      $region45: #{basic_block_forward.5} parent=43 // pred_check
        %p289 = pneg %p151
      $region46: #{basic_block_forward.5} parent=43 // pred_check_branch
        %291 = sbr.rel (%p289) target = $region48
      $region47: #{basic_block_forward.5} parent=43 // pred_region
        %p292 = scmp.lt.s32.totalorder %s21, 1
        %s293 = scalar_select %p292, %s21, 1
        %p294 = scmp.lt.s32.totalorder %s22, 0
        %s295 = scalar_select %p294, %s22, 0
        %s296 = sadd.s32 %s295, %s293
        %s297 = smul.addr %s296, 8
        %s298 = scalar_lea.vmem %s4, %s297
      $region48: #{basic_block_forward.5} parent=43 // pred_fallthru
        _
    $region44: #{basic_block_forward.5} parent=5 // pred_fallthru
      _
  $region6: #{basic_block_forward.5} parent=0 // loop_footer
    %s14 = sadd.s32 1, %s10
  $region7: #{basic_block_forward.5} parent=0 // loop_footer_branch
    %9 = sbr.rel target = $region3
  $region8: #{basic_block_forward.5} parent=0 // loop_exit
    _

</llo_original>
